<compile_context>
chip_gen: v5e
topology: v5e:2x2
jax: 0.10.0
libtpu: 0.0.40
codegen_flags: <defaults>
</compile_context>

<pallas_src>
import functools

import numpy as np

import jax
import jax.numpy as jnp
from jax.experimental import pallas as pl
from jax.experimental.pallas import tpu as pltpu


def _convt_mxu_kernel(x_ref, wm_ref, bias_ref, pmat_ref, o_ref, xpad_ref, *,
                      nb, Ci, Co, S, A, B, H, W, Ho, Wo,
                      pad_top, pad_left, terms_by_ph):
    """One grid step = `nb` images.

    x_ref    : (nb, Ci, H, W)    input block (auto-DMA'd to VMEM)
    wm_ref   : (T, Ci, Wpk, L)   polyphase Toeplitz weight matrices, L = Co*S*B
    bias_ref : (1, L)            bias already laid out on the packed lane axis
    pmat_ref : (S*A, S*A)        0/1 row-phase interleave matrix
    o_ref    : (nb, Co, Ho, Wo)  final NCHW output block
    xpad_ref : (Ci, Hp, Wpk) f32 VMEM scratch holding the zero-padded input
    """
    f32 = jnp.float32
    SB = S * B
    L = Co * SB

    # Halo padding happens here (no jnp.pad / extra HBM pass in the wrapper).
    # Zero once per grid step; the interior is fully overwritten per image.
    xpad_ref[...] = jnp.zeros_like(xpad_ref)

    # Hoisted once (JAX does not CSE broadcasts).
    bias_tile = jnp.broadcast_to(bias_ref[...], (A, L)).astype(f32)
    pmat = pmat_ref[...]

    for i in range(nb):  # static, tiny
        # ---- stage the zero-padded input in VMEM -------------------------------
        for ci in range(Ci):
            xpad_ref[ci, pad_top:pad_top + H, pad_left:pad_left + W] = (
                x_ref[i, ci].astype(f32))

        # ---- polyphase transposed conv: a few small MXU matmuls ----------------
        # acc[ph][a, co*S*B + (b*S + pw)] =
        #   bias[co] + sum_{dh, ci} xpad[ci, a+dh, :] @ wm[(ph,dh), ci]
        # Accumulator lanes are already in the final x-interleaved NCHW order.
        accs = []
        for ph in range(S):
            acc = bias_tile
            for (t, dh) in terms_by_ph[ph]:
                for ci in range(Ci):
                    acc = acc + jnp.dot(
                        xpad_ref[ci, dh:dh + A, :],
                        wm_ref[t, ci],
                        preferred_element_type=f32,
                        precision=jax.lax.Precision.HIGHEST)
            accs.append(acc)

        # ---- interleave the S row phases with one tiny 0/1 matmul --------------
        stacked = jnp.concatenate(accs, axis=0)              # (S*A, L)
        rows = jnp.dot(pmat, stacked, preferred_element_type=f32,
                       precision=jax.lax.Precision.HIGHEST)  # row r = y = a*S + ph

        # ---- store directly in NCHW: no post-kernel reshape/transpose/slice ----
        for co in range(Co):
            o_ref[i, co] = rows[:Ho, co * SB:co * SB + Wo].astype(o_ref.dtype)


def upsample_conv_layer(x, w, b, *, stride, padding=1):
    """Forward of nn.ConvTranspose2d(in_ch, out_ch, k, stride, padding).

    x: (N, Ci, H, W); w: (Ci, Co, kH, kW) [PyTorch ConvTranspose2d layout]; b: (Co,)
    """
    N, Ci, H, W = x.shape
    Ci2, Co, kH, kW = w.shape
    assert Ci2 == Ci
    S = int(stride)
    assert 0 <= padding <= min(kH, kW) - 1, "unsupported padding for this kernel"

    Ho = (H - 1) * S - 2 * padding + kH
    Wo = (W - 1) * S - 2 * padding + kW
    A = -(-Ho // S)                  # per-row-phase output rows  (ceil)
    B = -(-Wo // S)                  # per-col-phase output cols  (ceil)
    Pq_h = kH - 1 - padding          # effective pad of the equivalent dilated conv
    Pq_w = kW - 1 - padding

    # ---------------- static polyphase tap tables (trace-time only) -------------
    def taps_1d(k, P):
        out = {}
        for kk in range(k):          # kk indexes the spatially *flipped* kernel
            ph = (P - kk) % S
            d = (ph + kk - P) // S   # exact (congruent); may be negative
            out.setdefault(ph, []).append((d, kk))
        return out

    th = taps_1d(kH, Pq_h)
    tw = taps_1d(kW, Pq_w)
    dhs = [d for lst in th.values() for d, _ in lst] or [0]
    dws = [d for lst in tw.values() for d, _ in lst] or [0]
    pad_top = max(0, -min(dhs))
    pad_left = max(0, -min(dws))
    pad_bot = max(0, (A - 1) + max(dhs) - (H - 1))
    pad_right = max(0, (B - 1) + max(dws) - (W - 1))
    Hp = H + pad_top + pad_bot
    Wp = W + pad_left + pad_right
    Wpk = ((Wp + 7) // 8) * 8        # pad the contraction/lane width to 8-multiple

    SB = S * B
    L = Co * SB

    # One matmul "term" per (row-phase, row-shift dh); every phase gets >= 1 term.
    terms = []                        # (ph, dh_in_padded_input, kh_flipped | None)
    for ph in range(S):
        lst = th.get(ph, [])
        if lst:
            for d, kk in lst:
                terms.append((ph, d + pad_top, kk))
        else:
            terms.append((ph, 0, None))          # bias-only phase (kH < S)
    T = len(terms)
    terms_by_ph = tuple(
        tuple((t, dh) for t, (ph2, dh, _) in enumerate(terms) if ph2 == ph)
        for ph in range(S))

    # -------- Toeplitz weight matrices via one tiny gather ----------------------
    # wmats[t, ci, wp, co*S*B + b*S + pw] = wflip[kh(t), kw(pw, dw), ci, co]
    # with wp = b + dw + pad_left, zero elsewhere.  Lane order is already the
    # final x-interleaved order, so no epilogue shuffle is needed.
    n_w = kH * kW * Ci * Co
    IDX = np.full((T, Ci, Wpk, L), n_w, dtype=np.int32)      # n_w -> 0.0 slot
    for t, (_ph, _dh, kk) in enumerate(terms):
        if kk is None:
            continue
        for pw in range(S):
            for dw, kwf in tw.get(pw, []):
                for ci in range(Ci):
                    for co in range(Co):
                        base = ((kk * kW + kwf) * Ci + ci) * Co + co
                        for bb in range(B):
                            wp = bb + dw + pad_left
                            IDX[t, ci, wp, co * SB + bb * S + pw] = base
    IDX = jnp.asarray(IDX)

    wflip = jnp.transpose(jnp.flip(w, axis=(2, 3)), (2, 3, 0, 1)).reshape(-1)
    wext = jnp.concatenate([wflip.astype(jnp.float32),
                            jnp.zeros((1,), jnp.float32)])
    wmats = wext[IDX]                                        # (T, Ci, Wpk, L)

    bias_row = b.astype(jnp.float32)[np.arange(L) // SB][None, :]      # (1, L)

    # 0/1 row-phase interleave: output row y = a*S+ph <- stacked row ph*A + a.
    pmat = np.zeros((S * A, S * A), np.float32)
    for y in range(S * A):
        pmat[y, (y % S) * A + y // S] = 1.0
    pmat = jnp.asarray(pmat)

    # -------- grid: fat steps, but >= 2 steps so both v7x TensorCores work ------
    nb = N // 2 if (N >= 2 and N % 2 == 0) else 1
    grid = (N // nb,)

    kernel = functools.partial(
        _convt_mxu_kernel, nb=nb, Ci=Ci, Co=Co, S=S, A=A, B=B, H=H, W=W,
        Ho=Ho, Wo=Wo, pad_top=pad_top, pad_left=pad_left,
        terms_by_ph=terms_by_ph)

    return pl.pallas_call(
        kernel,
        out_shape=jax.ShapeDtypeStruct((N, Co, Ho, Wo), x.dtype),
        grid_spec=pltpu.PrefetchScalarGridSpec(
            num_scalar_prefetch=0,
            grid=grid,
            in_specs=[
                pl.BlockSpec((nb, Ci, H, W), lambda g: (g, 0, 0, 0)),
                pl.BlockSpec((T, Ci, Wpk, L), lambda g: (0, 0, 0, 0)),
                pl.BlockSpec((1, L), lambda g: (0, 0)),
                pl.BlockSpec((S * A, S * A), lambda g: (0, 0)),
            ],
            out_specs=pl.BlockSpec((nb, Co, Ho, Wo), lambda g: (g, 0, 0, 0)),
            scratch_shapes=[pltpu.VMEM((Ci, Hp, Wpk), jnp.float32)],
        ),
        compiler_params=pltpu.CompilerParams(
            dimension_semantics=("parallel",),
            vmem_limit_bytes=4 * 1024 * 1024,
        ),
    )(x, wmats, bias_row, pmat)


def _reference(x, w, b, *, stride, padding=1):
    # Transposed conv expressed with lax.conv_general_dilated (lhs dilation).
    kH, kW = w.shape[2], w.shape[3]
    w_oihw = jnp.transpose(jnp.flip(w, axis=(2, 3)), (1, 0, 2, 3))  # (Co, Ci, kH, kW)
    out = jax.lax.conv_general_dilated(
        x, w_oihw,
        window_strides=(1, 1),
        padding=[(kH - 1 - padding, kH - 1 - padding),
                 (kW - 1 - padding, kW - 1 - padding)],
        lhs_dilation=(stride, stride),
        dimension_numbers=("NCHW", "OIHW", "NCHW"),
        precision=jax.lax.Precision.HIGHEST,
    )
    return out + b[None, :, None, None]


if __name__ == "__main__":
    # Module config: in_channels=4, out_channels=4, kernel_size=3, stride=2, padding=1
    in_channels, out_channels, kernel_size, stride = 4, 4, 3, 2
    N, H, W = 2, 16, 16

    key = jax.random.PRNGKey(0)
    kx, kw, kb = jax.random.split(key, 3)
    x = jax.random.normal(kx, (N, in_channels, H, W), dtype=jnp.float32)
    # ConvTranspose2d weight shape: (in_channels, out_channels, kH, kW)
    fan = in_channels * kernel_size * kernel_size
    w = jax.random.uniform(kw, (in_channels, out_channels, kernel_size, kernel_size),
                           dtype=jnp.float32, minval=-1.0, maxval=1.0) / (fan ** 0.5)
    b = jax.random.uniform(kb, (out_channels,), dtype=jnp.float32,
                           minval=-1.0, maxval=1.0) / (fan ** 0.5)

    fwd = jax.jit(functools.partial(upsample_conv_layer, stride=stride, padding=1))
    out = jax.block_until_ready(fwd(x, w, b))

    ref = _reference(x, w, b, stride=stride, padding=1)
    Ho = (H - 1) * stride - 2 + kernel_size
    assert out.shape == (N, out_channels, Ho, Ho), out.shape
    max_err = float(jnp.max(jnp.abs(out - ref)))
    # Tolerance leaves headroom for MXU multi-pass f32 rounding; any real
    # tap/index bug would produce O(0.1..1) errors.
    assert jnp.allclose(out, ref, atol=2e-3, rtol=2e-3), max_err

    print("KERNEL_OK")
</pallas_src>

<mosaic_0001>
module attributes {stable_mosaic.version = 11 : i64} {
  func.func @_convt_mxu_kernel(%arg0: i32, %arg1: memref<1x4x16x16xf32, #tpu.memory_space<vmem>>, %arg2: memref<3x4x24x128xf32, #tpu.memory_space<vmem>>, %arg3: memref<1x128xf32, #tpu.memory_space<vmem>>, %arg4: memref<32x32xf32, #tpu.memory_space<vmem>>, %arg5: memref<1x4x31x31xf32, #tpu.memory_space<vmem>>, %arg6: memref<4x17x24xf32, #tpu.memory_space<vmem>>) attributes {dimension_semantics = [#tpu.dimension_semantics<parallel>], iteration_bounds = array<i64: 2>, scalar_prefetch = 0 : i64, scratch_operands = 1 : i64, tpu.core_type = #tpu.core_type<tc>, window_params = [{transform_indices = @transform_0, window_bounds = array<i64: 1, 4, 16, 16>}, {pipeline_mode = #tpu.pipeline_mode<synchronous>, transform_indices = @transform_1, window_bounds = array<i64: 3, 4, 24, 128>}, {pipeline_mode = #tpu.pipeline_mode<synchronous>, transform_indices = @transform_2, window_bounds = array<i64: 1, 128>}, {pipeline_mode = #tpu.pipeline_mode<synchronous>, transform_indices = @transform_3, window_bounds = array<i64: 32, 32>}, {transform_indices = @transform_4, window_bounds = array<i64: 1, 4, 31, 31>}]} {
    %cst = arith.constant 0.000000e+00 : f32
    %0 = vector.broadcast %cst : f32 to vector<4x17x24xf32>
    %c0 = arith.constant 0 : index
    %c0_0 = arith.constant 0 : index
    %c0_1 = arith.constant 0 : index
    %1 = vector.load %arg6[%c0, %c0_0, %c0_1] : memref<4x17x24xf32, #tpu.memory_space<vmem>>, vector<4x17x24xf32>
    tpu.vector_store %arg6[%c0, %c0_0, %c0_1], %0 {strides = array<i32>} : memref<4x17x24xf32, #tpu.memory_space<vmem>>, vector<4x17x24xf32>,
    %c0_2 = arith.constant 0 : index
    %c0_3 = arith.constant 0 : index
    %2 = vector.load %arg3[%c0_2, %c0_3] : memref<1x128xf32, #tpu.memory_space<vmem>>, vector<1x128xf32>
    %3 = vector.shape_cast %2 : vector<1x128xf32> to vector<1x128xf32>
    %4 = vector.broadcast %3 : vector<1x128xf32> to vector<16x128xf32>
    %c0_4 = arith.constant 0 : index
    %c0_5 = arith.constant 0 : index
    %5 = vector.load %arg4[%c0_4, %c0_5] : memref<32x32xf32, #tpu.memory_space<vmem>>, vector<32x32xf32>
    %c0_6 = arith.constant 0 : index
    %c0_7 = arith.constant 0 : index
    %c0_8 = arith.constant 0 : index
    %c0_9 = arith.constant 0 : index
    %6 = vector.load %arg1[%c0_6, %c0_7, %c0_8, %c0_9] : memref<1x4x16x16xf32, #tpu.memory_space<vmem>>, vector<1x1x16x16xf32>
    %7 = vector.shape_cast %6 : vector<1x1x16x16xf32> to vector<16x16xf32>
    %c0_10 = arith.constant 0 : index
    %c0_11 = arith.constant 0 : index
    %c0_12 = arith.constant 0 : index
    %8 = vector.load %arg6[%c0_10, %c0_11, %c0_12] : memref<4x17x24xf32, #tpu.memory_space<vmem>>, vector<1x16x16xf32>
    %9 = vector.shape_cast %8 : vector<1x16x16xf32> to vector<16x16xf32>
    %10 = vector.shape_cast %7 : vector<16x16xf32> to vector<1x16x16xf32>
    tpu.vector_store %arg6[%c0_10, %c0_11, %c0_12], %10 {strides = array<i32>} : memref<4x17x24xf32, #tpu.memory_space<vmem>>, vector<1x16x16xf32>,
    %c0_13 = arith.constant 0 : index
    %c1 = arith.constant 1 : index
    %c0_14 = arith.constant 0 : index
    %c0_15 = arith.constant 0 : index
    %11 = vector.load %arg1[%c0_13, %c1, %c0_14, %c0_15] : memref<1x4x16x16xf32, #tpu.memory_space<vmem>>, vector<1x1x16x16xf32>
    %12 = vector.shape_cast %11 : vector<1x1x16x16xf32> to vector<16x16xf32>
    %c1_16 = arith.constant 1 : index
    %c0_17 = arith.constant 0 : index
    %c0_18 = arith.constant 0 : index
    %13 = vector.load %arg6[%c1_16, %c0_17, %c0_18] : memref<4x17x24xf32, #tpu.memory_space<vmem>>, vector<1x16x16xf32>
    %14 = vector.shape_cast %13 : vector<1x16x16xf32> to vector<16x16xf32>
    %15 = vector.shape_cast %12 : vector<16x16xf32> to vector<1x16x16xf32>
    tpu.vector_store %arg6[%c1_16, %c0_17, %c0_18], %15 {strides = array<i32>} : memref<4x17x24xf32, #tpu.memory_space<vmem>>, vector<1x16x16xf32>,
    %c0_19 = arith.constant 0 : index
    %c2 = arith.constant 2 : index
    %c0_20 = arith.constant 0 : index
    %c0_21 = arith.constant 0 : index
    %16 = vector.load %arg1[%c0_19, %c2, %c0_20, %c0_21] : memref<1x4x16x16xf32, #tpu.memory_space<vmem>>, vector<1x1x16x16xf32>
    %17 = vector.shape_cast %16 : vector<1x1x16x16xf32> to vector<16x16xf32>
    %c2_22 = arith.constant 2 : index
    %c0_23 = arith.constant 0 : index
    %c0_24 = arith.constant 0 : index
    %18 = vector.load %arg6[%c2_22, %c0_23, %c0_24] : memref<4x17x24xf32, #tpu.memory_space<vmem>>, vector<1x16x16xf32>
    %19 = vector.shape_cast %18 : vector<1x16x16xf32> to vector<16x16xf32>
    %20 = vector.shape_cast %17 : vector<16x16xf32> to vector<1x16x16xf32>
    tpu.vector_store %arg6[%c2_22, %c0_23, %c0_24], %20 {strides = array<i32>} : memref<4x17x24xf32, #tpu.memory_space<vmem>>, vector<1x16x16xf32>,
    %c0_25 = arith.constant 0 : index
    %c3 = arith.constant 3 : index
    %c0_26 = arith.constant 0 : index
    %c0_27 = arith.constant 0 : index
    %21 = vector.load %arg1[%c0_25, %c3, %c0_26, %c0_27] : memref<1x4x16x16xf32, #tpu.memory_space<vmem>>, vector<1x1x16x16xf32>
    %22 = vector.shape_cast %21 : vector<1x1x16x16xf32> to vector<16x16xf32>
    %c3_28 = arith.constant 3 : index
    %c0_29 = arith.constant 0 : index
    %c0_30 = arith.constant 0 : index
    %23 = vector.load %arg6[%c3_28, %c0_29, %c0_30] : memref<4x17x24xf32, #tpu.memory_space<vmem>>, vector<1x16x16xf32>
    %24 = vector.shape_cast %23 : vector<1x16x16xf32> to vector<16x16xf32>
    %25 = vector.shape_cast %22 : vector<16x16xf32> to vector<1x16x16xf32>
    tpu.vector_store %arg6[%c3_28, %c0_29, %c0_30], %25 {strides = array<i32>} : memref<4x17x24xf32, #tpu.memory_space<vmem>>, vector<1x16x16xf32>,
    %c0_31 = arith.constant 0 : index
    %c0_32 = arith.constant 0 : index
    %c0_33 = arith.constant 0 : index
    %26 = vector.load %arg6[%c0_31, %c0_32, %c0_33] : memref<4x17x24xf32, #tpu.memory_space<vmem>>, vector<1x16x24xf32>
    %27 = vector.shape_cast %26 : vector<1x16x24xf32> to vector<16x24xf32>
    %c0_34 = arith.constant 0 : index
    %c0_35 = arith.constant 0 : index
    %c0_36 = arith.constant 0 : index
    %c0_37 = arith.constant 0 : index
    %28 = vector.load %arg2[%c0_34, %c0_35, %c0_36, %c0_37] : memref<3x4x24x128xf32, #tpu.memory_space<vmem>>, vector<1x1x24x128xf32>
    %29 = vector.shape_cast %28 : vector<1x1x24x128xf32> to vector<24x128xf32>
    %cst_38 = arith.constant dense<0.000000e+00> : vector<16x128xf32>
    %30 = tpu.matmul %27, %29, %cst_38 {dimension_numbers = #tpu.dot_dimension_numbers<[1], [0], [0], [1], [0, 0, 1, 1], [], []>, precision = #tpu.contract_precision<fp32>} : vector<16x24xf32>, vector<24x128xf32>, vector<16x128xf32> -> vector<16x128xf32>
    %31 = arith.addf %4, %30 : vector<16x128xf32>
    %c1_39 = arith.constant 1 : index
    %c0_40 = arith.constant 0 : index
    %c0_41 = arith.constant 0 : index
    %32 = vector.load %arg6[%c1_39, %c0_40, %c0_41] : memref<4x17x24xf32, #tpu.memory_space<vmem>>, vector<1x16x24xf32>
    %33 = vector.shape_cast %32 : vector<1x16x24xf32> to vector<16x24xf32>
    %c0_42 = arith.constant 0 : index
    %c1_43 = arith.constant 1 : index
    %c0_44 = arith.constant 0 : index
    %c0_45 = arith.constant 0 : index
    %34 = vector.load %arg2[%c0_42, %c1_43, %c0_44, %c0_45] : memref<3x4x24x128xf32, #tpu.memory_space<vmem>>, vector<1x1x24x128xf32>
    %35 = vector.shape_cast %34 : vector<1x1x24x128xf32> to vector<24x128xf32>
    %cst_46 = arith.constant dense<0.000000e+00> : vector<16x128xf32>
    %36 = tpu.matmul %33, %35, %cst_46 {dimension_numbers = #tpu.dot_dimension_numbers<[1], [0], [0], [1], [0, 0, 1, 1], [], []>, precision = #tpu.contract_precision<fp32>} : vector<16x24xf32>, vector<24x128xf32>, vector<16x128xf32> -> vector<16x128xf32>
    %37 = arith.addf %31, %36 : vector<16x128xf32>
    %c2_47 = arith.constant 2 : index
    %c0_48 = arith.constant 0 : index
    %c0_49 = arith.constant 0 : index
    %38 = vector.load %arg6[%c2_47, %c0_48, %c0_49] : memref<4x17x24xf32, #tpu.memory_space<vmem>>, vector<1x16x24xf32>
    %39 = vector.shape_cast %38 : vector<1x16x24xf32> to vector<16x24xf32>
    %c0_50 = arith.constant 0 : index
    %c2_51 = arith.constant 2 : index
    %c0_52 = arith.constant 0 : index
    %c0_53 = arith.constant 0 : index
    %40 = vector.load %arg2[%c0_50, %c2_51, %c0_52, %c0_53] : memref<3x4x24x128xf32, #tpu.memory_space<vmem>>, vector<1x1x24x128xf32>
    %41 = vector.shape_cast %40 : vector<1x1x24x128xf32> to vector<24x128xf32>
    %cst_54 = arith.constant dense<0.000000e+00> : vector<16x128xf32>
    %42 = tpu.matmul %39, %41, %cst_54 {dimension_numbers = #tpu.dot_dimension_numbers<[1], [0], [0], [1], [0, 0, 1, 1], [], []>, precision = #tpu.contract_precision<fp32>} : vector<16x24xf32>, vector<24x128xf32>, vector<16x128xf32> -> vector<16x128xf32>
    %43 = arith.addf %37, %42 : vector<16x128xf32>
    %c3_55 = arith.constant 3 : index
    %c0_56 = arith.constant 0 : index
    %c0_57 = arith.constant 0 : index
    %44 = vector.load %arg6[%c3_55, %c0_56, %c0_57] : memref<4x17x24xf32, #tpu.memory_space<vmem>>, vector<1x16x24xf32>
    %45 = vector.shape_cast %44 : vector<1x16x24xf32> to vector<16x24xf32>
    %c0_58 = arith.constant 0 : index
    %c3_59 = arith.constant 3 : index
    %c0_60 = arith.constant 0 : index
    %c0_61 = arith.constant 0 : index
    %46 = vector.load %arg2[%c0_58, %c3_59, %c0_60, %c0_61] : memref<3x4x24x128xf32, #tpu.memory_space<vmem>>, vector<1x1x24x128xf32>
    %47 = vector.shape_cast %46 : vector<1x1x24x128xf32> to vector<24x128xf32>
    %cst_62 = arith.constant dense<0.000000e+00> : vector<16x128xf32>
    %48 = tpu.matmul %45, %47, %cst_62 {dimension_numbers = #tpu.dot_dimension_numbers<[1], [0], [0], [1], [0, 0, 1, 1], [], []>, precision = #tpu.contract_precision<fp32>} : vector<16x24xf32>, vector<24x128xf32>, vector<16x128xf32> -> vector<16x128xf32>
    %49 = arith.addf %43, %48 : vector<16x128xf32>
    %c0_63 = arith.constant 0 : index
    %c0_64 = arith.constant 0 : index
    %c0_65 = arith.constant 0 : index
    %50 = vector.load %arg6[%c0_63, %c0_64, %c0_65] : memref<4x17x24xf32, #tpu.memory_space<vmem>>, vector<1x16x24xf32>
    %51 = vector.shape_cast %50 : vector<1x16x24xf32> to vector<16x24xf32>
    %c1_66 = arith.constant 1 : index
    %c0_67 = arith.constant 0 : index
    %c0_68 = arith.constant 0 : index
    %c0_69 = arith.constant 0 : index
    %52 = vector.load %arg2[%c1_66, %c0_67, %c0_68, %c0_69] : memref<3x4x24x128xf32, #tpu.memory_space<vmem>>, vector<1x1x24x128xf32>
    %53 = vector.shape_cast %52 : vector<1x1x24x128xf32> to vector<24x128xf32>
    %cst_70 = arith.constant dense<0.000000e+00> : vector<16x128xf32>
    %54 = tpu.matmul %51, %53, %cst_70 {dimension_numbers = #tpu.dot_dimension_numbers<[1], [0], [0], [1], [0, 0, 1, 1], [], []>, precision = #tpu.contract_precision<fp32>} : vector<16x24xf32>, vector<24x128xf32>, vector<16x128xf32> -> vector<16x128xf32>
    %55 = arith.addf %4, %54 : vector<16x128xf32>
    %c1_71 = arith.constant 1 : index
    %c0_72 = arith.constant 0 : index
    %c0_73 = arith.constant 0 : index
    %56 = vector.load %arg6[%c1_71, %c0_72, %c0_73] : memref<4x17x24xf32, #tpu.memory_space<vmem>>, vector<1x16x24xf32>
    %57 = vector.shape_cast %56 : vector<1x16x24xf32> to vector<16x24xf32>
    %c1_74 = arith.constant 1 : index
    %c1_75 = arith.constant 1 : index
    %c0_76 = arith.constant 0 : index
    %c0_77 = arith.constant 0 : index
    %58 = vector.load %arg2[%c1_74, %c1_75, %c0_76, %c0_77] : memref<3x4x24x128xf32, #tpu.memory_space<vmem>>, vector<1x1x24x128xf32>
    %59 = vector.shape_cast %58 : vector<1x1x24x128xf32> to vector<24x128xf32>
    %cst_78 = arith.constant dense<0.000000e+00> : vector<16x128xf32>
    %60 = tpu.matmul %57, %59, %cst_78 {dimension_numbers = #tpu.dot_dimension_numbers<[1], [0], [0], [1], [0, 0, 1, 1], [], []>, precision = #tpu.contract_precision<fp32>} : vector<16x24xf32>, vector<24x128xf32>, vector<16x128xf32> -> vector<16x128xf32>
    %61 = arith.addf %55, %60 : vector<16x128xf32>
    %c2_79 = arith.constant 2 : index
    %c0_80 = arith.constant 0 : index
    %c0_81 = arith.constant 0 : index
    %62 = vector.load %arg6[%c2_79, %c0_80, %c0_81] : memref<4x17x24xf32, #tpu.memory_space<vmem>>, vector<1x16x24xf32>
    %63 = vector.shape_cast %62 : vector<1x16x24xf32> to vector<16x24xf32>
    %c1_82 = arith.constant 1 : index
    %c2_83 = arith.constant 2 : index
    %c0_84 = arith.constant 0 : index
    %c0_85 = arith.constant 0 : index
    %64 = vector.load %arg2[%c1_82, %c2_83, %c0_84, %c0_85] : memref<3x4x24x128xf32, #tpu.memory_space<vmem>>, vector<1x1x24x128xf32>
    %65 = vector.shape_cast %64 : vector<1x1x24x128xf32> to vector<24x128xf32>
    %cst_86 = arith.constant dense<0.000000e+00> : vector<16x128xf32>
    %66 = tpu.matmul %63, %65, %cst_86 {dimension_numbers = #tpu.dot_dimension_numbers<[1], [0], [0], [1], [0, 0, 1, 1], [], []>, precision = #tpu.contract_precision<fp32>} : vector<16x24xf32>, vector<24x128xf32>, vector<16x128xf32> -> vector<16x128xf32>
    %67 = arith.addf %61, %66 : vector<16x128xf32>
    %c3_87 = arith.constant 3 : index
    %c0_88 = arith.constant 0 : index
    %c0_89 = arith.constant 0 : index
    %68 = vector.load %arg6[%c3_87, %c0_88, %c0_89] : memref<4x17x24xf32, #tpu.memory_space<vmem>>, vector<1x16x24xf32>
    %69 = vector.shape_cast %68 : vector<1x16x24xf32> to vector<16x24xf32>
    %c1_90 = arith.constant 1 : index
    %c3_91 = arith.constant 3 : index
    %c0_92 = arith.constant 0 : index
    %c0_93 = arith.constant 0 : index
    %70 = vector.load %arg2[%c1_90, %c3_91, %c0_92, %c0_93] : memref<3x4x24x128xf32, #tpu.memory_space<vmem>>, vector<1x1x24x128xf32>
    %71 = vector.shape_cast %70 : vector<1x1x24x128xf32> to vector<24x128xf32>
    %cst_94 = arith.constant dense<0.000000e+00> : vector<16x128xf32>
    %72 = tpu.matmul %69, %71, %cst_94 {dimension_numbers = #tpu.dot_dimension_numbers<[1], [0], [0], [1], [0, 0, 1, 1], [], []>, precision = #tpu.contract_precision<fp32>} : vector<16x24xf32>, vector<24x128xf32>, vector<16x128xf32> -> vector<16x128xf32>
    %73 = arith.addf %67, %72 : vector<16x128xf32>
    %c0_95 = arith.constant 0 : index
    %c1_96 = arith.constant 1 : index
    %c0_97 = arith.constant 0 : index
    %74 = vector.load %arg6[%c0_95, %c1_96, %c0_97] : memref<4x17x24xf32, #tpu.memory_space<vmem>>, vector<1x16x24xf32>
    %75 = vector.shape_cast %74 : vector<1x16x24xf32> to vector<16x24xf32>
    %c2_98 = arith.constant 2 : index
    %c0_99 = arith.constant 0 : index
    %c0_100 = arith.constant 0 : index
    %c0_101 = arith.constant 0 : index
    %76 = vector.load %arg2[%c2_98, %c0_99, %c0_100, %c0_101] : memref<3x4x24x128xf32, #tpu.memory_space<vmem>>, vector<1x1x24x128xf32>
    %77 = vector.shape_cast %76 : vector<1x1x24x128xf32> to vector<24x128xf32>
    %cst_102 = arith.constant dense<0.000000e+00> : vector<16x128xf32>
    %78 = tpu.matmul %75, %77, %cst_102 {dimension_numbers = #tpu.dot_dimension_numbers<[1], [0], [0], [1], [0, 0, 1, 1], [], []>, precision = #tpu.contract_precision<fp32>} : vector<16x24xf32>, vector<24x128xf32>, vector<16x128xf32> -> vector<16x128xf32>
    %79 = arith.addf %73, %78 : vector<16x128xf32>
    %c1_103 = arith.constant 1 : index
    %c1_104 = arith.constant 1 : index
    %c0_105 = arith.constant 0 : index
    %80 = vector.load %arg6[%c1_103, %c1_104, %c0_105] : memref<4x17x24xf32, #tpu.memory_space<vmem>>, vector<1x16x24xf32>
    %81 = vector.shape_cast %80 : vector<1x16x24xf32> to vector<16x24xf32>
    %c2_106 = arith.constant 2 : index
    %c1_107 = arith.constant 1 : index
    %c0_108 = arith.constant 0 : index
    %c0_109 = arith.constant 0 : index
    %82 = vector.load %arg2[%c2_106, %c1_107, %c0_108, %c0_109] : memref<3x4x24x128xf32, #tpu.memory_space<vmem>>, vector<1x1x24x128xf32>
    %83 = vector.shape_cast %82 : vector<1x1x24x128xf32> to vector<24x128xf32>
    %cst_110 = arith.constant dense<0.000000e+00> : vector<16x128xf32>
    %84 = tpu.matmul %81, %83, %cst_110 {dimension_numbers = #tpu.dot_dimension_numbers<[1], [0], [0], [1], [0, 0, 1, 1], [], []>, precision = #tpu.contract_precision<fp32>} : vector<16x24xf32>, vector<24x128xf32>, vector<16x128xf32> -> vector<16x128xf32>
    %85 = arith.addf %79, %84 : vector<16x128xf32>
    %c2_111 = arith.constant 2 : index
    %c1_112 = arith.constant 1 : index
    %c0_113 = arith.constant 0 : index
    %86 = vector.load %arg6[%c2_111, %c1_112, %c0_113] : memref<4x17x24xf32, #tpu.memory_space<vmem>>, vector<1x16x24xf32>
    %87 = vector.shape_cast %86 : vector<1x16x24xf32> to vector<16x24xf32>
    %c2_114 = arith.constant 2 : index
    %c2_115 = arith.constant 2 : index
    %c0_116 = arith.constant 0 : index
    %c0_117 = arith.constant 0 : index
    %88 = vector.load %arg2[%c2_114, %c2_115, %c0_116, %c0_117] : memref<3x4x24x128xf32, #tpu.memory_space<vmem>>, vector<1x1x24x128xf32>
    %89 = vector.shape_cast %88 : vector<1x1x24x128xf32> to vector<24x128xf32>
    %cst_118 = arith.constant dense<0.000000e+00> : vector<16x128xf32>
    %90 = tpu.matmul %87, %89, %cst_118 {dimension_numbers = #tpu.dot_dimension_numbers<[1], [0], [0], [1], [0, 0, 1, 1], [], []>, precision = #tpu.contract_precision<fp32>} : vector<16x24xf32>, vector<24x128xf32>, vector<16x128xf32> -> vector<16x128xf32>
    %91 = arith.addf %85, %90 : vector<16x128xf32>
    %c3_119 = arith.constant 3 : index
    %c1_120 = arith.constant 1 : index
    %c0_121 = arith.constant 0 : index
    %92 = vector.load %arg6[%c3_119, %c1_120, %c0_121] : memref<4x17x24xf32, #tpu.memory_space<vmem>>, vector<1x16x24xf32>
    %93 = vector.shape_cast %92 : vector<1x16x24xf32> to vector<16x24xf32>
    %c2_122 = arith.constant 2 : index
    %c3_123 = arith.constant 3 : index
    %c0_124 = arith.constant 0 : index
    %c0_125 = arith.constant 0 : index
    %94 = vector.load %arg2[%c2_122, %c3_123, %c0_124, %c0_125] : memref<3x4x24x128xf32, #tpu.memory_space<vmem>>, vector<1x1x24x128xf32>
    %95 = vector.shape_cast %94 : vector<1x1x24x128xf32> to vector<24x128xf32>
    %cst_126 = arith.constant dense<0.000000e+00> : vector<16x128xf32>
    %96 = tpu.matmul %93, %95, %cst_126 {dimension_numbers = #tpu.dot_dimension_numbers<[1], [0], [0], [1], [0, 0, 1, 1], [], []>, precision = #tpu.contract_precision<fp32>} : vector<16x24xf32>, vector<24x128xf32>, vector<16x128xf32> -> vector<16x128xf32>
    %97 = arith.addf %91, %96 : vector<16x128xf32>
    %98 = tpu.concatenate %49, %97 in 0 : vector<16x128xf32>, vector<16x128xf32> -> vector<32x128xf32>
    %cst_127 = arith.constant dense<0.000000e+00> : vector<32x128xf32>
    %99 = tpu.matmul %5, %98, %cst_127 {dimension_numbers = #tpu.dot_dimension_numbers<[1], [0], [0], [1], [0, 0, 1, 1], [], []>, precision = #tpu.contract_precision<fp32>} : vector<32x32xf32>, vector<32x128xf32>, vector<32x128xf32> -> vector<32x128xf32>
    %100 = vector.extract_strided_slice %99 {offsets = [0, 0], sizes = [31, 31], strides = [1, 1]} : vector<32x128xf32> to vector<31x31xf32>
    %c0_128 = arith.constant 0 : index
    %c0_129 = arith.constant 0 : index
    %c0_130 = arith.constant 0 : index
    %c0_131 = arith.constant 0 : index
    %101 = vector.load %arg5[%c0_128, %c0_129, %c0_130, %c0_131] : memref<1x4x31x31xf32, #tpu.memory_space<vmem>>, vector<1x1x31x31xf32>
    %102 = vector.shape_cast %101 : vector<1x1x31x31xf32> to vector<31x31xf32>
    %103 = vector.shape_cast %100 : vector<31x31xf32> to vector<1x1x31x31xf32>
    tpu.vector_store %arg5[%c0_128, %c0_129, %c0_130, %c0_131], %103 {strides = array<i32>} : memref<1x4x31x31xf32, #tpu.memory_space<vmem>>, vector<1x1x31x31xf32>,
    %104 = vector.extract_strided_slice %99 {offsets = [0, 32], sizes = [31, 31], strides = [1, 1]} : vector<32x128xf32> to vector<31x31xf32>
    %c0_132 = arith.constant 0 : index
    %c1_133 = arith.constant 1 : index
    %c0_134 = arith.constant 0 : index
    %c0_135 = arith.constant 0 : index
    %105 = vector.load %arg5[%c0_132, %c1_133, %c0_134, %c0_135] : memref<1x4x31x31xf32, #tpu.memory_space<vmem>>, vector<1x1x31x31xf32>
    %106 = vector.shape_cast %105 : vector<1x1x31x31xf32> to vector<31x31xf32>
    %107 = vector.shape_cast %104 : vector<31x31xf32> to vector<1x1x31x31xf32>
    tpu.vector_store %arg5[%c0_132, %c1_133, %c0_134, %c0_135], %107 {strides = array<i32>} : memref<1x4x31x31xf32, #tpu.memory_space<vmem>>, vector<1x1x31x31xf32>,
    %108 = vector.extract_strided_slice %99 {offsets = [0, 64], sizes = [31, 31], strides = [1, 1]} : vector<32x128xf32> to vector<31x31xf32>
    %c0_136 = arith.constant 0 : index
    %c2_137 = arith.constant 2 : index
    %c0_138 = arith.constant 0 : index
    %c0_139 = arith.constant 0 : index
    %109 = vector.load %arg5[%c0_136, %c2_137, %c0_138, %c0_139] : memref<1x4x31x31xf32, #tpu.memory_space<vmem>>, vector<1x1x31x31xf32>
    %110 = vector.shape_cast %109 : vector<1x1x31x31xf32> to vector<31x31xf32>
    %111 = vector.shape_cast %108 : vector<31x31xf32> to vector<1x1x31x31xf32>
    tpu.vector_store %arg5[%c0_136, %c2_137, %c0_138, %c0_139], %111 {strides = array<i32>} : memref<1x4x31x31xf32, #tpu.memory_space<vmem>>, vector<1x1x31x31xf32>,
    %112 = vector.extract_strided_slice %99 {offsets = [0, 96], sizes = [31, 31], strides = [1, 1]} : vector<32x128xf32> to vector<31x31xf32>
    %c0_140 = arith.constant 0 : index
    %c3_141 = arith.constant 3 : index
    %c0_142 = arith.constant 0 : index
    %c0_143 = arith.constant 0 : index
    %113 = vector.load %arg5[%c0_140, %c3_141, %c0_142, %c0_143] : memref<1x4x31x31xf32, #tpu.memory_space<vmem>>, vector<1x1x31x31xf32>
    %114 = vector.shape_cast %113 : vector<1x1x31x31xf32> to vector<31x31xf32>
    %115 = vector.shape_cast %112 : vector<31x31xf32> to vector<1x1x31x31xf32>
    tpu.vector_store %arg5[%c0_140, %c3_141, %c0_142, %c0_143], %115 {strides = array<i32>} : memref<1x4x31x31xf32, #tpu.memory_space<vmem>>, vector<1x1x31x31xf32>,
    return
  }
  func.func @transform_0(%arg0: i32) -> (i32, i32, i32, i32) {
    %c0_i32 = arith.constant 0 : i32
    %c0_i32_0 = arith.constant 0 : i32
    %c0_i32_1 = arith.constant 0 : i32
    %c0_i32_2 = arith.constant 0 : i32
    return %arg0, %c0_i32, %c0_i32_0, %c0_i32_1 : i32, i32, i32, i32
  }
  func.func @transform_1(%arg0: i32) -> (i32, i32, i32, i32) {
    %c0_i32 = arith.constant 0 : i32
    %c0_i32_0 = arith.constant 0 : i32
    %c0_i32_1 = arith.constant 0 : i32
    %c0_i32_2 = arith.constant 0 : i32
    %c0_i32_3 = arith.constant 0 : i32
    return %c0_i32, %c0_i32_0, %c0_i32_1, %c0_i32_2 : i32, i32, i32, i32
  }
  func.func @transform_2(%arg0: i32) -> (i32, i32) {
    %c0_i32 = arith.constant 0 : i32
    %c0_i32_0 = arith.constant 0 : i32
    %c0_i32_1 = arith.constant 0 : i32
    return %c0_i32, %c0_i32_0 : i32, i32
  }
  func.func @transform_3(%arg0: i32) -> (i32, i32) {
    %c0_i32 = arith.constant 0 : i32
    %c0_i32_0 = arith.constant 0 : i32
    %c0_i32_1 = arith.constant 0 : i32
    return %c0_i32, %c0_i32_0 : i32, i32
  }
  func.func @transform_4(%arg0: i32) -> (i32, i32, i32, i32) {
    %c0_i32 = arith.constant 0 : i32
    %c0_i32_0 = arith.constant 0 : i32
    %c0_i32_1 = arith.constant 0 : i32
    %c0_i32_2 = arith.constant 0 : i32
    return %arg0, %c0_i32, %c0_i32_0, %c0_i32_1 : i32, i32, i32, i32
  }
}

</mosaic_0001>

<llo_original>
// kernel: upsample_conv_layer.1
$region0: #{upsample_conv_layer.1}
  #allocation0 [shape = 'u32[]', space=smem, size = 0x4, offset = 0x4, fixed_abs, tag = 'smem constant byte address 0x4 - core index']
  #allocation1 [shape = 'u32[72,128]{1,0:T(1,128)}', space=vmem, size = 0x9000, scoped, tag = 'internal scratch']
  #allocation2 [shape = 'f32[4,17,24]{2,1,0:T(8,128)}', space=vmem, size = 0xc000, scoped, tag = 'scratch operand']
  %s0 = inlined_call_operand.vmem [shape: f32[2,4,16,16], index: 0, kind: input, shape index: {}]
  %s1 = inlined_call_operand.vmem [shape: f32[3,4,24,128], index: 1, kind: input, shape index: {}]
  %s2 = inlined_call_operand.vmem [shape: f32[1,128], index: 2, kind: input, shape index: {}]
  %s3 = inlined_call_operand.vmem [shape: f32[32,32], index: 3, kind: input, shape index: {}]
  %s4 = inlined_call_operand.vmem [shape: f32[2,4,31,31], index: 4, kind: output, shape index: {}]
  %s5 = sld [smem:[#allocation0]]
  $region49: #{upsample_conv_layer.1} parent=0
    _
  %s7 = ssub.s32 1, %s5
  %s8 = scalar_select 0, %s7, %s5
  loop: start=0, step=1, limit=4
  $region2: #{upsample_conv_layer.1} parent=0 // loop_pre_header
    _
  $region3: #{upsample_conv_layer.1} parent=0 // loop_header
    %s10 = sphi 0, %s14
    %p11 = scmp.ge.s32.totalorder %s10, 4
    %s20 = sphi 0, %s22
    %s23 = sphi 0, %s20
    %s24 = sphi 0, %s23
    %s40 = sphi 0, %s24
    %s44 = sphi 0, %s44
    %s46 = sphi 0, %s44
    %s47 = sphi 0, %s46
    %s61 = sphi 0, %s47
    %s65 = sphi 0, %s65
    %s67 = sphi 0, %s65
    %s68 = sphi 0, %s67
    %s82 = sphi 0, %s68
    %s86 = sphi 0, %s86
    %s88 = sphi 0, %s86
    %s89 = sphi 0, %s88
    %s103 = sphi 0, %s89
    %s109 = sphi 0, %s111
    %s112 = sphi 0, %s109
    %s113 = sphi 0, %s112
    %s129 = sphi 0, %s113
  $region4: #{upsample_conv_layer.1} parent=0 // loop_header_branch
    %13 = sbr.rel (%p11) target = $region8
  $region5: #{upsample_conv_layer.1} parent=0 // loop_body
    %s15 = ssub.s32 %s10, 1
    %s16 = ssub.s32 %s10, 2
    %s17 = sadd.s32 %s10, 1
    %s18 = ssub.s32 %s10, %s17
    %p19 = scmp.eq.s32.totalorder %s18, 0
    %s21 = sadd.s32 %s20, 1
    %s22 = scalar_select %p19, %s20, %s21
    %p25 = pneg %p19
    %p26 = scmp.eq.s32.totalorder %s10, 1
    %p27 = por %p25, %p26
    %p28 = scmp.ne.s32.totalorder %s20, %s23
    %p29 = scmp.eq.s32.totalorder %s10, 0
    %p30 = por %p28, %p29
    %p31 = scmp.ne.s32.totalorder %s20, %s23
    %p32 = scmp.eq.s32.totalorder %s15, 1
    %p33 = por %p31, %p32
    %p34 = scmp.ne.s32.totalorder %s23, %s24
    %p35 = scmp.eq.s32.totalorder %s15, 0
    %p36 = por %p34, %p35
    %p37 = scmp.ne.s32.totalorder %s23, %s24
    %p38 = scmp.eq.s32.totalorder %s16, 1
    %p39 = por %p37, %p38
    %p41 = scmp.ne.s32.totalorder %s24, %s40
    %p42 = scmp.eq.s32.totalorder %s16, 0
    %p43 = por %p41, %p42
    %s45 = sadd.s32 %s44, 1
    %p48 = scmp.eq.s32.totalorder %s10, 1
    %p49 = scmp.ne.s32.totalorder %s44, %s46
    %p50 = scmp.eq.s32.totalorder %s10, 0
    %p51 = por %p49, %p50
    %p52 = scmp.ne.s32.totalorder %s44, %s46
    %p53 = scmp.eq.s32.totalorder %s15, 1
    %p54 = por %p52, %p53
    %p55 = scmp.ne.s32.totalorder %s46, %s47
    %p56 = scmp.eq.s32.totalorder %s15, 0
    %p57 = por %p55, %p56
    %p58 = scmp.ne.s32.totalorder %s46, %s47
    %p59 = scmp.eq.s32.totalorder %s16, 1
    %p60 = por %p58, %p59
    %p62 = scmp.ne.s32.totalorder %s47, %s61
    %p63 = scmp.eq.s32.totalorder %s16, 0
    %p64 = por %p62, %p63
    %s66 = sadd.s32 %s65, 1
    %p69 = scmp.eq.s32.totalorder %s10, 1
    %p70 = scmp.ne.s32.totalorder %s65, %s67
    %p71 = scmp.eq.s32.totalorder %s10, 0
    %p72 = por %p70, %p71
    %p73 = scmp.ne.s32.totalorder %s65, %s67
    %p74 = scmp.eq.s32.totalorder %s15, 1
    %p75 = por %p73, %p74
    %p76 = scmp.ne.s32.totalorder %s67, %s68
    %p77 = scmp.eq.s32.totalorder %s15, 0
    %p78 = por %p76, %p77
    %p79 = scmp.ne.s32.totalorder %s67, %s68
    %p80 = scmp.eq.s32.totalorder %s16, 1
    %p81 = por %p79, %p80
    %p83 = scmp.ne.s32.totalorder %s68, %s82
    %p84 = scmp.eq.s32.totalorder %s16, 0
    %p85 = por %p83, %p84
    %s87 = sadd.s32 %s86, 1
    %p90 = scmp.eq.s32.totalorder %s10, 1
    %p91 = scmp.ne.s32.totalorder %s86, %s88
    %p92 = scmp.eq.s32.totalorder %s10, 0
    %p93 = por %p91, %p92
    %p94 = scmp.ne.s32.totalorder %s86, %s88
    %p95 = scmp.eq.s32.totalorder %s15, 1
    %p96 = por %p94, %p95
    %p97 = scmp.ne.s32.totalorder %s88, %s89
    %p98 = scmp.eq.s32.totalorder %s15, 0
    %p99 = por %p97, %p98
    %p100 = scmp.ne.s32.totalorder %s88, %s89
    %p101 = scmp.eq.s32.totalorder %s16, 1
    %p102 = por %p100, %p101
    %p104 = scmp.ne.s32.totalorder %s89, %s103
    %p105 = scmp.eq.s32.totalorder %s16, 0
    %p106 = por %p104, %p105
    %s107 = ssub.s32 %s10, %s17
    %p108 = scmp.eq.s32.totalorder %s107, 0
    %s110 = sadd.s32 %s109, 1
    %s111 = scalar_select %p108, %s109, %s110
    %p114 = pneg %p108
    %p115 = scmp.eq.s32.totalorder %s10, 1
    %p116 = por %p114, %p115
    %p117 = scmp.ne.s32.totalorder %s109, %s112
    %p118 = scmp.eq.s32.totalorder %s10, 0
    %p119 = por %p117, %p118
    %p120 = scmp.ne.s32.totalorder %s109, %s112
    %p121 = scmp.eq.s32.totalorder %s15, 1
    %p122 = por %p120, %p121
    %p123 = scmp.ne.s32.totalorder %s112, %s113
    %p124 = scmp.eq.s32.totalorder %s15, 0
    %p125 = por %p123, %p124
    %p126 = scmp.ne.s32.totalorder %s112, %s113
    %p127 = scmp.eq.s32.totalorder %s16, 1
    %p128 = por %p126, %p127
    %p130 = scmp.ne.s32.totalorder %s113, %s129
    %p131 = scmp.eq.s32.totalorder %s16, 0
    %p132 = por %p130, %p131
    %p133 = scmp.le.s32.totalorder 1, %s10
    %p134 = scmp.lt.s32.totalorder %s10, 3
    %p135 = pnand %p133, %p134
    %p136 = pneg %p135
    // Predicated region
    $region9: #{upsample_conv_layer.1} parent=5 // pred_check
      _
    $region10: #{upsample_conv_layer.1} parent=5 // pred_check_branch
      %138 = sbr.rel (%p135) target = $region12
    $region11: #{upsample_conv_layer.1} parent=5 // pred_region
      %s139 = ssub.s32 %s10, 1
      // Predicated region
      $region13: #{upsample_conv_layer.1} parent=11 // pred_check
        %p140 = pneg %p57
      $region14: #{upsample_conv_layer.1} parent=11 // pred_check_branch
        %142 = sbr.rel (%p140) target = $region16
      $region15: #{upsample_conv_layer.1} parent=11 // pred_region
        _
      $region16: #{upsample_conv_layer.1} parent=11 // pred_fallthru
        _
      // Predicated region
      $region17: #{upsample_conv_layer.1} parent=11 // pred_check
        %p143 = pneg %p78
      $region18: #{upsample_conv_layer.1} parent=11 // pred_check_branch
        %145 = sbr.rel (%p143) target = $region20
      $region19: #{upsample_conv_layer.1} parent=11 // pred_region
        _
      $region20: #{upsample_conv_layer.1} parent=11 // pred_fallthru
        _
      // Predicated region
      $region21: #{upsample_conv_layer.1} parent=11 // pred_check
        %p146 = pneg %p99
      $region22: #{upsample_conv_layer.1} parent=11 // pred_check_branch
        %148 = sbr.rel (%p146) target = $region24
      $region23: #{upsample_conv_layer.1} parent=11 // pred_region
        _
      $region24: #{upsample_conv_layer.1} parent=11 // pred_fallthru
        _
    $region12: #{upsample_conv_layer.1} parent=5 // pred_fallthru
      _
    %p149 = scmp.lt.s32.totalorder %s10, 2
    // Predicated region
    $region25: #{upsample_conv_layer.1} parent=5 // pred_check
      %p150 = pneg %p149
    $region26: #{upsample_conv_layer.1} parent=5 // pred_check_branch
      %152 = sbr.rel (%p150) target = $region28
    $region27: #{upsample_conv_layer.1} parent=5 // pred_region
      // Predicated region
      $region29: #{upsample_conv_layer.1} parent=27 // pred_check
        %p153 = pneg %p30
      $region30: #{upsample_conv_layer.1} parent=27 // pred_check_branch
        %155 = sbr.rel (%p153) target = $region32
      $region31: #{upsample_conv_layer.1} parent=27 // pred_region
        %p156 = scmp.lt.s32.totalorder %s10, 1
        %s157 = scalar_select %p156, %s10, 1
        %s158 = smul.addr %s157, 8
        %s159 = smul.addr %s158, 8
        %s160 = scalar_lea.vmem %s0, %s159
      $region32: #{upsample_conv_layer.1} parent=27 // pred_fallthru
        _
    $region28: #{upsample_conv_layer.1} parent=5 // pred_fallthru
      _
    %p161 = scmp.le.s32.totalorder 1, %s10
    %p162 = scmp.lt.s32.totalorder %s10, 3
    %p163 = pnand %p161, %p162
    %p164 = pneg %p163
    // Predicated region
    $region33: #{upsample_conv_layer.1} parent=5 // pred_check
      _
    $region34: #{upsample_conv_layer.1} parent=5 // pred_check_branch
      %166 = sbr.rel (%p163) target = $region36
    $region35: #{upsample_conv_layer.1} parent=5 // pred_region
      %s167 = ssub.s32 %s10, 1
      %p168 = scmp.lt.s32.totalorder %s15, 1
      %s169 = scalar_select %p168, %s15, 1
      %s170 = smul.addr %s169, 8
      %s171 = smul.addr %s170, 8
      %s172 = scalar_lea.vmem %s0, %s171
      %p173 = pneg %p36
      %p174 = pneg %p33
      %p175 = pneg %p57
      %p176 = pneg %p54
      %p177 = pneg %p78
      %p178 = pneg %p75
      %p179 = pneg %p99
      %p180 = pneg %p96
      %p181 = pneg %p125
      %p182 = pneg %p122
      %p183 = scmp.lt.s32.totalorder %s15, 1
      %s184 = scalar_select %p183, %s15, 1
      %s185 = smul.addr %s184, 16
      %s186 = smul.addr %s185, 8
      %s187 = scalar_lea.vmem %s4, %s186
      %p188 = scmp.lt.s32.totalorder %s15, 1
      %s189 = scalar_select %p188, %s15, 1
      %s190 = smul.addr %s189, 8
      %s191 = smul.addr %s190, 8
      %s192 = scalar_lea.vmem %s0, %s191
      %p193 = scmp.lt.s32.totalorder %s15, 1
      %s194 = scalar_select %p193, %s15, 1
      %s195 = smul.addr %s194, 16
      %s196 = smul.addr %s195, 8
      %s197 = scalar_lea.vmem %s4, %s196
      %vm198 = vcmask 195584
      %199 = vst.msk [vmem:[#allocation2] sm:$0xff] %vm198, 0.0
      %200 = vst.msk [vmem:[#allocation2 + $0x8] sm:$0xff] %vm198, 0.0
      %vm201 = vcmask 188416
      %202 = vst.msk [vmem:[#allocation2 + $0x10] sm:$0x1] %vm201, 0.0
      %203 = vst.msk [vmem:[#allocation2 + $0x18] sm:$0xff] %vm198, 0.0
      %204 = vst.msk [vmem:[#allocation2 + $0x20] sm:$0xff] %vm198, 0.0
      %205 = vst.msk [vmem:[#allocation2 + $0x28] sm:$0x1] %vm201, 0.0
      %206 = vst.msk [vmem:[#allocation2 + $0x30] sm:$0xff] %vm198, 0.0
      %207 = vst.msk [vmem:[#allocation2 + $0x38] sm:$0xff] %vm198, 0.0
      %208 = vst.msk [vmem:[#allocation2 + $0x40] sm:$0x1] %vm201, 0.0
      %209 = vst.msk [vmem:[#allocation2 + $0x48] sm:$0xff] %vm198, 0.0
      %210 = vst.msk [vmem:[#allocation2 + $0x50] sm:$0xff] %vm198, 0.0
      %211 = vst.msk [vmem:[#allocation2 + $0x58] sm:$0x1] %vm201, 0.0
      %v212 = vld [vmem:[%s2] sm:$0x1]
      %v214 = vperm.slane %v212, 0
      %v216 = vld [vmem:[%s3] sm:$0xff]
      %v217 = vld [vmem:[%s3 + $0x8] sm:$0xff]
      %v218 = vld [vmem:[%s3 + $0x10] sm:$0xff]
      %v219 = vld [vmem:[%s3 + $0x18] sm:$0xff]
      %v220 = vld [vmem:[%s192] sm:$0xff]
      %v221 = vld [vmem:[%s192 + $0x8] sm:$0xff]
      %vm222 = vcmask 130048
      %223 = vst.msk [vmem:[#allocation2] sm:$0xff] %vm222, %v220
      %224 = vst.msk [vmem:[#allocation2 + $0x8] sm:$0xff] %vm222, %v221
      %s225 = scalar_lea.vmem %s192, 16
      %v226 = vld [vmem:[%s225] sm:$0xff]
      %v227 = vld [vmem:[%s225 + $0x8] sm:$0xff]
      %s228 = scalar_lea.vmem [#allocation2], 24
      %229 = vst.msk [vmem:[%s228] sm:$0xff] %vm222, %v226
      %230 = vst.msk [vmem:[%s228 + $0x8] sm:$0xff] %vm222, %v227
      %s231 = scalar_lea.vmem %s192, 32
      %v232 = vld [vmem:[%s231] sm:$0xff]
      %v233 = vld [vmem:[%s231 + $0x8] sm:$0xff]
      %s234 = scalar_lea.vmem [#allocation2], 48
      %235 = vst.msk [vmem:[%s234] sm:$0xff] %vm222, %v232
      %236 = vst.msk [vmem:[%s234 + $0x8] sm:$0xff] %vm222, %v233
      %s237 = scalar_lea.vmem %s192, 48
      %v238 = vld [vmem:[%s237] sm:$0xff]
      %v239 = vld [vmem:[%s237 + $0x8] sm:$0xff]
      %s240 = scalar_lea.vmem [#allocation2], 72
      %241 = vst.msk [vmem:[%s240] sm:$0xff] %vm222, %v238
      %242 = vst.msk [vmem:[%s240 + $0x8] sm:$0xff] %vm222, %v239
      %v243 = vld [vmem:[#allocation2] sm:$0xff]
      %v244 = vld [vmem:[#allocation2 + $0x8] sm:$0xff]
      %v245 = vld [vmem:[%s1] sm:$0xff]
      %v246 = vld [vmem:[%s1 + $0x8] sm:$0xff]
      %v247 = vld [vmem:[%s1 + $0x10] sm:$0xff]
      %v249 = vsel %vm198, %v243, 0
      %v252 = vsel %vm198, %v244, 0
      %254 = vmatpush.msra.mxu0 0.0
      %255 = vmatpush.msra.mxu0 0.0
      %256 = vmatpush.msra.mxu0 0.0
      %257 = vmatpush.msra.mxu0 0.0
      %258 = vmatpush.msra.mxu0 0.0
      %259 = vmatpush.msra.mxu0 0.0
      %260 = vmatpush.msra.mxu0 0.0
      %261 = vmatpush.msra.mxu0 0.0
      %262 = vmatpush.msra.mxu0 0.0
      %263 = vmatpush.msra.mxu0 0.0
      %264 = vmatpush.msra.mxu0 0.0
      %265 = vmatpush.msra.mxu0 0.0
      %266 = vmatpush.msra.mxu0 0.0
      %v267 = vand.u32 %v247, 4294901760
      %268 = vmatpush.msra.mxu0 %v267
      %v269 = vand.u32 %v246, 4294901760
      %270 = vmatpush.msra.mxu0 %v269
      %v271 = vand.u32 %v245, 4294901760
      %272 = vmatpush.msra.mxu0 %v271
      %v273 = vand.u32 %v249, 4294901760
      %v274 = vsub.f32 %v249, %v273
      %v275 = vand.u32 %v274, 4294901760
      %v276 = vsub.f32 %v274, %v275
      %v277 = vand.u32 %v276, 4294901760
      %278 = vmatmul.f32.gmra.mxu0 %v277
      %v279 = vpop.f32.mrf.mxu0
      %v280 = vadd.f32 0.0, %v279
      %v281 = vand.u32 %v252, 4294901760
      %v282 = vsub.f32 %v252, %v281
      %v283 = vand.u32 %v282, 4294901760
      %v284 = vsub.f32 %v282, %v283
      %v285 = vand.u32 %v284, 4294901760
      %286 = vmatmul.f32.gmra.mxu0 %v285
      %v287 = vpop.f32.mrf.mxu0
      %v288 = vadd.f32 0.0, %v287
      %289 = vdwg.mxu0
      %290 = vmatpush.msra.mxu0 0.0
      %291 = vmatpush.msra.mxu0 0.0
      %292 = vmatpush.msra.mxu0 0.0
      %293 = vmatpush.msra.mxu0 0.0
      %294 = vmatpush.msra.mxu0 0.0
      %295 = vmatpush.msra.mxu0 0.0
      %296 = vmatpush.msra.mxu0 0.0
      %297 = vmatpush.msra.mxu0 0.0
      %298 = vmatpush.msra.mxu0 0.0
      %299 = vmatpush.msra.mxu0 0.0
      %300 = vmatpush.msra.mxu0 0.0
      %301 = vmatpush.msra.mxu0 0.0
      %302 = vmatpush.msra.mxu0 0.0
      %v303 = vand.u32 %v247, 4294901760
      %v304 = vsub.f32 %v247, %v303
      %v305 = vand.u32 %v304, 4294901760
      %v306 = vsub.f32 %v304, %v305
      %v307 = vand.u32 %v306, 4294901760
      %308 = vmatpush.msra.mxu0 %v307
      %v309 = vand.u32 %v246, 4294901760
      %v310 = vsub.f32 %v246, %v309
      %v311 = vand.u32 %v310, 4294901760
      %v312 = vsub.f32 %v310, %v311
      %v313 = vand.u32 %v312, 4294901760
      %314 = vmatpush.msra.mxu0 %v313
      %v315 = vand.u32 %v245, 4294901760
      %v316 = vsub.f32 %v245, %v315
      %v317 = vand.u32 %v316, 4294901760
      %v318 = vsub.f32 %v316, %v317
      %v319 = vand.u32 %v318, 4294901760
      %320 = vmatpush.msra.mxu0 %v319
      %v321 = vand.u32 %v249, 4294901760
      %322 = vmatmul.f32.gmra.mxu0 %v321
      %v323 = vpop.f32.mrf.mxu0
      %v324 = vadd.f32 %v280, %v323
      %v325 = vand.u32 %v252, 4294901760
      %326 = vmatmul.f32.gmra.mxu0 %v325
      %v327 = vpop.f32.mrf.mxu0
      %v328 = vadd.f32 %v288, %v327
      %329 = vdwg.mxu0
      %330 = vmatpush.msra.mxu0 0.0
      %331 = vmatpush.msra.mxu0 0.0
      %332 = vmatpush.msra.mxu0 0.0
      %333 = vmatpush.msra.mxu0 0.0
      %334 = vmatpush.msra.mxu0 0.0
      %335 = vmatpush.msra.mxu0 0.0
      %336 = vmatpush.msra.mxu0 0.0
      %337 = vmatpush.msra.mxu0 0.0
      %338 = vmatpush.msra.mxu0 0.0
      %339 = vmatpush.msra.mxu0 0.0
      %340 = vmatpush.msra.mxu0 0.0
      %341 = vmatpush.msra.mxu0 0.0
      %342 = vmatpush.msra.mxu0 0.0
      %v343 = vand.u32 %v247, 4294901760
      %v344 = vsub.f32 %v247, %v343
      %345 = vmatpush.msra.mxu0 %v344
      %v346 = vand.u32 %v246, 4294901760
      %v347 = vsub.f32 %v246, %v346
      %348 = vmatpush.msra.mxu0 %v347
      %v349 = vand.u32 %v245, 4294901760
      %v350 = vsub.f32 %v245, %v349
      %351 = vmatpush.msra.mxu0 %v350
      %v352 = vand.u32 %v249, 4294901760
      %v353 = vsub.f32 %v249, %v352
      %354 = vmatmul.f32.gmra.mxu0 %v353
      %v355 = vpop.f32.mrf.mxu0
      %v356 = vadd.f32 %v324, %v355
      %v357 = vand.u32 %v252, 4294901760
      %v358 = vsub.f32 %v252, %v357
      %359 = vmatmul.f32.gmra.mxu0 %v358
      %v360 = vpop.f32.mrf.mxu0
      %v361 = vadd.f32 %v328, %v360
      %362 = vdwg.mxu0
      %363 = vmatpush.msra.mxu0 0.0
      %364 = vmatpush.msra.mxu0 0.0
      %365 = vmatpush.msra.mxu0 0.0
      %366 = vmatpush.msra.mxu0 0.0
      %367 = vmatpush.msra.mxu0 0.0
      %368 = vmatpush.msra.mxu0 0.0
      %369 = vmatpush.msra.mxu0 0.0
      %370 = vmatpush.msra.mxu0 0.0
      %371 = vmatpush.msra.mxu0 0.0
      %372 = vmatpush.msra.mxu0 0.0
      %373 = vmatpush.msra.mxu0 0.0
      %374 = vmatpush.msra.mxu0 0.0
      %375 = vmatpush.msra.mxu0 0.0
      %v376 = vand.u32 %v247, 4294901760
      %377 = vmatpush.msra.mxu0 %v376
      %v378 = vand.u32 %v246, 4294901760
      %379 = vmatpush.msra.mxu0 %v378
      %v380 = vand.u32 %v245, 4294901760
      %381 = vmatpush.msra.mxu0 %v380
      %v382 = vand.u32 %v249, 4294901760
      %v383 = vsub.f32 %v249, %v382
      %v384 = vand.u32 %v383, 4294901760
      %385 = vmatmul.f32.gmra.mxu0 %v384
      %v386 = vpop.f32.mrf.mxu0
      %v387 = vadd.f32 %v356, %v386
      %v388 = vand.u32 %v252, 4294901760
      %v389 = vsub.f32 %v252, %v388
      %v390 = vand.u32 %v389, 4294901760
      %391 = vmatmul.f32.gmra.mxu0 %v390
      %v392 = vpop.f32.mrf.mxu0
      %v393 = vadd.f32 %v361, %v392
      %394 = vdwg.mxu0
      %395 = vmatpush.msra.mxu0 0.0
      %396 = vmatpush.msra.mxu0 0.0
      %397 = vmatpush.msra.mxu0 0.0
      %398 = vmatpush.msra.mxu0 0.0
      %399 = vmatpush.msra.mxu0 0.0
      %400 = vmatpush.msra.mxu0 0.0
      %401 = vmatpush.msra.mxu0 0.0
      %402 = vmatpush.msra.mxu0 0.0
      %403 = vmatpush.msra.mxu0 0.0
      %404 = vmatpush.msra.mxu0 0.0
      %405 = vmatpush.msra.mxu0 0.0
      %406 = vmatpush.msra.mxu0 0.0
      %407 = vmatpush.msra.mxu0 0.0
      %v408 = vand.u32 %v247, 4294901760
      %v409 = vsub.f32 %v247, %v408
      %v410 = vand.u32 %v409, 4294901760
      %411 = vmatpush.msra.mxu0 %v410
      %v412 = vand.u32 %v246, 4294901760
      %v413 = vsub.f32 %v246, %v412
      %v414 = vand.u32 %v413, 4294901760
      %415 = vmatpush.msra.mxu0 %v414
      %v416 = vand.u32 %v245, 4294901760
      %v417 = vsub.f32 %v245, %v416
      %v418 = vand.u32 %v417, 4294901760
      %419 = vmatpush.msra.mxu0 %v418
      %v420 = vand.u32 %v249, 4294901760
      %421 = vmatmul.f32.gmra.mxu0 %v420
      %v422 = vpop.f32.mrf.mxu0
      %v423 = vadd.f32 %v387, %v422
      %v424 = vand.u32 %v252, 4294901760
      %425 = vmatmul.f32.gmra.mxu0 %v424
      %v426 = vpop.f32.mrf.mxu0
      %v427 = vadd.f32 %v393, %v426
      %428 = vdwg.mxu0
      %429 = vmatpush.msra.mxu0 0.0
      %430 = vmatpush.msra.mxu0 0.0
      %431 = vmatpush.msra.mxu0 0.0
      %432 = vmatpush.msra.mxu0 0.0
      %433 = vmatpush.msra.mxu0 0.0
      %434 = vmatpush.msra.mxu0 0.0
      %435 = vmatpush.msra.mxu0 0.0
      %436 = vmatpush.msra.mxu0 0.0
      %437 = vmatpush.msra.mxu0 0.0
      %438 = vmatpush.msra.mxu0 0.0
      %439 = vmatpush.msra.mxu0 0.0
      %440 = vmatpush.msra.mxu0 0.0
      %441 = vmatpush.msra.mxu0 0.0
      %v442 = vand.u32 %v247, 4294901760
      %443 = vmatpush.msra.mxu0 %v442
      %v444 = vand.u32 %v246, 4294901760
      %445 = vmatpush.msra.mxu0 %v444
      %v446 = vand.u32 %v245, 4294901760
      %447 = vmatpush.msra.mxu0 %v446
      %v448 = vand.u32 %v249, 4294901760
      %449 = vmatmul.f32.gmra.mxu0 %v448
      %v450 = vpop.f32.mrf.mxu0
      %v451 = vadd.f32 %v423, %v450
      %v452 = vand.u32 %v252, 4294901760
      %453 = vmatmul.f32.gmra.mxu0 %v452
      %v454 = vpop.f32.mrf.mxu0
      %v455 = vadd.f32 %v427, %v454
      %456 = vdwg.mxu0
      %v457 = vadd.f32 %v214, %v451
      %v458 = vadd.f32 %v214, %v455
      %v459 = vld [vmem:[%s228] sm:$0xff]
      %v460 = vld [vmem:[%s228 + $0x8] sm:$0xff]
      %s461 = scalar_lea.vmem %s1, 24
      %v462 = vld [vmem:[%s461] sm:$0xff]
      %v463 = vld [vmem:[%s461 + $0x8] sm:$0xff]
      %v464 = vld [vmem:[%s461 + $0x10] sm:$0xff]
      %v466 = vsel %vm198, %v459, 0
      %v469 = vsel %vm198, %v460, 0
      %471 = vmatpush.msra.mxu0 0.0
      %472 = vmatpush.msra.mxu0 0.0
      %473 = vmatpush.msra.mxu0 0.0
      %474 = vmatpush.msra.mxu0 0.0
      %475 = vmatpush.msra.mxu0 0.0
      %476 = vmatpush.msra.mxu0 0.0
      %477 = vmatpush.msra.mxu0 0.0
      %478 = vmatpush.msra.mxu0 0.0
      %479 = vmatpush.msra.mxu0 0.0
      %480 = vmatpush.msra.mxu0 0.0
      %481 = vmatpush.msra.mxu0 0.0
      %482 = vmatpush.msra.mxu0 0.0
      %483 = vmatpush.msra.mxu0 0.0
      %v484 = vand.u32 %v464, 4294901760
      %485 = vmatpush.msra.mxu0 %v484
      %v486 = vand.u32 %v463, 4294901760
      %487 = vmatpush.msra.mxu0 %v486
      %v488 = vand.u32 %v462, 4294901760
      %489 = vmatpush.msra.mxu0 %v488
      %v490 = vand.u32 %v466, 4294901760
      %v491 = vsub.f32 %v466, %v490
      %v492 = vand.u32 %v491, 4294901760
      %v493 = vsub.f32 %v491, %v492
      %v494 = vand.u32 %v493, 4294901760
      %495 = vmatmul.f32.gmra.mxu0 %v494
      %v496 = vpop.f32.mrf.mxu0
      %v497 = vadd.f32 0.0, %v496
      %v498 = vand.u32 %v469, 4294901760
      %v499 = vsub.f32 %v469, %v498
      %v500 = vand.u32 %v499, 4294901760
      %v501 = vsub.f32 %v499, %v500
      %v502 = vand.u32 %v501, 4294901760
      %503 = vmatmul.f32.gmra.mxu0 %v502
      %v504 = vpop.f32.mrf.mxu0
      %v505 = vadd.f32 0.0, %v504
      %506 = vdwg.mxu0
      %507 = vmatpush.msra.mxu0 0.0
      %508 = vmatpush.msra.mxu0 0.0
      %509 = vmatpush.msra.mxu0 0.0
      %510 = vmatpush.msra.mxu0 0.0
      %511 = vmatpush.msra.mxu0 0.0
      %512 = vmatpush.msra.mxu0 0.0
      %513 = vmatpush.msra.mxu0 0.0
      %514 = vmatpush.msra.mxu0 0.0
      %515 = vmatpush.msra.mxu0 0.0
      %516 = vmatpush.msra.mxu0 0.0
      %517 = vmatpush.msra.mxu0 0.0
      %518 = vmatpush.msra.mxu0 0.0
      %519 = vmatpush.msra.mxu0 0.0
      %v520 = vand.u32 %v464, 4294901760
      %v521 = vsub.f32 %v464, %v520
      %v522 = vand.u32 %v521, 4294901760
      %v523 = vsub.f32 %v521, %v522
      %v524 = vand.u32 %v523, 4294901760
      %525 = vmatpush.msra.mxu0 %v524
      %v526 = vand.u32 %v463, 4294901760
      %v527 = vsub.f32 %v463, %v526
      %v528 = vand.u32 %v527, 4294901760
      %v529 = vsub.f32 %v527, %v528
      %v530 = vand.u32 %v529, 4294901760
      %531 = vmatpush.msra.mxu0 %v530
      %v532 = vand.u32 %v462, 4294901760
      %v533 = vsub.f32 %v462, %v532
      %v534 = vand.u32 %v533, 4294901760
      %v535 = vsub.f32 %v533, %v534
      %v536 = vand.u32 %v535, 4294901760
      %537 = vmatpush.msra.mxu0 %v536
      %v538 = vand.u32 %v466, 4294901760
      %539 = vmatmul.f32.gmra.mxu0 %v538
      %v540 = vpop.f32.mrf.mxu0
      %v541 = vadd.f32 %v497, %v540
      %v542 = vand.u32 %v469, 4294901760
      %543 = vmatmul.f32.gmra.mxu0 %v542
      %v544 = vpop.f32.mrf.mxu0
      %v545 = vadd.f32 %v505, %v544
      %546 = vdwg.mxu0
      %547 = vmatpush.msra.mxu0 0.0
      %548 = vmatpush.msra.mxu0 0.0
      %549 = vmatpush.msra.mxu0 0.0
      %550 = vmatpush.msra.mxu0 0.0
      %551 = vmatpush.msra.mxu0 0.0
      %552 = vmatpush.msra.mxu0 0.0
      %553 = vmatpush.msra.mxu0 0.0
      %554 = vmatpush.msra.mxu0 0.0
      %555 = vmatpush.msra.mxu0 0.0
      %556 = vmatpush.msra.mxu0 0.0
      %557 = vmatpush.msra.mxu0 0.0
      %558 = vmatpush.msra.mxu0 0.0
      %559 = vmatpush.msra.mxu0 0.0
      %v560 = vand.u32 %v464, 4294901760
      %v561 = vsub.f32 %v464, %v560
      %562 = vmatpush.msra.mxu0 %v561
      %v563 = vand.u32 %v463, 4294901760
      %v564 = vsub.f32 %v463, %v563
      %565 = vmatpush.msra.mxu0 %v564
      %v566 = vand.u32 %v462, 4294901760
      %v567 = vsub.f32 %v462, %v566
      %568 = vmatpush.msra.mxu0 %v567
      %v569 = vand.u32 %v466, 4294901760
      %v570 = vsub.f32 %v466, %v569
      %571 = vmatmul.f32.gmra.mxu0 %v570
      %v572 = vpop.f32.mrf.mxu0
      %v573 = vadd.f32 %v541, %v572
      %v574 = vand.u32 %v469, 4294901760
      %v575 = vsub.f32 %v469, %v574
      %576 = vmatmul.f32.gmra.mxu0 %v575
      %v577 = vpop.f32.mrf.mxu0
      %v578 = vadd.f32 %v545, %v577
      %579 = vdwg.mxu0
      %580 = vmatpush.msra.mxu0 0.0
      %581 = vmatpush.msra.mxu0 0.0
      %582 = vmatpush.msra.mxu0 0.0
      %583 = vmatpush.msra.mxu0 0.0
      %584 = vmatpush.msra.mxu0 0.0
      %585 = vmatpush.msra.mxu0 0.0
      %586 = vmatpush.msra.mxu0 0.0
      %587 = vmatpush.msra.mxu0 0.0
      %588 = vmatpush.msra.mxu0 0.0
      %589 = vmatpush.msra.mxu0 0.0
      %590 = vmatpush.msra.mxu0 0.0
      %591 = vmatpush.msra.mxu0 0.0
      %592 = vmatpush.msra.mxu0 0.0
      %v593 = vand.u32 %v464, 4294901760
      %594 = vmatpush.msra.mxu0 %v593
      %v595 = vand.u32 %v463, 4294901760
      %596 = vmatpush.msra.mxu0 %v595
      %v597 = vand.u32 %v462, 4294901760
      %598 = vmatpush.msra.mxu0 %v597
      %v599 = vand.u32 %v466, 4294901760
      %v600 = vsub.f32 %v466, %v599
      %v601 = vand.u32 %v600, 4294901760
      %602 = vmatmul.f32.gmra.mxu0 %v601
      %v603 = vpop.f32.mrf.mxu0
      %v604 = vadd.f32 %v573, %v603
      %v605 = vand.u32 %v469, 4294901760
      %v606 = vsub.f32 %v469, %v605
      %v607 = vand.u32 %v606, 4294901760
      %608 = vmatmul.f32.gmra.mxu0 %v607
      %v609 = vpop.f32.mrf.mxu0
      %v610 = vadd.f32 %v578, %v609
      %611 = vdwg.mxu0
      %612 = vmatpush.msra.mxu0 0.0
      %613 = vmatpush.msra.mxu0 0.0
      %614 = vmatpush.msra.mxu0 0.0
      %615 = vmatpush.msra.mxu0 0.0
      %616 = vmatpush.msra.mxu0 0.0
      %617 = vmatpush.msra.mxu0 0.0
      %618 = vmatpush.msra.mxu0 0.0
      %619 = vmatpush.msra.mxu0 0.0
      %620 = vmatpush.msra.mxu0 0.0
      %621 = vmatpush.msra.mxu0 0.0
      %622 = vmatpush.msra.mxu0 0.0
      %623 = vmatpush.msra.mxu0 0.0
      %624 = vmatpush.msra.mxu0 0.0
      %v625 = vand.u32 %v464, 4294901760
      %v626 = vsub.f32 %v464, %v625
      %v627 = vand.u32 %v626, 4294901760
      %628 = vmatpush.msra.mxu0 %v627
      %v629 = vand.u32 %v463, 4294901760
      %v630 = vsub.f32 %v463, %v629
      %v631 = vand.u32 %v630, 4294901760
      %632 = vmatpush.msra.mxu0 %v631
      %v633 = vand.u32 %v462, 4294901760
      %v634 = vsub.f32 %v462, %v633
      %v635 = vand.u32 %v634, 4294901760
      %636 = vmatpush.msra.mxu0 %v635
      %v637 = vand.u32 %v466, 4294901760
      %638 = vmatmul.f32.gmra.mxu0 %v637
      %v639 = vpop.f32.mrf.mxu0
      %v640 = vadd.f32 %v604, %v639
      %v641 = vand.u32 %v469, 4294901760
      %642 = vmatmul.f32.gmra.mxu0 %v641
      %v643 = vpop.f32.mrf.mxu0
      %v644 = vadd.f32 %v610, %v643
      %645 = vdwg.mxu0
      %646 = vmatpush.msra.mxu0 0.0
      %647 = vmatpush.msra.mxu0 0.0
      %648 = vmatpush.msra.mxu0 0.0
      %649 = vmatpush.msra.mxu0 0.0
      %650 = vmatpush.msra.mxu0 0.0
      %651 = vmatpush.msra.mxu0 0.0
      %652 = vmatpush.msra.mxu0 0.0
      %653 = vmatpush.msra.mxu0 0.0
      %654 = vmatpush.msra.mxu0 0.0
      %655 = vmatpush.msra.mxu0 0.0
      %656 = vmatpush.msra.mxu0 0.0
      %657 = vmatpush.msra.mxu0 0.0
      %658 = vmatpush.msra.mxu0 0.0
      %v659 = vand.u32 %v464, 4294901760
      %660 = vmatpush.msra.mxu0 %v659
      %v661 = vand.u32 %v463, 4294901760
      %662 = vmatpush.msra.mxu0 %v661
      %v663 = vand.u32 %v462, 4294901760
      %664 = vmatpush.msra.mxu0 %v663
      %v665 = vand.u32 %v466, 4294901760
      %666 = vmatmul.f32.gmra.mxu0 %v665
      %v667 = vpop.f32.mrf.mxu0
      %v668 = vadd.f32 %v640, %v667
      %v669 = vand.u32 %v469, 4294901760
      %670 = vmatmul.f32.gmra.mxu0 %v669
      %v671 = vpop.f32.mrf.mxu0
      %v672 = vadd.f32 %v644, %v671
      %673 = vdwg.mxu0
      %v674 = vadd.f32 %v457, %v668
      %v675 = vadd.f32 %v458, %v672
      %v676 = vld [vmem:[%s234] sm:$0xff]
      %v677 = vld [vmem:[%s234 + $0x8] sm:$0xff]
      %s678 = scalar_lea.vmem %s1, 48
      %v679 = vld [vmem:[%s678] sm:$0xff]
      %v680 = vld [vmem:[%s678 + $0x8] sm:$0xff]
      %v681 = vld [vmem:[%s678 + $0x10] sm:$0xff]
      %v683 = vsel %vm198, %v676, 0
      %v686 = vsel %vm198, %v677, 0
      %688 = vmatpush.msra.mxu0 0.0
      %689 = vmatpush.msra.mxu0 0.0
      %690 = vmatpush.msra.mxu0 0.0
      %691 = vmatpush.msra.mxu0 0.0
      %692 = vmatpush.msra.mxu0 0.0
      %693 = vmatpush.msra.mxu0 0.0
      %694 = vmatpush.msra.mxu0 0.0
      %695 = vmatpush.msra.mxu0 0.0
      %696 = vmatpush.msra.mxu0 0.0
      %697 = vmatpush.msra.mxu0 0.0
      %698 = vmatpush.msra.mxu0 0.0
      %699 = vmatpush.msra.mxu0 0.0
      %700 = vmatpush.msra.mxu0 0.0
      %v701 = vand.u32 %v681, 4294901760
      %702 = vmatpush.msra.mxu0 %v701
      %v703 = vand.u32 %v680, 4294901760
      %704 = vmatpush.msra.mxu0 %v703
      %v705 = vand.u32 %v679, 4294901760
      %706 = vmatpush.msra.mxu0 %v705
      %v707 = vand.u32 %v683, 4294901760
      %v708 = vsub.f32 %v683, %v707
      %v709 = vand.u32 %v708, 4294901760
      %v710 = vsub.f32 %v708, %v709
      %v711 = vand.u32 %v710, 4294901760
      %712 = vmatmul.f32.gmra.mxu0 %v711
      %v713 = vpop.f32.mrf.mxu0
      %v714 = vadd.f32 0.0, %v713
      %v715 = vand.u32 %v686, 4294901760
      %v716 = vsub.f32 %v686, %v715
      %v717 = vand.u32 %v716, 4294901760
      %v718 = vsub.f32 %v716, %v717
      %v719 = vand.u32 %v718, 4294901760
      %720 = vmatmul.f32.gmra.mxu0 %v719
      %v721 = vpop.f32.mrf.mxu0
      %v722 = vadd.f32 0.0, %v721
      %723 = vdwg.mxu0
      %724 = vmatpush.msra.mxu0 0.0
      %725 = vmatpush.msra.mxu0 0.0
      %726 = vmatpush.msra.mxu0 0.0
      %727 = vmatpush.msra.mxu0 0.0
      %728 = vmatpush.msra.mxu0 0.0
      %729 = vmatpush.msra.mxu0 0.0
      %730 = vmatpush.msra.mxu0 0.0
      %731 = vmatpush.msra.mxu0 0.0
      %732 = vmatpush.msra.mxu0 0.0
      %733 = vmatpush.msra.mxu0 0.0
      %734 = vmatpush.msra.mxu0 0.0
      %735 = vmatpush.msra.mxu0 0.0
      %736 = vmatpush.msra.mxu0 0.0
      %v737 = vand.u32 %v681, 4294901760
      %v738 = vsub.f32 %v681, %v737
      %v739 = vand.u32 %v738, 4294901760
      %v740 = vsub.f32 %v738, %v739
      %v741 = vand.u32 %v740, 4294901760
      %742 = vmatpush.msra.mxu0 %v741
      %v743 = vand.u32 %v680, 4294901760
      %v744 = vsub.f32 %v680, %v743
      %v745 = vand.u32 %v744, 4294901760
      %v746 = vsub.f32 %v744, %v745
      %v747 = vand.u32 %v746, 4294901760
      %748 = vmatpush.msra.mxu0 %v747
      %v749 = vand.u32 %v679, 4294901760
      %v750 = vsub.f32 %v679, %v749
      %v751 = vand.u32 %v750, 4294901760
      %v752 = vsub.f32 %v750, %v751
      %v753 = vand.u32 %v752, 4294901760
      %754 = vmatpush.msra.mxu0 %v753
      %v755 = vand.u32 %v683, 4294901760
      %756 = vmatmul.f32.gmra.mxu0 %v755
      %v757 = vpop.f32.mrf.mxu0
      %v758 = vadd.f32 %v714, %v757
      %v759 = vand.u32 %v686, 4294901760
      %760 = vmatmul.f32.gmra.mxu0 %v759
      %v761 = vpop.f32.mrf.mxu0
      %v762 = vadd.f32 %v722, %v761
      %763 = vdwg.mxu0
      %764 = vmatpush.msra.mxu0 0.0
      %765 = vmatpush.msra.mxu0 0.0
      %766 = vmatpush.msra.mxu0 0.0
      %767 = vmatpush.msra.mxu0 0.0
      %768 = vmatpush.msra.mxu0 0.0
      %769 = vmatpush.msra.mxu0 0.0
      %770 = vmatpush.msra.mxu0 0.0
      %771 = vmatpush.msra.mxu0 0.0
      %772 = vmatpush.msra.mxu0 0.0
      %773 = vmatpush.msra.mxu0 0.0
      %774 = vmatpush.msra.mxu0 0.0
      %775 = vmatpush.msra.mxu0 0.0
      %776 = vmatpush.msra.mxu0 0.0
      %v777 = vand.u32 %v681, 4294901760
      %v778 = vsub.f32 %v681, %v777
      %779 = vmatpush.msra.mxu0 %v778
      %v780 = vand.u32 %v680, 4294901760
      %v781 = vsub.f32 %v680, %v780
      %782 = vmatpush.msra.mxu0 %v781
      %v783 = vand.u32 %v679, 4294901760
      %v784 = vsub.f32 %v679, %v783
      %785 = vmatpush.msra.mxu0 %v784
      %v786 = vand.u32 %v683, 4294901760
      %v787 = vsub.f32 %v683, %v786
      %788 = vmatmul.f32.gmra.mxu0 %v787
      %v789 = vpop.f32.mrf.mxu0
      %v790 = vadd.f32 %v758, %v789
      %v791 = vand.u32 %v686, 4294901760
      %v792 = vsub.f32 %v686, %v791
      %793 = vmatmul.f32.gmra.mxu0 %v792
      %v794 = vpop.f32.mrf.mxu0
      %v795 = vadd.f32 %v762, %v794
      %796 = vdwg.mxu0
      %797 = vmatpush.msra.mxu0 0.0
      %798 = vmatpush.msra.mxu0 0.0
      %799 = vmatpush.msra.mxu0 0.0
      %800 = vmatpush.msra.mxu0 0.0
      %801 = vmatpush.msra.mxu0 0.0
      %802 = vmatpush.msra.mxu0 0.0
      %803 = vmatpush.msra.mxu0 0.0
      %804 = vmatpush.msra.mxu0 0.0
      %805 = vmatpush.msra.mxu0 0.0
      %806 = vmatpush.msra.mxu0 0.0
      %807 = vmatpush.msra.mxu0 0.0
      %808 = vmatpush.msra.mxu0 0.0
      %809 = vmatpush.msra.mxu0 0.0
      %v810 = vand.u32 %v681, 4294901760
      %811 = vmatpush.msra.mxu0 %v810
      %v812 = vand.u32 %v680, 4294901760
      %813 = vmatpush.msra.mxu0 %v812
      %v814 = vand.u32 %v679, 4294901760
      %815 = vmatpush.msra.mxu0 %v814
      %v816 = vand.u32 %v683, 4294901760
      %v817 = vsub.f32 %v683, %v816
      %v818 = vand.u32 %v817, 4294901760
      %819 = vmatmul.f32.gmra.mxu0 %v818
      %v820 = vpop.f32.mrf.mxu0
      %v821 = vadd.f32 %v790, %v820
      %v822 = vand.u32 %v686, 4294901760
      %v823 = vsub.f32 %v686, %v822
      %v824 = vand.u32 %v823, 4294901760
      %825 = vmatmul.f32.gmra.mxu0 %v824
      %v826 = vpop.f32.mrf.mxu0
      %v827 = vadd.f32 %v795, %v826
      %828 = vdwg.mxu0
      %829 = vmatpush.msra.mxu0 0.0
      %830 = vmatpush.msra.mxu0 0.0
      %831 = vmatpush.msra.mxu0 0.0
      %832 = vmatpush.msra.mxu0 0.0
      %833 = vmatpush.msra.mxu0 0.0
      %834 = vmatpush.msra.mxu0 0.0
      %835 = vmatpush.msra.mxu0 0.0
      %836 = vmatpush.msra.mxu0 0.0
      %837 = vmatpush.msra.mxu0 0.0
      %838 = vmatpush.msra.mxu0 0.0
      %839 = vmatpush.msra.mxu0 0.0
      %840 = vmatpush.msra.mxu0 0.0
      %841 = vmatpush.msra.mxu0 0.0
      %v842 = vand.u32 %v681, 4294901760
      %v843 = vsub.f32 %v681, %v842
      %v844 = vand.u32 %v843, 4294901760
      %845 = vmatpush.msra.mxu0 %v844
      %v846 = vand.u32 %v680, 4294901760
      %v847 = vsub.f32 %v680, %v846
      %v848 = vand.u32 %v847, 4294901760
      %849 = vmatpush.msra.mxu0 %v848
      %v850 = vand.u32 %v679, 4294901760
      %v851 = vsub.f32 %v679, %v850
      %v852 = vand.u32 %v851, 4294901760
      %853 = vmatpush.msra.mxu0 %v852
      %v854 = vand.u32 %v683, 4294901760
      %855 = vmatmul.f32.gmra.mxu0 %v854
      %v856 = vpop.f32.mrf.mxu0
      %v857 = vadd.f32 %v821, %v856
      %v858 = vand.u32 %v686, 4294901760
      %859 = vmatmul.f32.gmra.mxu0 %v858
      %v860 = vpop.f32.mrf.mxu0
      %v861 = vadd.f32 %v827, %v860
      %862 = vdwg.mxu0
      %863 = vmatpush.msra.mxu0 0.0
      %864 = vmatpush.msra.mxu0 0.0
      %865 = vmatpush.msra.mxu0 0.0
      %866 = vmatpush.msra.mxu0 0.0
      %867 = vmatpush.msra.mxu0 0.0
      %868 = vmatpush.msra.mxu0 0.0
      %869 = vmatpush.msra.mxu0 0.0
      %870 = vmatpush.msra.mxu0 0.0
      %871 = vmatpush.msra.mxu0 0.0
      %872 = vmatpush.msra.mxu0 0.0
      %873 = vmatpush.msra.mxu0 0.0
      %874 = vmatpush.msra.mxu0 0.0
      %875 = vmatpush.msra.mxu0 0.0
      %v876 = vand.u32 %v681, 4294901760
      %877 = vmatpush.msra.mxu0 %v876
      %v878 = vand.u32 %v680, 4294901760
      %879 = vmatpush.msra.mxu0 %v878
      %v880 = vand.u32 %v679, 4294901760
      %881 = vmatpush.msra.mxu0 %v880
      %v882 = vand.u32 %v683, 4294901760
      %883 = vmatmul.f32.gmra.mxu0 %v882
      %v884 = vpop.f32.mrf.mxu0
      %v885 = vadd.f32 %v857, %v884
      %v886 = vand.u32 %v686, 4294901760
      %887 = vmatmul.f32.gmra.mxu0 %v886
      %v888 = vpop.f32.mrf.mxu0
      %v889 = vadd.f32 %v861, %v888
      %890 = vdwg.mxu0
      %v891 = vadd.f32 %v674, %v885
      %v892 = vadd.f32 %v675, %v889
      %v893 = vld [vmem:[%s240] sm:$0xff]
      %v894 = vld [vmem:[%s240 + $0x8] sm:$0xff]
      %s895 = scalar_lea.vmem %s1, 72
      %v896 = vld [vmem:[%s895] sm:$0xff]
      %v897 = vld [vmem:[%s895 + $0x8] sm:$0xff]
      %v898 = vld [vmem:[%s895 + $0x10] sm:$0xff]
      %v900 = vsel %vm198, %v893, 0
      %v903 = vsel %vm198, %v894, 0
      %905 = vmatpush.msra.mxu0 0.0
      %906 = vmatpush.msra.mxu0 0.0
      %907 = vmatpush.msra.mxu0 0.0
      %908 = vmatpush.msra.mxu0 0.0
      %909 = vmatpush.msra.mxu0 0.0
      %910 = vmatpush.msra.mxu0 0.0
      %911 = vmatpush.msra.mxu0 0.0
      %912 = vmatpush.msra.mxu0 0.0
      %913 = vmatpush.msra.mxu0 0.0
      %914 = vmatpush.msra.mxu0 0.0
      %915 = vmatpush.msra.mxu0 0.0
      %916 = vmatpush.msra.mxu0 0.0
      %917 = vmatpush.msra.mxu0 0.0
      %v918 = vand.u32 %v898, 4294901760
      %919 = vmatpush.msra.mxu0 %v918
      %v920 = vand.u32 %v897, 4294901760
      %921 = vmatpush.msra.mxu0 %v920
      %v922 = vand.u32 %v896, 4294901760
      %923 = vmatpush.msra.mxu0 %v922
      %v924 = vand.u32 %v900, 4294901760
      %v925 = vsub.f32 %v900, %v924
      %v926 = vand.u32 %v925, 4294901760
      %v927 = vsub.f32 %v925, %v926
      %v928 = vand.u32 %v927, 4294901760
      %929 = vmatmul.f32.gmra.mxu0 %v928
      %v930 = vpop.f32.mrf.mxu0
      %v931 = vadd.f32 0.0, %v930
      %v932 = vand.u32 %v903, 4294901760
      %v933 = vsub.f32 %v903, %v932
      %v934 = vand.u32 %v933, 4294901760
      %v935 = vsub.f32 %v933, %v934
      %v936 = vand.u32 %v935, 4294901760
      %937 = vmatmul.f32.gmra.mxu0 %v936
      %v938 = vpop.f32.mrf.mxu0
      %v939 = vadd.f32 0.0, %v938
      %940 = vdwg.mxu0
      %941 = vmatpush.msra.mxu0 0.0
      %942 = vmatpush.msra.mxu0 0.0
      %943 = vmatpush.msra.mxu0 0.0
      %944 = vmatpush.msra.mxu0 0.0
      %945 = vmatpush.msra.mxu0 0.0
      %946 = vmatpush.msra.mxu0 0.0
      %947 = vmatpush.msra.mxu0 0.0
      %948 = vmatpush.msra.mxu0 0.0
      %949 = vmatpush.msra.mxu0 0.0
      %950 = vmatpush.msra.mxu0 0.0
      %951 = vmatpush.msra.mxu0 0.0
      %952 = vmatpush.msra.mxu0 0.0
      %953 = vmatpush.msra.mxu0 0.0
      %v954 = vand.u32 %v898, 4294901760
      %v955 = vsub.f32 %v898, %v954
      %v956 = vand.u32 %v955, 4294901760
      %v957 = vsub.f32 %v955, %v956
      %v958 = vand.u32 %v957, 4294901760
      %959 = vmatpush.msra.mxu0 %v958
      %v960 = vand.u32 %v897, 4294901760
      %v961 = vsub.f32 %v897, %v960
      %v962 = vand.u32 %v961, 4294901760
      %v963 = vsub.f32 %v961, %v962
      %v964 = vand.u32 %v963, 4294901760
      %965 = vmatpush.msra.mxu0 %v964
      %v966 = vand.u32 %v896, 4294901760
      %v967 = vsub.f32 %v896, %v966
      %v968 = vand.u32 %v967, 4294901760
      %v969 = vsub.f32 %v967, %v968
      %v970 = vand.u32 %v969, 4294901760
      %971 = vmatpush.msra.mxu0 %v970
      %v972 = vand.u32 %v900, 4294901760
      %973 = vmatmul.f32.gmra.mxu0 %v972
      %v974 = vpop.f32.mrf.mxu0
      %v975 = vadd.f32 %v931, %v974
      %v976 = vand.u32 %v903, 4294901760
      %977 = vmatmul.f32.gmra.mxu0 %v976
      %v978 = vpop.f32.mrf.mxu0
      %v979 = vadd.f32 %v939, %v978
      %980 = vdwg.mxu0
      %981 = vmatpush.msra.mxu0 0.0
      %982 = vmatpush.msra.mxu0 0.0
      %983 = vmatpush.msra.mxu0 0.0
      %984 = vmatpush.msra.mxu0 0.0
      %985 = vmatpush.msra.mxu0 0.0
      %986 = vmatpush.msra.mxu0 0.0
      %987 = vmatpush.msra.mxu0 0.0
      %988 = vmatpush.msra.mxu0 0.0
      %989 = vmatpush.msra.mxu0 0.0
      %990 = vmatpush.msra.mxu0 0.0
      %991 = vmatpush.msra.mxu0 0.0
      %992 = vmatpush.msra.mxu0 0.0
      %993 = vmatpush.msra.mxu0 0.0
      %v994 = vand.u32 %v898, 4294901760
      %v995 = vsub.f32 %v898, %v994
      %996 = vmatpush.msra.mxu0 %v995
      %v997 = vand.u32 %v897, 4294901760
      %v998 = vsub.f32 %v897, %v997
      %999 = vmatpush.msra.mxu0 %v998
      %v1000 = vand.u32 %v896, 4294901760
      %v1001 = vsub.f32 %v896, %v1000
      %1002 = vmatpush.msra.mxu0 %v1001
      %v1003 = vand.u32 %v900, 4294901760
      %v1004 = vsub.f32 %v900, %v1003
      %1005 = vmatmul.f32.gmra.mxu0 %v1004
      %v1006 = vpop.f32.mrf.mxu0
      %v1007 = vadd.f32 %v975, %v1006
      %v1008 = vand.u32 %v903, 4294901760
      %v1009 = vsub.f32 %v903, %v1008
      %1010 = vmatmul.f32.gmra.mxu0 %v1009
      %v1011 = vpop.f32.mrf.mxu0
      %v1012 = vadd.f32 %v979, %v1011
      %1013 = vdwg.mxu0
      %1014 = vmatpush.msra.mxu0 0.0
      %1015 = vmatpush.msra.mxu0 0.0
      %1016 = vmatpush.msra.mxu0 0.0
      %1017 = vmatpush.msra.mxu0 0.0
      %1018 = vmatpush.msra.mxu0 0.0
      %1019 = vmatpush.msra.mxu0 0.0
      %1020 = vmatpush.msra.mxu0 0.0
      %1021 = vmatpush.msra.mxu0 0.0
      %1022 = vmatpush.msra.mxu0 0.0
      %1023 = vmatpush.msra.mxu0 0.0
      %1024 = vmatpush.msra.mxu0 0.0
      %1025 = vmatpush.msra.mxu0 0.0
      %1026 = vmatpush.msra.mxu0 0.0
      %v1027 = vand.u32 %v898, 4294901760
      %1028 = vmatpush.msra.mxu0 %v1027
      %v1029 = vand.u32 %v897, 4294901760
      %1030 = vmatpush.msra.mxu0 %v1029
      %v1031 = vand.u32 %v896, 4294901760
      %1032 = vmatpush.msra.mxu0 %v1031
      %v1033 = vand.u32 %v900, 4294901760
      %v1034 = vsub.f32 %v900, %v1033
      %v1035 = vand.u32 %v1034, 4294901760
      %1036 = vmatmul.f32.gmra.mxu0 %v1035
      %v1037 = vpop.f32.mrf.mxu0
      %v1038 = vadd.f32 %v1007, %v1037
      %v1039 = vand.u32 %v903, 4294901760
      %v1040 = vsub.f32 %v903, %v1039
      %v1041 = vand.u32 %v1040, 4294901760
      %1042 = vmatmul.f32.gmra.mxu0 %v1041
      %v1043 = vpop.f32.mrf.mxu0
      %v1044 = vadd.f32 %v1012, %v1043
      %1045 = vdwg.mxu0
      %1046 = vmatpush.msra.mxu0 0.0
      %1047 = vmatpush.msra.mxu0 0.0
      %1048 = vmatpush.msra.mxu0 0.0
      %1049 = vmatpush.msra.mxu0 0.0
      %1050 = vmatpush.msra.mxu0 0.0
      %1051 = vmatpush.msra.mxu0 0.0
      %1052 = vmatpush.msra.mxu0 0.0
      %1053 = vmatpush.msra.mxu0 0.0
      %1054 = vmatpush.msra.mxu0 0.0
      %1055 = vmatpush.msra.mxu0 0.0
      %1056 = vmatpush.msra.mxu0 0.0
      %1057 = vmatpush.msra.mxu0 0.0
      %1058 = vmatpush.msra.mxu0 0.0
      %v1059 = vand.u32 %v898, 4294901760
      %v1060 = vsub.f32 %v898, %v1059
      %v1061 = vand.u32 %v1060, 4294901760
      %1062 = vmatpush.msra.mxu0 %v1061
      %v1063 = vand.u32 %v897, 4294901760
      %v1064 = vsub.f32 %v897, %v1063
      %v1065 = vand.u32 %v1064, 4294901760
      %1066 = vmatpush.msra.mxu0 %v1065
      %v1067 = vand.u32 %v896, 4294901760
      %v1068 = vsub.f32 %v896, %v1067
      %v1069 = vand.u32 %v1068, 4294901760
      %1070 = vmatpush.msra.mxu0 %v1069
      %v1071 = vand.u32 %v900, 4294901760
      %1072 = vmatmul.f32.gmra.mxu0 %v1071
      %v1073 = vpop.f32.mrf.mxu0
      %v1074 = vadd.f32 %v1038, %v1073
      %v1075 = vand.u32 %v903, 4294901760
      %1076 = vmatmul.f32.gmra.mxu0 %v1075
      %v1077 = vpop.f32.mrf.mxu0
      %v1078 = vadd.f32 %v1044, %v1077
      %1079 = vdwg.mxu0
      %1080 = vmatpush.msra.mxu0 0.0
      %1081 = vmatpush.msra.mxu0 0.0
      %1082 = vmatpush.msra.mxu0 0.0
      %1083 = vmatpush.msra.mxu0 0.0
      %1084 = vmatpush.msra.mxu0 0.0
      %1085 = vmatpush.msra.mxu0 0.0
      %1086 = vmatpush.msra.mxu0 0.0
      %1087 = vmatpush.msra.mxu0 0.0
      %1088 = vmatpush.msra.mxu0 0.0
      %1089 = vmatpush.msra.mxu0 0.0
      %1090 = vmatpush.msra.mxu0 0.0
      %1091 = vmatpush.msra.mxu0 0.0
      %1092 = vmatpush.msra.mxu0 0.0
      %v1093 = vand.u32 %v898, 4294901760
      %1094 = vmatpush.msra.mxu0 %v1093
      %v1095 = vand.u32 %v897, 4294901760
      %1096 = vmatpush.msra.mxu0 %v1095
      %v1097 = vand.u32 %v896, 4294901760
      %1098 = vmatpush.msra.mxu0 %v1097
      %v1099 = vand.u32 %v900, 4294901760
      %1100 = vmatmul.f32.gmra.mxu0 %v1099
      %v1101 = vpop.f32.mrf.mxu0
      %v1102 = vadd.f32 %v1074, %v1101
      %v1103 = vand.u32 %v903, 4294901760
      %1104 = vmatmul.f32.gmra.mxu0 %v1103
      %v1105 = vpop.f32.mrf.mxu0
      %v1106 = vadd.f32 %v1078, %v1105
      %1107 = vdwg.mxu0
      %v1108 = vadd.f32 %v891, %v1102
      %v1109 = vadd.f32 %v892, %v1106
      %s1110 = scalar_lea.vmem %s1, 96
      %v1111 = vld [vmem:[%s1110] sm:$0xff]
      %v1112 = vld [vmem:[%s1110 + $0x8] sm:$0xff]
      %v1113 = vld [vmem:[%s1110 + $0x10] sm:$0xff]
      %1114 = vmatpush.msra.mxu0 0.0
      %1115 = vmatpush.msra.mxu0 0.0
      %1116 = vmatpush.msra.mxu0 0.0
      %1117 = vmatpush.msra.mxu0 0.0
      %1118 = vmatpush.msra.mxu0 0.0
      %1119 = vmatpush.msra.mxu0 0.0
      %1120 = vmatpush.msra.mxu0 0.0
      %1121 = vmatpush.msra.mxu0 0.0
      %1122 = vmatpush.msra.mxu0 0.0
      %1123 = vmatpush.msra.mxu0 0.0
      %1124 = vmatpush.msra.mxu0 0.0
      %1125 = vmatpush.msra.mxu0 0.0
      %1126 = vmatpush.msra.mxu0 0.0
      %v1127 = vand.u32 %v1113, 4294901760
      %1128 = vmatpush.msra.mxu0 %v1127
      %v1129 = vand.u32 %v1112, 4294901760
      %1130 = vmatpush.msra.mxu0 %v1129
      %v1131 = vand.u32 %v1111, 4294901760
      %1132 = vmatpush.msra.mxu0 %v1131
      %v1133 = vand.u32 %v249, 4294901760
      %v1134 = vsub.f32 %v249, %v1133
      %v1135 = vand.u32 %v1134, 4294901760
      %v1136 = vsub.f32 %v1134, %v1135
      %v1137 = vand.u32 %v1136, 4294901760
      %1138 = vmatmul.f32.gmra.mxu0 %v1137
      %v1139 = vpop.f32.mrf.mxu0
      %v1140 = vadd.f32 0.0, %v1139
      %v1141 = vand.u32 %v252, 4294901760
      %v1142 = vsub.f32 %v252, %v1141
      %v1143 = vand.u32 %v1142, 4294901760
      %v1144 = vsub.f32 %v1142, %v1143
      %v1145 = vand.u32 %v1144, 4294901760
      %1146 = vmatmul.f32.gmra.mxu0 %v1145
      %v1147 = vpop.f32.mrf.mxu0
      %v1148 = vadd.f32 0.0, %v1147
      %1149 = vdwg.mxu0
      %1150 = vmatpush.msra.mxu0 0.0
      %1151 = vmatpush.msra.mxu0 0.0
      %1152 = vmatpush.msra.mxu0 0.0
      %1153 = vmatpush.msra.mxu0 0.0
      %1154 = vmatpush.msra.mxu0 0.0
      %1155 = vmatpush.msra.mxu0 0.0
      %1156 = vmatpush.msra.mxu0 0.0
      %1157 = vmatpush.msra.mxu0 0.0
      %1158 = vmatpush.msra.mxu0 0.0
      %1159 = vmatpush.msra.mxu0 0.0
      %1160 = vmatpush.msra.mxu0 0.0
      %1161 = vmatpush.msra.mxu0 0.0
      %1162 = vmatpush.msra.mxu0 0.0
      %v1163 = vand.u32 %v1113, 4294901760
      %v1164 = vsub.f32 %v1113, %v1163
      %v1165 = vand.u32 %v1164, 4294901760
      %v1166 = vsub.f32 %v1164, %v1165
      %v1167 = vand.u32 %v1166, 4294901760
      %1168 = vmatpush.msra.mxu0 %v1167
      %v1169 = vand.u32 %v1112, 4294901760
      %v1170 = vsub.f32 %v1112, %v1169
      %v1171 = vand.u32 %v1170, 4294901760
      %v1172 = vsub.f32 %v1170, %v1171
      %v1173 = vand.u32 %v1172, 4294901760
      %1174 = vmatpush.msra.mxu0 %v1173
      %v1175 = vand.u32 %v1111, 4294901760
      %v1176 = vsub.f32 %v1111, %v1175
      %v1177 = vand.u32 %v1176, 4294901760
      %v1178 = vsub.f32 %v1176, %v1177
      %v1179 = vand.u32 %v1178, 4294901760
      %1180 = vmatpush.msra.mxu0 %v1179
      %v1181 = vand.u32 %v249, 4294901760
      %1182 = vmatmul.f32.gmra.mxu0 %v1181
      %v1183 = vpop.f32.mrf.mxu0
      %v1184 = vadd.f32 %v1140, %v1183
      %v1185 = vand.u32 %v252, 4294901760
      %1186 = vmatmul.f32.gmra.mxu0 %v1185
      %v1187 = vpop.f32.mrf.mxu0
      %v1188 = vadd.f32 %v1148, %v1187
      %1189 = vdwg.mxu0
      %1190 = vmatpush.msra.mxu0 0.0
      %1191 = vmatpush.msra.mxu0 0.0
      %1192 = vmatpush.msra.mxu0 0.0
      %1193 = vmatpush.msra.mxu0 0.0
      %1194 = vmatpush.msra.mxu0 0.0
      %1195 = vmatpush.msra.mxu0 0.0
      %1196 = vmatpush.msra.mxu0 0.0
      %1197 = vmatpush.msra.mxu0 0.0
      %1198 = vmatpush.msra.mxu0 0.0
      %1199 = vmatpush.msra.mxu0 0.0
      %1200 = vmatpush.msra.mxu0 0.0
      %1201 = vmatpush.msra.mxu0 0.0
      %1202 = vmatpush.msra.mxu0 0.0
      %v1203 = vand.u32 %v1113, 4294901760
      %v1204 = vsub.f32 %v1113, %v1203
      %1205 = vmatpush.msra.mxu0 %v1204
      %v1206 = vand.u32 %v1112, 4294901760
      %v1207 = vsub.f32 %v1112, %v1206
      %1208 = vmatpush.msra.mxu0 %v1207
      %v1209 = vand.u32 %v1111, 4294901760
      %v1210 = vsub.f32 %v1111, %v1209
      %1211 = vmatpush.msra.mxu0 %v1210
      %v1212 = vand.u32 %v249, 4294901760
      %v1213 = vsub.f32 %v249, %v1212
      %1214 = vmatmul.f32.gmra.mxu0 %v1213
      %v1215 = vpop.f32.mrf.mxu0
      %v1216 = vadd.f32 %v1184, %v1215
      %v1217 = vand.u32 %v252, 4294901760
      %v1218 = vsub.f32 %v252, %v1217
      %1219 = vmatmul.f32.gmra.mxu0 %v1218
      %v1220 = vpop.f32.mrf.mxu0
      %v1221 = vadd.f32 %v1188, %v1220
      %1222 = vdwg.mxu0
      %1223 = vmatpush.msra.mxu0 0.0
      %1224 = vmatpush.msra.mxu0 0.0
      %1225 = vmatpush.msra.mxu0 0.0
      %1226 = vmatpush.msra.mxu0 0.0
      %1227 = vmatpush.msra.mxu0 0.0
      %1228 = vmatpush.msra.mxu0 0.0
      %1229 = vmatpush.msra.mxu0 0.0
      %1230 = vmatpush.msra.mxu0 0.0
      %1231 = vmatpush.msra.mxu0 0.0
      %1232 = vmatpush.msra.mxu0 0.0
      %1233 = vmatpush.msra.mxu0 0.0
      %1234 = vmatpush.msra.mxu0 0.0
      %1235 = vmatpush.msra.mxu0 0.0
      %v1236 = vand.u32 %v1113, 4294901760
      %1237 = vmatpush.msra.mxu0 %v1236
      %v1238 = vand.u32 %v1112, 4294901760
      %1239 = vmatpush.msra.mxu0 %v1238
      %v1240 = vand.u32 %v1111, 4294901760
      %1241 = vmatpush.msra.mxu0 %v1240
      %v1242 = vand.u32 %v249, 4294901760
      %v1243 = vsub.f32 %v249, %v1242
      %v1244 = vand.u32 %v1243, 4294901760
      %1245 = vmatmul.f32.gmra.mxu0 %v1244
      %v1246 = vpop.f32.mrf.mxu0
      %v1247 = vadd.f32 %v1216, %v1246
      %v1248 = vand.u32 %v252, 4294901760
      %v1249 = vsub.f32 %v252, %v1248
      %v1250 = vand.u32 %v1249, 4294901760
      %1251 = vmatmul.f32.gmra.mxu0 %v1250
      %v1252 = vpop.f32.mrf.mxu0
      %v1253 = vadd.f32 %v1221, %v1252
      %1254 = vdwg.mxu0
      %1255 = vmatpush.msra.mxu0 0.0
      %1256 = vmatpush.msra.mxu0 0.0
      %1257 = vmatpush.msra.mxu0 0.0
      %1258 = vmatpush.msra.mxu0 0.0
      %1259 = vmatpush.msra.mxu0 0.0
      %1260 = vmatpush.msra.mxu0 0.0
      %1261 = vmatpush.msra.mxu0 0.0
      %1262 = vmatpush.msra.mxu0 0.0
      %1263 = vmatpush.msra.mxu0 0.0
      %1264 = vmatpush.msra.mxu0 0.0
      %1265 = vmatpush.msra.mxu0 0.0
      %1266 = vmatpush.msra.mxu0 0.0
      %1267 = vmatpush.msra.mxu0 0.0
      %v1268 = vand.u32 %v1113, 4294901760
      %v1269 = vsub.f32 %v1113, %v1268
      %v1270 = vand.u32 %v1269, 4294901760
      %1271 = vmatpush.msra.mxu0 %v1270
      %v1272 = vand.u32 %v1112, 4294901760
      %v1273 = vsub.f32 %v1112, %v1272
      %v1274 = vand.u32 %v1273, 4294901760
      %1275 = vmatpush.msra.mxu0 %v1274
      %v1276 = vand.u32 %v1111, 4294901760
      %v1277 = vsub.f32 %v1111, %v1276
      %v1278 = vand.u32 %v1277, 4294901760
      %1279 = vmatpush.msra.mxu0 %v1278
      %v1280 = vand.u32 %v249, 4294901760
      %1281 = vmatmul.f32.gmra.mxu0 %v1280
      %v1282 = vpop.f32.mrf.mxu0
      %v1283 = vadd.f32 %v1247, %v1282
      %v1284 = vand.u32 %v252, 4294901760
      %1285 = vmatmul.f32.gmra.mxu0 %v1284
      %v1286 = vpop.f32.mrf.mxu0
      %v1287 = vadd.f32 %v1253, %v1286
      %1288 = vdwg.mxu0
      %1289 = vmatpush.msra.mxu0 0.0
      %1290 = vmatpush.msra.mxu0 0.0
      %1291 = vmatpush.msra.mxu0 0.0
      %1292 = vmatpush.msra.mxu0 0.0
      %1293 = vmatpush.msra.mxu0 0.0
      %1294 = vmatpush.msra.mxu0 0.0
      %1295 = vmatpush.msra.mxu0 0.0
      %1296 = vmatpush.msra.mxu0 0.0
      %1297 = vmatpush.msra.mxu0 0.0
      %1298 = vmatpush.msra.mxu0 0.0
      %1299 = vmatpush.msra.mxu0 0.0
      %1300 = vmatpush.msra.mxu0 0.0
      %1301 = vmatpush.msra.mxu0 0.0
      %v1302 = vand.u32 %v1113, 4294901760
      %1303 = vmatpush.msra.mxu0 %v1302
      %v1304 = vand.u32 %v1112, 4294901760
      %1305 = vmatpush.msra.mxu0 %v1304
      %v1306 = vand.u32 %v1111, 4294901760
      %1307 = vmatpush.msra.mxu0 %v1306
      %v1308 = vand.u32 %v249, 4294901760
      %1309 = vmatmul.f32.gmra.mxu0 %v1308
      %v1310 = vpop.f32.mrf.mxu0
      %v1311 = vadd.f32 %v1283, %v1310
      %v1312 = vand.u32 %v252, 4294901760
      %1313 = vmatmul.f32.gmra.mxu0 %v1312
      %v1314 = vpop.f32.mrf.mxu0
      %v1315 = vadd.f32 %v1287, %v1314
      %1316 = vdwg.mxu0
      %v1317 = vadd.f32 %v214, %v1311
      %v1318 = vadd.f32 %v214, %v1315
      %s1319 = scalar_lea.vmem %s1, 120
      %v1320 = vld [vmem:[%s1319] sm:$0xff]
      %v1321 = vld [vmem:[%s1319 + $0x8] sm:$0xff]
      %v1322 = vld [vmem:[%s1319 + $0x10] sm:$0xff]
      %1323 = vmatpush.msra.mxu0 0.0
      %1324 = vmatpush.msra.mxu0 0.0
      %1325 = vmatpush.msra.mxu0 0.0
      %1326 = vmatpush.msra.mxu0 0.0
      %1327 = vmatpush.msra.mxu0 0.0
      %1328 = vmatpush.msra.mxu0 0.0
      %1329 = vmatpush.msra.mxu0 0.0
      %1330 = vmatpush.msra.mxu0 0.0
      %1331 = vmatpush.msra.mxu0 0.0
      %1332 = vmatpush.msra.mxu0 0.0
      %1333 = vmatpush.msra.mxu0 0.0
      %1334 = vmatpush.msra.mxu0 0.0
      %1335 = vmatpush.msra.mxu0 0.0
      %v1336 = vand.u32 %v1322, 4294901760
      %1337 = vmatpush.msra.mxu0 %v1336
      %v1338 = vand.u32 %v1321, 4294901760
      %1339 = vmatpush.msra.mxu0 %v1338
      %v1340 = vand.u32 %v1320, 4294901760
      %1341 = vmatpush.msra.mxu0 %v1340
      %v1342 = vand.u32 %v466, 4294901760
      %v1343 = vsub.f32 %v466, %v1342
      %v1344 = vand.u32 %v1343, 4294901760
      %v1345 = vsub.f32 %v1343, %v1344
      %v1346 = vand.u32 %v1345, 4294901760
      %1347 = vmatmul.f32.gmra.mxu0 %v1346
      %v1348 = vpop.f32.mrf.mxu0
      %v1349 = vadd.f32 0.0, %v1348
      %v1350 = vand.u32 %v469, 4294901760
      %v1351 = vsub.f32 %v469, %v1350
      %v1352 = vand.u32 %v1351, 4294901760
      %v1353 = vsub.f32 %v1351, %v1352
      %v1354 = vand.u32 %v1353, 4294901760
      %1355 = vmatmul.f32.gmra.mxu0 %v1354
      %v1356 = vpop.f32.mrf.mxu0
      %v1357 = vadd.f32 0.0, %v1356
      %1358 = vdwg.mxu0
      %1359 = vmatpush.msra.mxu0 0.0
      %1360 = vmatpush.msra.mxu0 0.0
      %1361 = vmatpush.msra.mxu0 0.0
      %1362 = vmatpush.msra.mxu0 0.0
      %1363 = vmatpush.msra.mxu0 0.0
      %1364 = vmatpush.msra.mxu0 0.0
      %1365 = vmatpush.msra.mxu0 0.0
      %1366 = vmatpush.msra.mxu0 0.0
      %1367 = vmatpush.msra.mxu0 0.0
      %1368 = vmatpush.msra.mxu0 0.0
      %1369 = vmatpush.msra.mxu0 0.0
      %1370 = vmatpush.msra.mxu0 0.0
      %1371 = vmatpush.msra.mxu0 0.0
      %v1372 = vand.u32 %v1322, 4294901760
      %v1373 = vsub.f32 %v1322, %v1372
      %v1374 = vand.u32 %v1373, 4294901760
      %v1375 = vsub.f32 %v1373, %v1374
      %v1376 = vand.u32 %v1375, 4294901760
      %1377 = vmatpush.msra.mxu0 %v1376
      %v1378 = vand.u32 %v1321, 4294901760
      %v1379 = vsub.f32 %v1321, %v1378
      %v1380 = vand.u32 %v1379, 4294901760
      %v1381 = vsub.f32 %v1379, %v1380
      %v1382 = vand.u32 %v1381, 4294901760
      %1383 = vmatpush.msra.mxu0 %v1382
      %v1384 = vand.u32 %v1320, 4294901760
      %v1385 = vsub.f32 %v1320, %v1384
      %v1386 = vand.u32 %v1385, 4294901760
      %v1387 = vsub.f32 %v1385, %v1386
      %v1388 = vand.u32 %v1387, 4294901760
      %1389 = vmatpush.msra.mxu0 %v1388
      %v1390 = vand.u32 %v466, 4294901760
      %1391 = vmatmul.f32.gmra.mxu0 %v1390
      %v1392 = vpop.f32.mrf.mxu0
      %v1393 = vadd.f32 %v1349, %v1392
      %v1394 = vand.u32 %v469, 4294901760
      %1395 = vmatmul.f32.gmra.mxu0 %v1394
      %v1396 = vpop.f32.mrf.mxu0
      %v1397 = vadd.f32 %v1357, %v1396
      %1398 = vdwg.mxu0
      %1399 = vmatpush.msra.mxu0 0.0
      %1400 = vmatpush.msra.mxu0 0.0
      %1401 = vmatpush.msra.mxu0 0.0
      %1402 = vmatpush.msra.mxu0 0.0
      %1403 = vmatpush.msra.mxu0 0.0
      %1404 = vmatpush.msra.mxu0 0.0
      %1405 = vmatpush.msra.mxu0 0.0
      %1406 = vmatpush.msra.mxu0 0.0
      %1407 = vmatpush.msra.mxu0 0.0
      %1408 = vmatpush.msra.mxu0 0.0
      %1409 = vmatpush.msra.mxu0 0.0
      %1410 = vmatpush.msra.mxu0 0.0
      %1411 = vmatpush.msra.mxu0 0.0
      %v1412 = vand.u32 %v1322, 4294901760
      %v1413 = vsub.f32 %v1322, %v1412
      %1414 = vmatpush.msra.mxu0 %v1413
      %v1415 = vand.u32 %v1321, 4294901760
      %v1416 = vsub.f32 %v1321, %v1415
      %1417 = vmatpush.msra.mxu0 %v1416
      %v1418 = vand.u32 %v1320, 4294901760
      %v1419 = vsub.f32 %v1320, %v1418
      %1420 = vmatpush.msra.mxu0 %v1419
      %v1421 = vand.u32 %v466, 4294901760
      %v1422 = vsub.f32 %v466, %v1421
      %1423 = vmatmul.f32.gmra.mxu0 %v1422
      %v1424 = vpop.f32.mrf.mxu0
      %v1425 = vadd.f32 %v1393, %v1424
      %v1426 = vand.u32 %v469, 4294901760
      %v1427 = vsub.f32 %v469, %v1426
      %1428 = vmatmul.f32.gmra.mxu0 %v1427
      %v1429 = vpop.f32.mrf.mxu0
      %v1430 = vadd.f32 %v1397, %v1429
      %1431 = vdwg.mxu0
      %1432 = vmatpush.msra.mxu0 0.0
      %1433 = vmatpush.msra.mxu0 0.0
      %1434 = vmatpush.msra.mxu0 0.0
      %1435 = vmatpush.msra.mxu0 0.0
      %1436 = vmatpush.msra.mxu0 0.0
      %1437 = vmatpush.msra.mxu0 0.0
      %1438 = vmatpush.msra.mxu0 0.0
      %1439 = vmatpush.msra.mxu0 0.0
      %1440 = vmatpush.msra.mxu0 0.0
      %1441 = vmatpush.msra.mxu0 0.0
      %1442 = vmatpush.msra.mxu0 0.0
      %1443 = vmatpush.msra.mxu0 0.0
      %1444 = vmatpush.msra.mxu0 0.0
      %v1445 = vand.u32 %v1322, 4294901760
      %1446 = vmatpush.msra.mxu0 %v1445
      %v1447 = vand.u32 %v1321, 4294901760
      %1448 = vmatpush.msra.mxu0 %v1447
      %v1449 = vand.u32 %v1320, 4294901760
      %1450 = vmatpush.msra.mxu0 %v1449
      %v1451 = vand.u32 %v466, 4294901760
      %v1452 = vsub.f32 %v466, %v1451
      %v1453 = vand.u32 %v1452, 4294901760
      %1454 = vmatmul.f32.gmra.mxu0 %v1453
      %v1455 = vpop.f32.mrf.mxu0
      %v1456 = vadd.f32 %v1425, %v1455
      %v1457 = vand.u32 %v469, 4294901760
      %v1458 = vsub.f32 %v469, %v1457
      %v1459 = vand.u32 %v1458, 4294901760
      %1460 = vmatmul.f32.gmra.mxu0 %v1459
      %v1461 = vpop.f32.mrf.mxu0
      %v1462 = vadd.f32 %v1430, %v1461
      %1463 = vdwg.mxu0
      %1464 = vmatpush.msra.mxu0 0.0
      %1465 = vmatpush.msra.mxu0 0.0
      %1466 = vmatpush.msra.mxu0 0.0
      %1467 = vmatpush.msra.mxu0 0.0
      %1468 = vmatpush.msra.mxu0 0.0
      %1469 = vmatpush.msra.mxu0 0.0
      %1470 = vmatpush.msra.mxu0 0.0
      %1471 = vmatpush.msra.mxu0 0.0
      %1472 = vmatpush.msra.mxu0 0.0
      %1473 = vmatpush.msra.mxu0 0.0
      %1474 = vmatpush.msra.mxu0 0.0
      %1475 = vmatpush.msra.mxu0 0.0
      %1476 = vmatpush.msra.mxu0 0.0
      %v1477 = vand.u32 %v1322, 4294901760
      %v1478 = vsub.f32 %v1322, %v1477
      %v1479 = vand.u32 %v1478, 4294901760
      %1480 = vmatpush.msra.mxu0 %v1479
      %v1481 = vand.u32 %v1321, 4294901760
      %v1482 = vsub.f32 %v1321, %v1481
      %v1483 = vand.u32 %v1482, 4294901760
      %1484 = vmatpush.msra.mxu0 %v1483
      %v1485 = vand.u32 %v1320, 4294901760
      %v1486 = vsub.f32 %v1320, %v1485
      %v1487 = vand.u32 %v1486, 4294901760
      %1488 = vmatpush.msra.mxu0 %v1487
      %v1489 = vand.u32 %v466, 4294901760
      %1490 = vmatmul.f32.gmra.mxu0 %v1489
      %v1491 = vpop.f32.mrf.mxu0
      %v1492 = vadd.f32 %v1456, %v1491
      %v1493 = vand.u32 %v469, 4294901760
      %1494 = vmatmul.f32.gmra.mxu0 %v1493
      %v1495 = vpop.f32.mrf.mxu0
      %v1496 = vadd.f32 %v1462, %v1495
      %1497 = vdwg.mxu0
      %1498 = vmatpush.msra.mxu0 0.0
      %1499 = vmatpush.msra.mxu0 0.0
      %1500 = vmatpush.msra.mxu0 0.0
      %1501 = vmatpush.msra.mxu0 0.0
      %1502 = vmatpush.msra.mxu0 0.0
      %1503 = vmatpush.msra.mxu0 0.0
      %1504 = vmatpush.msra.mxu0 0.0
      %1505 = vmatpush.msra.mxu0 0.0
      %1506 = vmatpush.msra.mxu0 0.0
      %1507 = vmatpush.msra.mxu0 0.0
      %1508 = vmatpush.msra.mxu0 0.0
      %1509 = vmatpush.msra.mxu0 0.0
      %1510 = vmatpush.msra.mxu0 0.0
      %v1511 = vand.u32 %v1322, 4294901760
      %1512 = vmatpush.msra.mxu0 %v1511
      %v1513 = vand.u32 %v1321, 4294901760
      %1514 = vmatpush.msra.mxu0 %v1513
      %v1515 = vand.u32 %v1320, 4294901760
      %1516 = vmatpush.msra.mxu0 %v1515
      %v1517 = vand.u32 %v466, 4294901760
      %1518 = vmatmul.f32.gmra.mxu0 %v1517
      %v1519 = vpop.f32.mrf.mxu0
      %v1520 = vadd.f32 %v1492, %v1519
      %v1521 = vand.u32 %v469, 4294901760
      %1522 = vmatmul.f32.gmra.mxu0 %v1521
      %v1523 = vpop.f32.mrf.mxu0
      %v1524 = vadd.f32 %v1496, %v1523
      %1525 = vdwg.mxu0
      %v1526 = vadd.f32 %v1317, %v1520
      %v1527 = vadd.f32 %v1318, %v1524
      %s1528 = scalar_lea.vmem %s1, 144
      %v1529 = vld [vmem:[%s1528] sm:$0xff]
      %v1530 = vld [vmem:[%s1528 + $0x8] sm:$0xff]
      %v1531 = vld [vmem:[%s1528 + $0x10] sm:$0xff]
      %1532 = vmatpush.msra.mxu0 0.0
      %1533 = vmatpush.msra.mxu0 0.0
      %1534 = vmatpush.msra.mxu0 0.0
      %1535 = vmatpush.msra.mxu0 0.0
      %1536 = vmatpush.msra.mxu0 0.0
      %1537 = vmatpush.msra.mxu0 0.0
      %1538 = vmatpush.msra.mxu0 0.0
      %1539 = vmatpush.msra.mxu0 0.0
      %1540 = vmatpush.msra.mxu0 0.0
      %1541 = vmatpush.msra.mxu0 0.0
      %1542 = vmatpush.msra.mxu0 0.0
      %1543 = vmatpush.msra.mxu0 0.0
      %1544 = vmatpush.msra.mxu0 0.0
      %v1545 = vand.u32 %v1531, 4294901760
      %1546 = vmatpush.msra.mxu0 %v1545
      %v1547 = vand.u32 %v1530, 4294901760
      %1548 = vmatpush.msra.mxu0 %v1547
      %v1549 = vand.u32 %v1529, 4294901760
      %1550 = vmatpush.msra.mxu0 %v1549
      %v1551 = vand.u32 %v683, 4294901760
      %v1552 = vsub.f32 %v683, %v1551
      %v1553 = vand.u32 %v1552, 4294901760
      %v1554 = vsub.f32 %v1552, %v1553
      %v1555 = vand.u32 %v1554, 4294901760
      %1556 = vmatmul.f32.gmra.mxu0 %v1555
      %v1557 = vpop.f32.mrf.mxu0
      %v1558 = vadd.f32 0.0, %v1557
      %v1559 = vand.u32 %v686, 4294901760
      %v1560 = vsub.f32 %v686, %v1559
      %v1561 = vand.u32 %v1560, 4294901760
      %v1562 = vsub.f32 %v1560, %v1561
      %v1563 = vand.u32 %v1562, 4294901760
      %1564 = vmatmul.f32.gmra.mxu0 %v1563
      %v1565 = vpop.f32.mrf.mxu0
      %v1566 = vadd.f32 0.0, %v1565
      %1567 = vdwg.mxu0
      %1568 = vmatpush.msra.mxu0 0.0
      %1569 = vmatpush.msra.mxu0 0.0
      %1570 = vmatpush.msra.mxu0 0.0
      %1571 = vmatpush.msra.mxu0 0.0
      %1572 = vmatpush.msra.mxu0 0.0
      %1573 = vmatpush.msra.mxu0 0.0
      %1574 = vmatpush.msra.mxu0 0.0
      %1575 = vmatpush.msra.mxu0 0.0
      %1576 = vmatpush.msra.mxu0 0.0
      %1577 = vmatpush.msra.mxu0 0.0
      %1578 = vmatpush.msra.mxu0 0.0
      %1579 = vmatpush.msra.mxu0 0.0
      %1580 = vmatpush.msra.mxu0 0.0
      %v1581 = vand.u32 %v1531, 4294901760
      %v1582 = vsub.f32 %v1531, %v1581
      %v1583 = vand.u32 %v1582, 4294901760
      %v1584 = vsub.f32 %v1582, %v1583
      %v1585 = vand.u32 %v1584, 4294901760
      %1586 = vmatpush.msra.mxu0 %v1585
      %v1587 = vand.u32 %v1530, 4294901760
      %v1588 = vsub.f32 %v1530, %v1587
      %v1589 = vand.u32 %v1588, 4294901760
      %v1590 = vsub.f32 %v1588, %v1589
      %v1591 = vand.u32 %v1590, 4294901760
      %1592 = vmatpush.msra.mxu0 %v1591
      %v1593 = vand.u32 %v1529, 4294901760
      %v1594 = vsub.f32 %v1529, %v1593
      %v1595 = vand.u32 %v1594, 4294901760
      %v1596 = vsub.f32 %v1594, %v1595
      %v1597 = vand.u32 %v1596, 4294901760
      %1598 = vmatpush.msra.mxu0 %v1597
      %v1599 = vand.u32 %v683, 4294901760
      %1600 = vmatmul.f32.gmra.mxu0 %v1599
      %v1601 = vpop.f32.mrf.mxu0
      %v1602 = vadd.f32 %v1558, %v1601
      %v1603 = vand.u32 %v686, 4294901760
      %1604 = vmatmul.f32.gmra.mxu0 %v1603
      %v1605 = vpop.f32.mrf.mxu0
      %v1606 = vadd.f32 %v1566, %v1605
      %1607 = vdwg.mxu0
      %1608 = vmatpush.msra.mxu0 0.0
      %1609 = vmatpush.msra.mxu0 0.0
      %1610 = vmatpush.msra.mxu0 0.0
      %1611 = vmatpush.msra.mxu0 0.0
      %1612 = vmatpush.msra.mxu0 0.0
      %1613 = vmatpush.msra.mxu0 0.0
      %1614 = vmatpush.msra.mxu0 0.0
      %1615 = vmatpush.msra.mxu0 0.0
      %1616 = vmatpush.msra.mxu0 0.0
      %1617 = vmatpush.msra.mxu0 0.0
      %1618 = vmatpush.msra.mxu0 0.0
      %1619 = vmatpush.msra.mxu0 0.0
      %1620 = vmatpush.msra.mxu0 0.0
      %v1621 = vand.u32 %v1531, 4294901760
      %v1622 = vsub.f32 %v1531, %v1621
      %1623 = vmatpush.msra.mxu0 %v1622
      %v1624 = vand.u32 %v1530, 4294901760
      %v1625 = vsub.f32 %v1530, %v1624
      %1626 = vmatpush.msra.mxu0 %v1625
      %v1627 = vand.u32 %v1529, 4294901760
      %v1628 = vsub.f32 %v1529, %v1627
      %1629 = vmatpush.msra.mxu0 %v1628
      %v1630 = vand.u32 %v683, 4294901760
      %v1631 = vsub.f32 %v683, %v1630
      %1632 = vmatmul.f32.gmra.mxu0 %v1631
      %v1633 = vpop.f32.mrf.mxu0
      %v1634 = vadd.f32 %v1602, %v1633
      %v1635 = vand.u32 %v686, 4294901760
      %v1636 = vsub.f32 %v686, %v1635
      %1637 = vmatmul.f32.gmra.mxu0 %v1636
      %v1638 = vpop.f32.mrf.mxu0
      %v1639 = vadd.f32 %v1606, %v1638
      %1640 = vdwg.mxu0
      %1641 = vmatpush.msra.mxu0 0.0
      %1642 = vmatpush.msra.mxu0 0.0
      %1643 = vmatpush.msra.mxu0 0.0
      %1644 = vmatpush.msra.mxu0 0.0
      %1645 = vmatpush.msra.mxu0 0.0
      %1646 = vmatpush.msra.mxu0 0.0
      %1647 = vmatpush.msra.mxu0 0.0
      %1648 = vmatpush.msra.mxu0 0.0
      %1649 = vmatpush.msra.mxu0 0.0
      %1650 = vmatpush.msra.mxu0 0.0
      %1651 = vmatpush.msra.mxu0 0.0
      %1652 = vmatpush.msra.mxu0 0.0
      %1653 = vmatpush.msra.mxu0 0.0
      %v1654 = vand.u32 %v1531, 4294901760
      %1655 = vmatpush.msra.mxu0 %v1654
      %v1656 = vand.u32 %v1530, 4294901760
      %1657 = vmatpush.msra.mxu0 %v1656
      %v1658 = vand.u32 %v1529, 4294901760
      %1659 = vmatpush.msra.mxu0 %v1658
      %v1660 = vand.u32 %v683, 4294901760
      %v1661 = vsub.f32 %v683, %v1660
      %v1662 = vand.u32 %v1661, 4294901760
      %1663 = vmatmul.f32.gmra.mxu0 %v1662
      %v1664 = vpop.f32.mrf.mxu0
      %v1665 = vadd.f32 %v1634, %v1664
      %v1666 = vand.u32 %v686, 4294901760
      %v1667 = vsub.f32 %v686, %v1666
      %v1668 = vand.u32 %v1667, 4294901760
      %1669 = vmatmul.f32.gmra.mxu0 %v1668
      %v1670 = vpop.f32.mrf.mxu0
      %v1671 = vadd.f32 %v1639, %v1670
      %1672 = vdwg.mxu0
      %1673 = vmatpush.msra.mxu0 0.0
      %1674 = vmatpush.msra.mxu0 0.0
      %1675 = vmatpush.msra.mxu0 0.0
      %1676 = vmatpush.msra.mxu0 0.0
      %1677 = vmatpush.msra.mxu0 0.0
      %1678 = vmatpush.msra.mxu0 0.0
      %1679 = vmatpush.msra.mxu0 0.0
      %1680 = vmatpush.msra.mxu0 0.0
      %1681 = vmatpush.msra.mxu0 0.0
      %1682 = vmatpush.msra.mxu0 0.0
      %1683 = vmatpush.msra.mxu0 0.0
      %1684 = vmatpush.msra.mxu0 0.0
      %1685 = vmatpush.msra.mxu0 0.0
      %v1686 = vand.u32 %v1531, 4294901760
      %v1687 = vsub.f32 %v1531, %v1686
      %v1688 = vand.u32 %v1687, 4294901760
      %1689 = vmatpush.msra.mxu0 %v1688
      %v1690 = vand.u32 %v1530, 4294901760
      %v1691 = vsub.f32 %v1530, %v1690
      %v1692 = vand.u32 %v1691, 4294901760
      %1693 = vmatpush.msra.mxu0 %v1692
      %v1694 = vand.u32 %v1529, 4294901760
      %v1695 = vsub.f32 %v1529, %v1694
      %v1696 = vand.u32 %v1695, 4294901760
      %1697 = vmatpush.msra.mxu0 %v1696
      %v1698 = vand.u32 %v683, 4294901760
      %1699 = vmatmul.f32.gmra.mxu0 %v1698
      %v1700 = vpop.f32.mrf.mxu0
      %v1701 = vadd.f32 %v1665, %v1700
      %v1702 = vand.u32 %v686, 4294901760
      %1703 = vmatmul.f32.gmra.mxu0 %v1702
      %v1704 = vpop.f32.mrf.mxu0
      %v1705 = vadd.f32 %v1671, %v1704
      %1706 = vdwg.mxu0
      %1707 = vmatpush.msra.mxu0 0.0
      %1708 = vmatpush.msra.mxu0 0.0
      %1709 = vmatpush.msra.mxu0 0.0
      %1710 = vmatpush.msra.mxu0 0.0
      %1711 = vmatpush.msra.mxu0 0.0
      %1712 = vmatpush.msra.mxu0 0.0
      %1713 = vmatpush.msra.mxu0 0.0
      %1714 = vmatpush.msra.mxu0 0.0
      %1715 = vmatpush.msra.mxu0 0.0
      %1716 = vmatpush.msra.mxu0 0.0
      %1717 = vmatpush.msra.mxu0 0.0
      %1718 = vmatpush.msra.mxu0 0.0
      %1719 = vmatpush.msra.mxu0 0.0
      %v1720 = vand.u32 %v1531, 4294901760
      %1721 = vmatpush.msra.mxu0 %v1720
      %v1722 = vand.u32 %v1530, 4294901760
      %1723 = vmatpush.msra.mxu0 %v1722
      %v1724 = vand.u32 %v1529, 4294901760
      %1725 = vmatpush.msra.mxu0 %v1724
      %v1726 = vand.u32 %v683, 4294901760
      %1727 = vmatmul.f32.gmra.mxu0 %v1726
      %v1728 = vpop.f32.mrf.mxu0
      %v1729 = vadd.f32 %v1701, %v1728
      %v1730 = vand.u32 %v686, 4294901760
      %1731 = vmatmul.f32.gmra.mxu0 %v1730
      %v1732 = vpop.f32.mrf.mxu0
      %v1733 = vadd.f32 %v1705, %v1732
      %1734 = vdwg.mxu0
      %v1735 = vadd.f32 %v1526, %v1729
      %v1736 = vadd.f32 %v1527, %v1733
      %s1737 = scalar_lea.vmem %s1, 168
      %v1738 = vld [vmem:[%s1737] sm:$0xff]
      %v1739 = vld [vmem:[%s1737 + $0x8] sm:$0xff]
      %v1740 = vld [vmem:[%s1737 + $0x10] sm:$0xff]
      %1741 = vmatpush.msra.mxu0 0.0
      %1742 = vmatpush.msra.mxu0 0.0
      %1743 = vmatpush.msra.mxu0 0.0
      %1744 = vmatpush.msra.mxu0 0.0
      %1745 = vmatpush.msra.mxu0 0.0
      %1746 = vmatpush.msra.mxu0 0.0
      %1747 = vmatpush.msra.mxu0 0.0
      %1748 = vmatpush.msra.mxu0 0.0
      %1749 = vmatpush.msra.mxu0 0.0
      %1750 = vmatpush.msra.mxu0 0.0
      %1751 = vmatpush.msra.mxu0 0.0
      %1752 = vmatpush.msra.mxu0 0.0
      %1753 = vmatpush.msra.mxu0 0.0
      %v1754 = vand.u32 %v1740, 4294901760
      %1755 = vmatpush.msra.mxu0 %v1754
      %v1756 = vand.u32 %v1739, 4294901760
      %1757 = vmatpush.msra.mxu0 %v1756
      %v1758 = vand.u32 %v1738, 4294901760
      %1759 = vmatpush.msra.mxu0 %v1758
      %v1760 = vand.u32 %v900, 4294901760
      %v1761 = vsub.f32 %v900, %v1760
      %v1762 = vand.u32 %v1761, 4294901760
      %v1763 = vsub.f32 %v1761, %v1762
      %v1764 = vand.u32 %v1763, 4294901760
      %1765 = vmatmul.f32.gmra.mxu0 %v1764
      %v1766 = vpop.f32.mrf.mxu0
      %v1767 = vadd.f32 0.0, %v1766
      %v1768 = vand.u32 %v903, 4294901760
      %v1769 = vsub.f32 %v903, %v1768
      %v1770 = vand.u32 %v1769, 4294901760
      %v1771 = vsub.f32 %v1769, %v1770
      %v1772 = vand.u32 %v1771, 4294901760
      %1773 = vmatmul.f32.gmra.mxu0 %v1772
      %v1774 = vpop.f32.mrf.mxu0
      %v1775 = vadd.f32 0.0, %v1774
      %1776 = vdwg.mxu0
      %1777 = vmatpush.msra.mxu0 0.0
      %1778 = vmatpush.msra.mxu0 0.0
      %1779 = vmatpush.msra.mxu0 0.0
      %1780 = vmatpush.msra.mxu0 0.0
      %1781 = vmatpush.msra.mxu0 0.0
      %1782 = vmatpush.msra.mxu0 0.0
      %1783 = vmatpush.msra.mxu0 0.0
      %1784 = vmatpush.msra.mxu0 0.0
      %1785 = vmatpush.msra.mxu0 0.0
      %1786 = vmatpush.msra.mxu0 0.0
      %1787 = vmatpush.msra.mxu0 0.0
      %1788 = vmatpush.msra.mxu0 0.0
      %1789 = vmatpush.msra.mxu0 0.0
      %v1790 = vand.u32 %v1740, 4294901760
      %v1791 = vsub.f32 %v1740, %v1790
      %v1792 = vand.u32 %v1791, 4294901760
      %v1793 = vsub.f32 %v1791, %v1792
      %v1794 = vand.u32 %v1793, 4294901760
      %1795 = vmatpush.msra.mxu0 %v1794
      %v1796 = vand.u32 %v1739, 4294901760
      %v1797 = vsub.f32 %v1739, %v1796
      %v1798 = vand.u32 %v1797, 4294901760
      %v1799 = vsub.f32 %v1797, %v1798
      %v1800 = vand.u32 %v1799, 4294901760
      %1801 = vmatpush.msra.mxu0 %v1800
      %v1802 = vand.u32 %v1738, 4294901760
      %v1803 = vsub.f32 %v1738, %v1802
      %v1804 = vand.u32 %v1803, 4294901760
      %v1805 = vsub.f32 %v1803, %v1804
      %v1806 = vand.u32 %v1805, 4294901760
      %1807 = vmatpush.msra.mxu0 %v1806
      %v1808 = vand.u32 %v900, 4294901760
      %1809 = vmatmul.f32.gmra.mxu0 %v1808
      %v1810 = vpop.f32.mrf.mxu0
      %v1811 = vadd.f32 %v1767, %v1810
      %v1812 = vand.u32 %v903, 4294901760
      %1813 = vmatmul.f32.gmra.mxu0 %v1812
      %v1814 = vpop.f32.mrf.mxu0
      %v1815 = vadd.f32 %v1775, %v1814
      %1816 = vdwg.mxu0
      %1817 = vmatpush.msra.mxu0 0.0
      %1818 = vmatpush.msra.mxu0 0.0
      %1819 = vmatpush.msra.mxu0 0.0
      %1820 = vmatpush.msra.mxu0 0.0
      %1821 = vmatpush.msra.mxu0 0.0
      %1822 = vmatpush.msra.mxu0 0.0
      %1823 = vmatpush.msra.mxu0 0.0
      %1824 = vmatpush.msra.mxu0 0.0
      %1825 = vmatpush.msra.mxu0 0.0
      %1826 = vmatpush.msra.mxu0 0.0
      %1827 = vmatpush.msra.mxu0 0.0
      %1828 = vmatpush.msra.mxu0 0.0
      %1829 = vmatpush.msra.mxu0 0.0
      %v1830 = vand.u32 %v1740, 4294901760
      %v1831 = vsub.f32 %v1740, %v1830
      %1832 = vmatpush.msra.mxu0 %v1831
      %v1833 = vand.u32 %v1739, 4294901760
      %v1834 = vsub.f32 %v1739, %v1833
      %1835 = vmatpush.msra.mxu0 %v1834
      %v1836 = vand.u32 %v1738, 4294901760
      %v1837 = vsub.f32 %v1738, %v1836
      %1838 = vmatpush.msra.mxu0 %v1837
      %v1839 = vand.u32 %v900, 4294901760
      %v1840 = vsub.f32 %v900, %v1839
      %1841 = vmatmul.f32.gmra.mxu0 %v1840
      %v1842 = vpop.f32.mrf.mxu0
      %v1843 = vadd.f32 %v1811, %v1842
      %v1844 = vand.u32 %v903, 4294901760
      %v1845 = vsub.f32 %v903, %v1844
      %1846 = vmatmul.f32.gmra.mxu0 %v1845
      %v1847 = vpop.f32.mrf.mxu0
      %v1848 = vadd.f32 %v1815, %v1847
      %1849 = vdwg.mxu0
      %1850 = vmatpush.msra.mxu0 0.0
      %1851 = vmatpush.msra.mxu0 0.0
      %1852 = vmatpush.msra.mxu0 0.0
      %1853 = vmatpush.msra.mxu0 0.0
      %1854 = vmatpush.msra.mxu0 0.0
      %1855 = vmatpush.msra.mxu0 0.0
      %1856 = vmatpush.msra.mxu0 0.0
      %1857 = vmatpush.msra.mxu0 0.0
      %1858 = vmatpush.msra.mxu0 0.0
      %1859 = vmatpush.msra.mxu0 0.0
      %1860 = vmatpush.msra.mxu0 0.0
      %1861 = vmatpush.msra.mxu0 0.0
      %1862 = vmatpush.msra.mxu0 0.0
      %v1863 = vand.u32 %v1740, 4294901760
      %1864 = vmatpush.msra.mxu0 %v1863
      %v1865 = vand.u32 %v1739, 4294901760
      %1866 = vmatpush.msra.mxu0 %v1865
      %v1867 = vand.u32 %v1738, 4294901760
      %1868 = vmatpush.msra.mxu0 %v1867
      %v1869 = vand.u32 %v900, 4294901760
      %v1870 = vsub.f32 %v900, %v1869
      %v1871 = vand.u32 %v1870, 4294901760
      %1872 = vmatmul.f32.gmra.mxu0 %v1871
      %v1873 = vpop.f32.mrf.mxu0
      %v1874 = vadd.f32 %v1843, %v1873
      %v1875 = vand.u32 %v903, 4294901760
      %v1876 = vsub.f32 %v903, %v1875
      %v1877 = vand.u32 %v1876, 4294901760
      %1878 = vmatmul.f32.gmra.mxu0 %v1877
      %v1879 = vpop.f32.mrf.mxu0
      %v1880 = vadd.f32 %v1848, %v1879
      %1881 = vdwg.mxu0
      %1882 = vmatpush.msra.mxu0 0.0
      %1883 = vmatpush.msra.mxu0 0.0
      %1884 = vmatpush.msra.mxu0 0.0
      %1885 = vmatpush.msra.mxu0 0.0
      %1886 = vmatpush.msra.mxu0 0.0
      %1887 = vmatpush.msra.mxu0 0.0
      %1888 = vmatpush.msra.mxu0 0.0
      %1889 = vmatpush.msra.mxu0 0.0
      %1890 = vmatpush.msra.mxu0 0.0
      %1891 = vmatpush.msra.mxu0 0.0
      %1892 = vmatpush.msra.mxu0 0.0
      %1893 = vmatpush.msra.mxu0 0.0
      %1894 = vmatpush.msra.mxu0 0.0
      %v1895 = vand.u32 %v1740, 4294901760
      %v1896 = vsub.f32 %v1740, %v1895
      %v1897 = vand.u32 %v1896, 4294901760
      %1898 = vmatpush.msra.mxu0 %v1897
      %v1899 = vand.u32 %v1739, 4294901760
      %v1900 = vsub.f32 %v1739, %v1899
      %v1901 = vand.u32 %v1900, 4294901760
      %1902 = vmatpush.msra.mxu0 %v1901
      %v1903 = vand.u32 %v1738, 4294901760
      %v1904 = vsub.f32 %v1738, %v1903
      %v1905 = vand.u32 %v1904, 4294901760
      %1906 = vmatpush.msra.mxu0 %v1905
      %v1907 = vand.u32 %v900, 4294901760
      %1908 = vmatmul.f32.gmra.mxu0 %v1907
      %v1909 = vpop.f32.mrf.mxu0
      %v1910 = vadd.f32 %v1874, %v1909
      %v1911 = vand.u32 %v903, 4294901760
      %1912 = vmatmul.f32.gmra.mxu0 %v1911
      %v1913 = vpop.f32.mrf.mxu0
      %v1914 = vadd.f32 %v1880, %v1913
      %1915 = vdwg.mxu0
      %1916 = vmatpush.msra.mxu0 0.0
      %1917 = vmatpush.msra.mxu0 0.0
      %1918 = vmatpush.msra.mxu0 0.0
      %1919 = vmatpush.msra.mxu0 0.0
      %1920 = vmatpush.msra.mxu0 0.0
      %1921 = vmatpush.msra.mxu0 0.0
      %1922 = vmatpush.msra.mxu0 0.0
      %1923 = vmatpush.msra.mxu0 0.0
      %1924 = vmatpush.msra.mxu0 0.0
      %1925 = vmatpush.msra.mxu0 0.0
      %1926 = vmatpush.msra.mxu0 0.0
      %1927 = vmatpush.msra.mxu0 0.0
      %1928 = vmatpush.msra.mxu0 0.0
      %v1929 = vand.u32 %v1740, 4294901760
      %1930 = vmatpush.msra.mxu0 %v1929
      %v1931 = vand.u32 %v1739, 4294901760
      %1932 = vmatpush.msra.mxu0 %v1931
      %v1933 = vand.u32 %v1738, 4294901760
      %1934 = vmatpush.msra.mxu0 %v1933
      %v1935 = vand.u32 %v900, 4294901760
      %1936 = vmatmul.f32.gmra.mxu0 %v1935
      %v1937 = vpop.f32.mrf.mxu0
      %v1938 = vadd.f32 %v1910, %v1937
      %v1939 = vand.u32 %v903, 4294901760
      %1940 = vmatmul.f32.gmra.mxu0 %v1939
      %v1941 = vpop.f32.mrf.mxu0
      %v1942 = vadd.f32 %v1914, %v1941
      %1943 = vdwg.mxu0
      %v1944 = vadd.f32 %v1735, %v1938
      %v1945 = vadd.f32 %v1736, %v1942
      %v1946 = vld [vmem:[#allocation2 + $0x1] sm:$0xff]
      %v1947 = vld [vmem:[#allocation2 + $0x9] sm:$0xff]
      %s1948 = scalar_lea.vmem %s1, 192
      %v1949 = vld [vmem:[%s1948] sm:$0xff]
      %v1950 = vld [vmem:[%s1948 + $0x8] sm:$0xff]
      %v1951 = vld [vmem:[%s1948 + $0x10] sm:$0xff]
      %v1953 = vsel %vm198, %v1946, 0
      %v1956 = vsel %vm198, %v1947, 0
      %1958 = vmatpush.msra.mxu0 0.0
      %1959 = vmatpush.msra.mxu0 0.0
      %1960 = vmatpush.msra.mxu0 0.0
      %1961 = vmatpush.msra.mxu0 0.0
      %1962 = vmatpush.msra.mxu0 0.0
      %1963 = vmatpush.msra.mxu0 0.0
      %1964 = vmatpush.msra.mxu0 0.0
      %1965 = vmatpush.msra.mxu0 0.0
      %1966 = vmatpush.msra.mxu0 0.0
      %1967 = vmatpush.msra.mxu0 0.0
      %1968 = vmatpush.msra.mxu0 0.0
      %1969 = vmatpush.msra.mxu0 0.0
      %1970 = vmatpush.msra.mxu0 0.0
      %v1971 = vand.u32 %v1951, 4294901760
      %1972 = vmatpush.msra.mxu0 %v1971
      %v1973 = vand.u32 %v1950, 4294901760
      %1974 = vmatpush.msra.mxu0 %v1973
      %v1975 = vand.u32 %v1949, 4294901760
      %1976 = vmatpush.msra.mxu0 %v1975
      %v1977 = vand.u32 %v1953, 4294901760
      %v1978 = vsub.f32 %v1953, %v1977
      %v1979 = vand.u32 %v1978, 4294901760
      %v1980 = vsub.f32 %v1978, %v1979
      %v1981 = vand.u32 %v1980, 4294901760
      %1982 = vmatmul.f32.gmra.mxu0 %v1981
      %v1983 = vpop.f32.mrf.mxu0
      %v1984 = vadd.f32 0.0, %v1983
      %v1985 = vand.u32 %v1956, 4294901760
      %v1986 = vsub.f32 %v1956, %v1985
      %v1987 = vand.u32 %v1986, 4294901760
      %v1988 = vsub.f32 %v1986, %v1987
      %v1989 = vand.u32 %v1988, 4294901760
      %1990 = vmatmul.f32.gmra.mxu0 %v1989
      %v1991 = vpop.f32.mrf.mxu0
      %v1992 = vadd.f32 0.0, %v1991
      %1993 = vdwg.mxu0
      %1994 = vmatpush.msra.mxu0 0.0
      %1995 = vmatpush.msra.mxu0 0.0
      %1996 = vmatpush.msra.mxu0 0.0
      %1997 = vmatpush.msra.mxu0 0.0
      %1998 = vmatpush.msra.mxu0 0.0
      %1999 = vmatpush.msra.mxu0 0.0
      %2000 = vmatpush.msra.mxu0 0.0
      %2001 = vmatpush.msra.mxu0 0.0
      %2002 = vmatpush.msra.mxu0 0.0
      %2003 = vmatpush.msra.mxu0 0.0
      %2004 = vmatpush.msra.mxu0 0.0
      %2005 = vmatpush.msra.mxu0 0.0
      %2006 = vmatpush.msra.mxu0 0.0
      %v2007 = vand.u32 %v1951, 4294901760
      %v2008 = vsub.f32 %v1951, %v2007
      %v2009 = vand.u32 %v2008, 4294901760
      %v2010 = vsub.f32 %v2008, %v2009
      %v2011 = vand.u32 %v2010, 4294901760
      %2012 = vmatpush.msra.mxu0 %v2011
      %v2013 = vand.u32 %v1950, 4294901760
      %v2014 = vsub.f32 %v1950, %v2013
      %v2015 = vand.u32 %v2014, 4294901760
      %v2016 = vsub.f32 %v2014, %v2015
      %v2017 = vand.u32 %v2016, 4294901760
      %2018 = vmatpush.msra.mxu0 %v2017
      %v2019 = vand.u32 %v1949, 4294901760
      %v2020 = vsub.f32 %v1949, %v2019
      %v2021 = vand.u32 %v2020, 4294901760
      %v2022 = vsub.f32 %v2020, %v2021
      %v2023 = vand.u32 %v2022, 4294901760
      %2024 = vmatpush.msra.mxu0 %v2023
      %v2025 = vand.u32 %v1953, 4294901760
      %2026 = vmatmul.f32.gmra.mxu0 %v2025
      %v2027 = vpop.f32.mrf.mxu0
      %v2028 = vadd.f32 %v1984, %v2027
      %v2029 = vand.u32 %v1956, 4294901760
      %2030 = vmatmul.f32.gmra.mxu0 %v2029
      %v2031 = vpop.f32.mrf.mxu0
      %v2032 = vadd.f32 %v1992, %v2031
      %2033 = vdwg.mxu0
      %2034 = vmatpush.msra.mxu0 0.0
      %2035 = vmatpush.msra.mxu0 0.0
      %2036 = vmatpush.msra.mxu0 0.0
      %2037 = vmatpush.msra.mxu0 0.0
      %2038 = vmatpush.msra.mxu0 0.0
      %2039 = vmatpush.msra.mxu0 0.0
      %2040 = vmatpush.msra.mxu0 0.0
      %2041 = vmatpush.msra.mxu0 0.0
      %2042 = vmatpush.msra.mxu0 0.0
      %2043 = vmatpush.msra.mxu0 0.0
      %2044 = vmatpush.msra.mxu0 0.0
      %2045 = vmatpush.msra.mxu0 0.0
      %2046 = vmatpush.msra.mxu0 0.0
      %v2047 = vand.u32 %v1951, 4294901760
      %v2048 = vsub.f32 %v1951, %v2047
      %2049 = vmatpush.msra.mxu0 %v2048
      %v2050 = vand.u32 %v1950, 4294901760
      %v2051 = vsub.f32 %v1950, %v2050
      %2052 = vmatpush.msra.mxu0 %v2051
      %v2053 = vand.u32 %v1949, 4294901760
      %v2054 = vsub.f32 %v1949, %v2053
      %2055 = vmatpush.msra.mxu0 %v2054
      %v2056 = vand.u32 %v1953, 4294901760
      %v2057 = vsub.f32 %v1953, %v2056
      %2058 = vmatmul.f32.gmra.mxu0 %v2057
      %v2059 = vpop.f32.mrf.mxu0
      %v2060 = vadd.f32 %v2028, %v2059
      %v2061 = vand.u32 %v1956, 4294901760
      %v2062 = vsub.f32 %v1956, %v2061
      %2063 = vmatmul.f32.gmra.mxu0 %v2062
      %v2064 = vpop.f32.mrf.mxu0
      %v2065 = vadd.f32 %v2032, %v2064
      %2066 = vdwg.mxu0
      %2067 = vmatpush.msra.mxu0 0.0
      %2068 = vmatpush.msra.mxu0 0.0
      %2069 = vmatpush.msra.mxu0 0.0
      %2070 = vmatpush.msra.mxu0 0.0
      %2071 = vmatpush.msra.mxu0 0.0
      %2072 = vmatpush.msra.mxu0 0.0
      %2073 = vmatpush.msra.mxu0 0.0
      %2074 = vmatpush.msra.mxu0 0.0
      %2075 = vmatpush.msra.mxu0 0.0
      %2076 = vmatpush.msra.mxu0 0.0
      %2077 = vmatpush.msra.mxu0 0.0
      %2078 = vmatpush.msra.mxu0 0.0
      %2079 = vmatpush.msra.mxu0 0.0
      %v2080 = vand.u32 %v1951, 4294901760
      %2081 = vmatpush.msra.mxu0 %v2080
      %v2082 = vand.u32 %v1950, 4294901760
      %2083 = vmatpush.msra.mxu0 %v2082
      %v2084 = vand.u32 %v1949, 4294901760
      %2085 = vmatpush.msra.mxu0 %v2084
      %v2086 = vand.u32 %v1953, 4294901760
      %v2087 = vsub.f32 %v1953, %v2086
      %v2088 = vand.u32 %v2087, 4294901760
      %2089 = vmatmul.f32.gmra.mxu0 %v2088
      %v2090 = vpop.f32.mrf.mxu0
      %v2091 = vadd.f32 %v2060, %v2090
      %v2092 = vand.u32 %v1956, 4294901760
      %v2093 = vsub.f32 %v1956, %v2092
      %v2094 = vand.u32 %v2093, 4294901760
      %2095 = vmatmul.f32.gmra.mxu0 %v2094
      %v2096 = vpop.f32.mrf.mxu0
      %v2097 = vadd.f32 %v2065, %v2096
      %2098 = vdwg.mxu0
      %2099 = vmatpush.msra.mxu0 0.0
      %2100 = vmatpush.msra.mxu0 0.0
      %2101 = vmatpush.msra.mxu0 0.0
      %2102 = vmatpush.msra.mxu0 0.0
      %2103 = vmatpush.msra.mxu0 0.0
      %2104 = vmatpush.msra.mxu0 0.0
      %2105 = vmatpush.msra.mxu0 0.0
      %2106 = vmatpush.msra.mxu0 0.0
      %2107 = vmatpush.msra.mxu0 0.0
      %2108 = vmatpush.msra.mxu0 0.0
      %2109 = vmatpush.msra.mxu0 0.0
      %2110 = vmatpush.msra.mxu0 0.0
      %2111 = vmatpush.msra.mxu0 0.0
      %v2112 = vand.u32 %v1951, 4294901760
      %v2113 = vsub.f32 %v1951, %v2112
      %v2114 = vand.u32 %v2113, 4294901760
      %2115 = vmatpush.msra.mxu0 %v2114
      %v2116 = vand.u32 %v1950, 4294901760
      %v2117 = vsub.f32 %v1950, %v2116
      %v2118 = vand.u32 %v2117, 4294901760
      %2119 = vmatpush.msra.mxu0 %v2118
      %v2120 = vand.u32 %v1949, 4294901760
      %v2121 = vsub.f32 %v1949, %v2120
      %v2122 = vand.u32 %v2121, 4294901760
      %2123 = vmatpush.msra.mxu0 %v2122
      %v2124 = vand.u32 %v1953, 4294901760
      %2125 = vmatmul.f32.gmra.mxu0 %v2124
      %v2126 = vpop.f32.mrf.mxu0
      %v2127 = vadd.f32 %v2091, %v2126
      %v2128 = vand.u32 %v1956, 4294901760
      %2129 = vmatmul.f32.gmra.mxu0 %v2128
      %v2130 = vpop.f32.mrf.mxu0
      %v2131 = vadd.f32 %v2097, %v2130
      %2132 = vdwg.mxu0
      %2133 = vmatpush.msra.mxu0 0.0
      %2134 = vmatpush.msra.mxu0 0.0
      %2135 = vmatpush.msra.mxu0 0.0
      %2136 = vmatpush.msra.mxu0 0.0
      %2137 = vmatpush.msra.mxu0 0.0
      %2138 = vmatpush.msra.mxu0 0.0
      %2139 = vmatpush.msra.mxu0 0.0
      %2140 = vmatpush.msra.mxu0 0.0
      %2141 = vmatpush.msra.mxu0 0.0
      %2142 = vmatpush.msra.mxu0 0.0
      %2143 = vmatpush.msra.mxu0 0.0
      %2144 = vmatpush.msra.mxu0 0.0
      %2145 = vmatpush.msra.mxu0 0.0
      %v2146 = vand.u32 %v1951, 4294901760
      %2147 = vmatpush.msra.mxu0 %v2146
      %v2148 = vand.u32 %v1950, 4294901760
      %2149 = vmatpush.msra.mxu0 %v2148
      %v2150 = vand.u32 %v1949, 4294901760
      %2151 = vmatpush.msra.mxu0 %v2150
      %v2152 = vand.u32 %v1953, 4294901760
      %2153 = vmatmul.f32.gmra.mxu0 %v2152
      %v2154 = vpop.f32.mrf.mxu0
      %v2155 = vadd.f32 %v2127, %v2154
      %v2156 = vand.u32 %v1956, 4294901760
      %2157 = vmatmul.f32.gmra.mxu0 %v2156
      %v2158 = vpop.f32.mrf.mxu0
      %v2159 = vadd.f32 %v2131, %v2158
      %2160 = vdwg.mxu0
      %v2161 = vadd.f32 %v1944, %v2155
      %v2162 = vadd.f32 %v1945, %v2159
      %v2163 = vld [vmem:[%s228 + $0x1] sm:$0xff]
      %v2164 = vld [vmem:[%s228 + $0x9] sm:$0xff]
      %s2165 = scalar_lea.vmem %s1, 216
      %v2166 = vld [vmem:[%s2165] sm:$0xff]
      %v2167 = vld [vmem:[%s2165 + $0x8] sm:$0xff]
      %v2168 = vld [vmem:[%s2165 + $0x10] sm:$0xff]
      %v2170 = vsel %vm198, %v2163, 0
      %v2173 = vsel %vm198, %v2164, 0
      %2175 = vmatpush.msra.mxu0 0.0
      %2176 = vmatpush.msra.mxu0 0.0
      %2177 = vmatpush.msra.mxu0 0.0
      %2178 = vmatpush.msra.mxu0 0.0
      %2179 = vmatpush.msra.mxu0 0.0
      %2180 = vmatpush.msra.mxu0 0.0
      %2181 = vmatpush.msra.mxu0 0.0
      %2182 = vmatpush.msra.mxu0 0.0
      %2183 = vmatpush.msra.mxu0 0.0
      %2184 = vmatpush.msra.mxu0 0.0
      %2185 = vmatpush.msra.mxu0 0.0
      %2186 = vmatpush.msra.mxu0 0.0
      %2187 = vmatpush.msra.mxu0 0.0
      %v2188 = vand.u32 %v2168, 4294901760
      %2189 = vmatpush.msra.mxu0 %v2188
      %v2190 = vand.u32 %v2167, 4294901760
      %2191 = vmatpush.msra.mxu0 %v2190
      %v2192 = vand.u32 %v2166, 4294901760
      %2193 = vmatpush.msra.mxu0 %v2192
      %v2194 = vand.u32 %v2170, 4294901760
      %v2195 = vsub.f32 %v2170, %v2194
      %v2196 = vand.u32 %v2195, 4294901760
      %v2197 = vsub.f32 %v2195, %v2196
      %v2198 = vand.u32 %v2197, 4294901760
      %2199 = vmatmul.f32.gmra.mxu0 %v2198
      %v2200 = vpop.f32.mrf.mxu0
      %v2201 = vadd.f32 0.0, %v2200
      %v2202 = vand.u32 %v2173, 4294901760
      %v2203 = vsub.f32 %v2173, %v2202
      %v2204 = vand.u32 %v2203, 4294901760
      %v2205 = vsub.f32 %v2203, %v2204
      %v2206 = vand.u32 %v2205, 4294901760
      %2207 = vmatmul.f32.gmra.mxu0 %v2206
      %v2208 = vpop.f32.mrf.mxu0
      %v2209 = vadd.f32 0.0, %v2208
      %2210 = vdwg.mxu0
      %2211 = vmatpush.msra.mxu0 0.0
      %2212 = vmatpush.msra.mxu0 0.0
      %2213 = vmatpush.msra.mxu0 0.0
      %2214 = vmatpush.msra.mxu0 0.0
      %2215 = vmatpush.msra.mxu0 0.0
      %2216 = vmatpush.msra.mxu0 0.0
      %2217 = vmatpush.msra.mxu0 0.0
      %2218 = vmatpush.msra.mxu0 0.0
      %2219 = vmatpush.msra.mxu0 0.0
      %2220 = vmatpush.msra.mxu0 0.0
      %2221 = vmatpush.msra.mxu0 0.0
      %2222 = vmatpush.msra.mxu0 0.0
      %2223 = vmatpush.msra.mxu0 0.0
      %v2224 = vand.u32 %v2168, 4294901760
      %v2225 = vsub.f32 %v2168, %v2224
      %v2226 = vand.u32 %v2225, 4294901760
      %v2227 = vsub.f32 %v2225, %v2226
      %v2228 = vand.u32 %v2227, 4294901760
      %2229 = vmatpush.msra.mxu0 %v2228
      %v2230 = vand.u32 %v2167, 4294901760
      %v2231 = vsub.f32 %v2167, %v2230
      %v2232 = vand.u32 %v2231, 4294901760
      %v2233 = vsub.f32 %v2231, %v2232
      %v2234 = vand.u32 %v2233, 4294901760
      %2235 = vmatpush.msra.mxu0 %v2234
      %v2236 = vand.u32 %v2166, 4294901760
      %v2237 = vsub.f32 %v2166, %v2236
      %v2238 = vand.u32 %v2237, 4294901760
      %v2239 = vsub.f32 %v2237, %v2238
      %v2240 = vand.u32 %v2239, 4294901760
      %2241 = vmatpush.msra.mxu0 %v2240
      %v2242 = vand.u32 %v2170, 4294901760
      %2243 = vmatmul.f32.gmra.mxu0 %v2242
      %v2244 = vpop.f32.mrf.mxu0
      %v2245 = vadd.f32 %v2201, %v2244
      %v2246 = vand.u32 %v2173, 4294901760
      %2247 = vmatmul.f32.gmra.mxu0 %v2246
      %v2248 = vpop.f32.mrf.mxu0
      %v2249 = vadd.f32 %v2209, %v2248
      %2250 = vdwg.mxu0
      %2251 = vmatpush.msra.mxu0 0.0
      %2252 = vmatpush.msra.mxu0 0.0
      %2253 = vmatpush.msra.mxu0 0.0
      %2254 = vmatpush.msra.mxu0 0.0
      %2255 = vmatpush.msra.mxu0 0.0
      %2256 = vmatpush.msra.mxu0 0.0
      %2257 = vmatpush.msra.mxu0 0.0
      %2258 = vmatpush.msra.mxu0 0.0
      %2259 = vmatpush.msra.mxu0 0.0
      %2260 = vmatpush.msra.mxu0 0.0
      %2261 = vmatpush.msra.mxu0 0.0
      %2262 = vmatpush.msra.mxu0 0.0
      %2263 = vmatpush.msra.mxu0 0.0
      %v2264 = vand.u32 %v2168, 4294901760
      %v2265 = vsub.f32 %v2168, %v2264
      %2266 = vmatpush.msra.mxu0 %v2265
      %v2267 = vand.u32 %v2167, 4294901760
      %v2268 = vsub.f32 %v2167, %v2267
      %2269 = vmatpush.msra.mxu0 %v2268
      %v2270 = vand.u32 %v2166, 4294901760
      %v2271 = vsub.f32 %v2166, %v2270
      %2272 = vmatpush.msra.mxu0 %v2271
      %v2273 = vand.u32 %v2170, 4294901760
      %v2274 = vsub.f32 %v2170, %v2273
      %2275 = vmatmul.f32.gmra.mxu0 %v2274
      %v2276 = vpop.f32.mrf.mxu0
      %v2277 = vadd.f32 %v2245, %v2276
      %v2278 = vand.u32 %v2173, 4294901760
      %v2279 = vsub.f32 %v2173, %v2278
      %2280 = vmatmul.f32.gmra.mxu0 %v2279
      %v2281 = vpop.f32.mrf.mxu0
      %v2282 = vadd.f32 %v2249, %v2281
      %2283 = vdwg.mxu0
      %2284 = vmatpush.msra.mxu0 0.0
      %2285 = vmatpush.msra.mxu0 0.0
      %2286 = vmatpush.msra.mxu0 0.0
      %2287 = vmatpush.msra.mxu0 0.0
      %2288 = vmatpush.msra.mxu0 0.0
      %2289 = vmatpush.msra.mxu0 0.0
      %2290 = vmatpush.msra.mxu0 0.0
      %2291 = vmatpush.msra.mxu0 0.0
      %2292 = vmatpush.msra.mxu0 0.0
      %2293 = vmatpush.msra.mxu0 0.0
      %2294 = vmatpush.msra.mxu0 0.0
      %2295 = vmatpush.msra.mxu0 0.0
      %2296 = vmatpush.msra.mxu0 0.0
      %v2297 = vand.u32 %v2168, 4294901760
      %2298 = vmatpush.msra.mxu0 %v2297
      %v2299 = vand.u32 %v2167, 4294901760
      %2300 = vmatpush.msra.mxu0 %v2299
      %v2301 = vand.u32 %v2166, 4294901760
      %2302 = vmatpush.msra.mxu0 %v2301
      %v2303 = vand.u32 %v2170, 4294901760
      %v2304 = vsub.f32 %v2170, %v2303
      %v2305 = vand.u32 %v2304, 4294901760
      %2306 = vmatmul.f32.gmra.mxu0 %v2305
      %v2307 = vpop.f32.mrf.mxu0
      %v2308 = vadd.f32 %v2277, %v2307
      %v2309 = vand.u32 %v2173, 4294901760
      %v2310 = vsub.f32 %v2173, %v2309
      %v2311 = vand.u32 %v2310, 4294901760
      %2312 = vmatmul.f32.gmra.mxu0 %v2311
      %v2313 = vpop.f32.mrf.mxu0
      %v2314 = vadd.f32 %v2282, %v2313
      %2315 = vdwg.mxu0
      %2316 = vmatpush.msra.mxu0 0.0
      %2317 = vmatpush.msra.mxu0 0.0
      %2318 = vmatpush.msra.mxu0 0.0
      %2319 = vmatpush.msra.mxu0 0.0
      %2320 = vmatpush.msra.mxu0 0.0
      %2321 = vmatpush.msra.mxu0 0.0
      %2322 = vmatpush.msra.mxu0 0.0
      %2323 = vmatpush.msra.mxu0 0.0
      %2324 = vmatpush.msra.mxu0 0.0
      %2325 = vmatpush.msra.mxu0 0.0
      %2326 = vmatpush.msra.mxu0 0.0
      %2327 = vmatpush.msra.mxu0 0.0
      %2328 = vmatpush.msra.mxu0 0.0
      %v2329 = vand.u32 %v2168, 4294901760
      %v2330 = vsub.f32 %v2168, %v2329
      %v2331 = vand.u32 %v2330, 4294901760
      %2332 = vmatpush.msra.mxu0 %v2331
      %v2333 = vand.u32 %v2167, 4294901760
      %v2334 = vsub.f32 %v2167, %v2333
      %v2335 = vand.u32 %v2334, 4294901760
      %2336 = vmatpush.msra.mxu0 %v2335
      %v2337 = vand.u32 %v2166, 4294901760
      %v2338 = vsub.f32 %v2166, %v2337
      %v2339 = vand.u32 %v2338, 4294901760
      %2340 = vmatpush.msra.mxu0 %v2339
      %v2341 = vand.u32 %v2170, 4294901760
      %2342 = vmatmul.f32.gmra.mxu0 %v2341
      %v2343 = vpop.f32.mrf.mxu0
      %v2344 = vadd.f32 %v2308, %v2343
      %v2345 = vand.u32 %v2173, 4294901760
      %2346 = vmatmul.f32.gmra.mxu0 %v2345
      %v2347 = vpop.f32.mrf.mxu0
      %v2348 = vadd.f32 %v2314, %v2347
      %2349 = vdwg.mxu0
      %2350 = vmatpush.msra.mxu0 0.0
      %2351 = vmatpush.msra.mxu0 0.0
      %2352 = vmatpush.msra.mxu0 0.0
      %2353 = vmatpush.msra.mxu0 0.0
      %2354 = vmatpush.msra.mxu0 0.0
      %2355 = vmatpush.msra.mxu0 0.0
      %2356 = vmatpush.msra.mxu0 0.0
      %2357 = vmatpush.msra.mxu0 0.0
      %2358 = vmatpush.msra.mxu0 0.0
      %2359 = vmatpush.msra.mxu0 0.0
      %2360 = vmatpush.msra.mxu0 0.0
      %2361 = vmatpush.msra.mxu0 0.0
      %2362 = vmatpush.msra.mxu0 0.0
      %v2363 = vand.u32 %v2168, 4294901760
      %2364 = vmatpush.msra.mxu0 %v2363
      %v2365 = vand.u32 %v2167, 4294901760
      %2366 = vmatpush.msra.mxu0 %v2365
      %v2367 = vand.u32 %v2166, 4294901760
      %2368 = vmatpush.msra.mxu0 %v2367
      %v2369 = vand.u32 %v2170, 4294901760
      %2370 = vmatmul.f32.gmra.mxu0 %v2369
      %v2371 = vpop.f32.mrf.mxu0
      %v2372 = vadd.f32 %v2344, %v2371
      %v2373 = vand.u32 %v2173, 4294901760
      %2374 = vmatmul.f32.gmra.mxu0 %v2373
      %v2375 = vpop.f32.mrf.mxu0
      %v2376 = vadd.f32 %v2348, %v2375
      %2377 = vdwg.mxu0
      %v2378 = vadd.f32 %v2161, %v2372
      %v2379 = vadd.f32 %v2162, %v2376
      %v2380 = vld [vmem:[%s234 + $0x1] sm:$0xff]
      %v2381 = vld [vmem:[%s234 + $0x9] sm:$0xff]
      %s2382 = scalar_lea.vmem %s1, 240
      %v2383 = vld [vmem:[%s2382] sm:$0xff]
      %v2384 = vld [vmem:[%s2382 + $0x8] sm:$0xff]
      %v2385 = vld [vmem:[%s2382 + $0x10] sm:$0xff]
      %v2387 = vsel %vm198, %v2380, 0
      %v2390 = vsel %vm198, %v2381, 0
      %2392 = vmatpush.msra.mxu0 0.0
      %2393 = vmatpush.msra.mxu0 0.0
      %2394 = vmatpush.msra.mxu0 0.0
      %2395 = vmatpush.msra.mxu0 0.0
      %2396 = vmatpush.msra.mxu0 0.0
      %2397 = vmatpush.msra.mxu0 0.0
      %2398 = vmatpush.msra.mxu0 0.0
      %2399 = vmatpush.msra.mxu0 0.0
      %2400 = vmatpush.msra.mxu0 0.0
      %2401 = vmatpush.msra.mxu0 0.0
      %2402 = vmatpush.msra.mxu0 0.0
      %2403 = vmatpush.msra.mxu0 0.0
      %2404 = vmatpush.msra.mxu0 0.0
      %v2405 = vand.u32 %v2385, 4294901760
      %2406 = vmatpush.msra.mxu0 %v2405
      %v2407 = vand.u32 %v2384, 4294901760
      %2408 = vmatpush.msra.mxu0 %v2407
      %v2409 = vand.u32 %v2383, 4294901760
      %2410 = vmatpush.msra.mxu0 %v2409
      %v2411 = vand.u32 %v2387, 4294901760
      %v2412 = vsub.f32 %v2387, %v2411
      %v2413 = vand.u32 %v2412, 4294901760
      %v2414 = vsub.f32 %v2412, %v2413
      %v2415 = vand.u32 %v2414, 4294901760
      %2416 = vmatmul.f32.gmra.mxu0 %v2415
      %v2417 = vpop.f32.mrf.mxu0
      %v2418 = vadd.f32 0.0, %v2417
      %v2419 = vand.u32 %v2390, 4294901760
      %v2420 = vsub.f32 %v2390, %v2419
      %v2421 = vand.u32 %v2420, 4294901760
      %v2422 = vsub.f32 %v2420, %v2421
      %v2423 = vand.u32 %v2422, 4294901760
      %2424 = vmatmul.f32.gmra.mxu0 %v2423
      %v2425 = vpop.f32.mrf.mxu0
      %v2426 = vadd.f32 0.0, %v2425
      %2427 = vdwg.mxu0
      %2428 = vmatpush.msra.mxu0 0.0
      %2429 = vmatpush.msra.mxu0 0.0
      %2430 = vmatpush.msra.mxu0 0.0
      %2431 = vmatpush.msra.mxu0 0.0
      %2432 = vmatpush.msra.mxu0 0.0
      %2433 = vmatpush.msra.mxu0 0.0
      %2434 = vmatpush.msra.mxu0 0.0
      %2435 = vmatpush.msra.mxu0 0.0
      %2436 = vmatpush.msra.mxu0 0.0
      %2437 = vmatpush.msra.mxu0 0.0
      %2438 = vmatpush.msra.mxu0 0.0
      %2439 = vmatpush.msra.mxu0 0.0
      %2440 = vmatpush.msra.mxu0 0.0
      %v2441 = vand.u32 %v2385, 4294901760
      %v2442 = vsub.f32 %v2385, %v2441
      %v2443 = vand.u32 %v2442, 4294901760
      %v2444 = vsub.f32 %v2442, %v2443
      %v2445 = vand.u32 %v2444, 4294901760
      %2446 = vmatpush.msra.mxu0 %v2445
      %v2447 = vand.u32 %v2384, 4294901760
      %v2448 = vsub.f32 %v2384, %v2447
      %v2449 = vand.u32 %v2448, 4294901760
      %v2450 = vsub.f32 %v2448, %v2449
      %v2451 = vand.u32 %v2450, 4294901760
      %2452 = vmatpush.msra.mxu0 %v2451
      %v2453 = vand.u32 %v2383, 4294901760
      %v2454 = vsub.f32 %v2383, %v2453
      %v2455 = vand.u32 %v2454, 4294901760
      %v2456 = vsub.f32 %v2454, %v2455
      %v2457 = vand.u32 %v2456, 4294901760
      %2458 = vmatpush.msra.mxu0 %v2457
      %v2459 = vand.u32 %v2387, 4294901760
      %2460 = vmatmul.f32.gmra.mxu0 %v2459
      %v2461 = vpop.f32.mrf.mxu0
      %v2462 = vadd.f32 %v2418, %v2461
      %v2463 = vand.u32 %v2390, 4294901760
      %2464 = vmatmul.f32.gmra.mxu0 %v2463
      %v2465 = vpop.f32.mrf.mxu0
      %v2466 = vadd.f32 %v2426, %v2465
      %2467 = vdwg.mxu0
      %2468 = vmatpush.msra.mxu0 0.0
      %2469 = vmatpush.msra.mxu0 0.0
      %2470 = vmatpush.msra.mxu0 0.0
      %2471 = vmatpush.msra.mxu0 0.0
      %2472 = vmatpush.msra.mxu0 0.0
      %2473 = vmatpush.msra.mxu0 0.0
      %2474 = vmatpush.msra.mxu0 0.0
      %2475 = vmatpush.msra.mxu0 0.0
      %2476 = vmatpush.msra.mxu0 0.0
      %2477 = vmatpush.msra.mxu0 0.0
      %2478 = vmatpush.msra.mxu0 0.0
      %2479 = vmatpush.msra.mxu0 0.0
      %2480 = vmatpush.msra.mxu0 0.0
      %v2481 = vand.u32 %v2385, 4294901760
      %v2482 = vsub.f32 %v2385, %v2481
      %2483 = vmatpush.msra.mxu0 %v2482
      %v2484 = vand.u32 %v2384, 4294901760
      %v2485 = vsub.f32 %v2384, %v2484
      %2486 = vmatpush.msra.mxu0 %v2485
      %v2487 = vand.u32 %v2383, 4294901760
      %v2488 = vsub.f32 %v2383, %v2487
      %2489 = vmatpush.msra.mxu0 %v2488
      %v2490 = vand.u32 %v2387, 4294901760
      %v2491 = vsub.f32 %v2387, %v2490
      %2492 = vmatmul.f32.gmra.mxu0 %v2491
      %v2493 = vpop.f32.mrf.mxu0
      %v2494 = vadd.f32 %v2462, %v2493
      %v2495 = vand.u32 %v2390, 4294901760
      %v2496 = vsub.f32 %v2390, %v2495
      %2497 = vmatmul.f32.gmra.mxu0 %v2496
      %v2498 = vpop.f32.mrf.mxu0
      %v2499 = vadd.f32 %v2466, %v2498
      %2500 = vdwg.mxu0
      %2501 = vmatpush.msra.mxu0 0.0
      %2502 = vmatpush.msra.mxu0 0.0
      %2503 = vmatpush.msra.mxu0 0.0
      %2504 = vmatpush.msra.mxu0 0.0
      %2505 = vmatpush.msra.mxu0 0.0
      %2506 = vmatpush.msra.mxu0 0.0
      %2507 = vmatpush.msra.mxu0 0.0
      %2508 = vmatpush.msra.mxu0 0.0
      %2509 = vmatpush.msra.mxu0 0.0
      %2510 = vmatpush.msra.mxu0 0.0
      %2511 = vmatpush.msra.mxu0 0.0
      %2512 = vmatpush.msra.mxu0 0.0
      %2513 = vmatpush.msra.mxu0 0.0
      %v2514 = vand.u32 %v2385, 4294901760
      %2515 = vmatpush.msra.mxu0 %v2514
      %v2516 = vand.u32 %v2384, 4294901760
      %2517 = vmatpush.msra.mxu0 %v2516
      %v2518 = vand.u32 %v2383, 4294901760
      %2519 = vmatpush.msra.mxu0 %v2518
      %v2520 = vand.u32 %v2387, 4294901760
      %v2521 = vsub.f32 %v2387, %v2520
      %v2522 = vand.u32 %v2521, 4294901760
      %2523 = vmatmul.f32.gmra.mxu0 %v2522
      %v2524 = vpop.f32.mrf.mxu0
      %v2525 = vadd.f32 %v2494, %v2524
      %v2526 = vand.u32 %v2390, 4294901760
      %v2527 = vsub.f32 %v2390, %v2526
      %v2528 = vand.u32 %v2527, 4294901760
      %2529 = vmatmul.f32.gmra.mxu0 %v2528
      %v2530 = vpop.f32.mrf.mxu0
      %v2531 = vadd.f32 %v2499, %v2530
      %2532 = vdwg.mxu0
      %2533 = vmatpush.msra.mxu0 0.0
      %2534 = vmatpush.msra.mxu0 0.0
      %2535 = vmatpush.msra.mxu0 0.0
      %2536 = vmatpush.msra.mxu0 0.0
      %2537 = vmatpush.msra.mxu0 0.0
      %2538 = vmatpush.msra.mxu0 0.0
      %2539 = vmatpush.msra.mxu0 0.0
      %2540 = vmatpush.msra.mxu0 0.0
      %2541 = vmatpush.msra.mxu0 0.0
      %2542 = vmatpush.msra.mxu0 0.0
      %2543 = vmatpush.msra.mxu0 0.0
      %2544 = vmatpush.msra.mxu0 0.0
      %2545 = vmatpush.msra.mxu0 0.0
      %v2546 = vand.u32 %v2385, 4294901760
      %v2547 = vsub.f32 %v2385, %v2546
      %v2548 = vand.u32 %v2547, 4294901760
      %2549 = vmatpush.msra.mxu0 %v2548
      %v2550 = vand.u32 %v2384, 4294901760
      %v2551 = vsub.f32 %v2384, %v2550
      %v2552 = vand.u32 %v2551, 4294901760
      %2553 = vmatpush.msra.mxu0 %v2552
      %v2554 = vand.u32 %v2383, 4294901760
      %v2555 = vsub.f32 %v2383, %v2554
      %v2556 = vand.u32 %v2555, 4294901760
      %2557 = vmatpush.msra.mxu0 %v2556
      %v2558 = vand.u32 %v2387, 4294901760
      %2559 = vmatmul.f32.gmra.mxu0 %v2558
      %v2560 = vpop.f32.mrf.mxu0
      %v2561 = vadd.f32 %v2525, %v2560
      %v2562 = vand.u32 %v2390, 4294901760
      %2563 = vmatmul.f32.gmra.mxu0 %v2562
      %v2564 = vpop.f32.mrf.mxu0
      %v2565 = vadd.f32 %v2531, %v2564
      %2566 = vdwg.mxu0
      %2567 = vmatpush.msra.mxu0 0.0
      %2568 = vmatpush.msra.mxu0 0.0
      %2569 = vmatpush.msra.mxu0 0.0
      %2570 = vmatpush.msra.mxu0 0.0
      %2571 = vmatpush.msra.mxu0 0.0
      %2572 = vmatpush.msra.mxu0 0.0
      %2573 = vmatpush.msra.mxu0 0.0
      %2574 = vmatpush.msra.mxu0 0.0
      %2575 = vmatpush.msra.mxu0 0.0
      %2576 = vmatpush.msra.mxu0 0.0
      %2577 = vmatpush.msra.mxu0 0.0
      %2578 = vmatpush.msra.mxu0 0.0
      %2579 = vmatpush.msra.mxu0 0.0
      %v2580 = vand.u32 %v2385, 4294901760
      %2581 = vmatpush.msra.mxu0 %v2580
      %v2582 = vand.u32 %v2384, 4294901760
      %2583 = vmatpush.msra.mxu0 %v2582
      %v2584 = vand.u32 %v2383, 4294901760
      %2585 = vmatpush.msra.mxu0 %v2584
      %v2586 = vand.u32 %v2387, 4294901760
      %2587 = vmatmul.f32.gmra.mxu0 %v2586
      %v2588 = vpop.f32.mrf.mxu0
      %v2589 = vadd.f32 %v2561, %v2588
      %v2590 = vand.u32 %v2390, 4294901760
      %2591 = vmatmul.f32.gmra.mxu0 %v2590
      %v2592 = vpop.f32.mrf.mxu0
      %v2593 = vadd.f32 %v2565, %v2592
      %2594 = vdwg.mxu0
      %v2595 = vadd.f32 %v2378, %v2589
      %v2596 = vadd.f32 %v2379, %v2593
      %v2597 = vld [vmem:[%s240 + $0x1] sm:$0xff]
      %v2598 = vld [vmem:[%s240 + $0x9] sm:$0xff]
      %s2599 = scalar_lea.vmem %s1, 264
      %v2600 = vld [vmem:[%s2599] sm:$0xff]
      %v2601 = vld [vmem:[%s2599 + $0x8] sm:$0xff]
      %v2602 = vld [vmem:[%s2599 + $0x10] sm:$0xff]
      %v2604 = vsel %vm198, %v2597, 0
      %v2607 = vsel %vm198, %v2598, 0
      %2609 = vmatpush.msra.mxu0 0.0
      %2610 = vmatpush.msra.mxu0 0.0
      %2611 = vmatpush.msra.mxu0 0.0
      %2612 = vmatpush.msra.mxu0 0.0
      %2613 = vmatpush.msra.mxu0 0.0
      %2614 = vmatpush.msra.mxu0 0.0
      %2615 = vmatpush.msra.mxu0 0.0
      %2616 = vmatpush.msra.mxu0 0.0
      %2617 = vmatpush.msra.mxu0 0.0
      %2618 = vmatpush.msra.mxu0 0.0
      %2619 = vmatpush.msra.mxu0 0.0
      %2620 = vmatpush.msra.mxu0 0.0
      %2621 = vmatpush.msra.mxu0 0.0
      %v2622 = vand.u32 %v2602, 4294901760
      %2623 = vmatpush.msra.mxu0 %v2622
      %v2624 = vand.u32 %v2601, 4294901760
      %2625 = vmatpush.msra.mxu0 %v2624
      %v2626 = vand.u32 %v2600, 4294901760
      %2627 = vmatpush.msra.mxu0 %v2626
      %v2628 = vand.u32 %v2604, 4294901760
      %v2629 = vsub.f32 %v2604, %v2628
      %v2630 = vand.u32 %v2629, 4294901760
      %v2631 = vsub.f32 %v2629, %v2630
      %v2632 = vand.u32 %v2631, 4294901760
      %2633 = vmatmul.f32.gmra.mxu0 %v2632
      %v2634 = vpop.f32.mrf.mxu0
      %v2635 = vadd.f32 0.0, %v2634
      %v2636 = vand.u32 %v2607, 4294901760
      %v2637 = vsub.f32 %v2607, %v2636
      %v2638 = vand.u32 %v2637, 4294901760
      %v2639 = vsub.f32 %v2637, %v2638
      %v2640 = vand.u32 %v2639, 4294901760
      %2641 = vmatmul.f32.gmra.mxu0 %v2640
      %v2642 = vpop.f32.mrf.mxu0
      %v2643 = vadd.f32 0.0, %v2642
      %2644 = vdwg.mxu0
      %2645 = vmatpush.msra.mxu0 0.0
      %2646 = vmatpush.msra.mxu0 0.0
      %2647 = vmatpush.msra.mxu0 0.0
      %2648 = vmatpush.msra.mxu0 0.0
      %2649 = vmatpush.msra.mxu0 0.0
      %2650 = vmatpush.msra.mxu0 0.0
      %2651 = vmatpush.msra.mxu0 0.0
      %2652 = vmatpush.msra.mxu0 0.0
      %2653 = vmatpush.msra.mxu0 0.0
      %2654 = vmatpush.msra.mxu0 0.0
      %2655 = vmatpush.msra.mxu0 0.0
      %2656 = vmatpush.msra.mxu0 0.0
      %2657 = vmatpush.msra.mxu0 0.0
      %v2658 = vand.u32 %v2602, 4294901760
      %v2659 = vsub.f32 %v2602, %v2658
      %v2660 = vand.u32 %v2659, 4294901760
      %v2661 = vsub.f32 %v2659, %v2660
      %v2662 = vand.u32 %v2661, 4294901760
      %2663 = vmatpush.msra.mxu0 %v2662
      %v2664 = vand.u32 %v2601, 4294901760
      %v2665 = vsub.f32 %v2601, %v2664
      %v2666 = vand.u32 %v2665, 4294901760
      %v2667 = vsub.f32 %v2665, %v2666
      %v2668 = vand.u32 %v2667, 4294901760
      %2669 = vmatpush.msra.mxu0 %v2668
      %v2670 = vand.u32 %v2600, 4294901760
      %v2671 = vsub.f32 %v2600, %v2670
      %v2672 = vand.u32 %v2671, 4294901760
      %v2673 = vsub.f32 %v2671, %v2672
      %v2674 = vand.u32 %v2673, 4294901760
      %2675 = vmatpush.msra.mxu0 %v2674
      %v2676 = vand.u32 %v2604, 4294901760
      %2677 = vmatmul.f32.gmra.mxu0 %v2676
      %v2678 = vpop.f32.mrf.mxu0
      %v2679 = vadd.f32 %v2635, %v2678
      %v2680 = vand.u32 %v2607, 4294901760
      %2681 = vmatmul.f32.gmra.mxu0 %v2680
      %v2682 = vpop.f32.mrf.mxu0
      %v2683 = vadd.f32 %v2643, %v2682
      %2684 = vdwg.mxu0
      %2685 = vmatpush.msra.mxu0 0.0
      %2686 = vmatpush.msra.mxu0 0.0
      %2687 = vmatpush.msra.mxu0 0.0
      %2688 = vmatpush.msra.mxu0 0.0
      %2689 = vmatpush.msra.mxu0 0.0
      %2690 = vmatpush.msra.mxu0 0.0
      %2691 = vmatpush.msra.mxu0 0.0
      %2692 = vmatpush.msra.mxu0 0.0
      %2693 = vmatpush.msra.mxu0 0.0
      %2694 = vmatpush.msra.mxu0 0.0
      %2695 = vmatpush.msra.mxu0 0.0
      %2696 = vmatpush.msra.mxu0 0.0
      %2697 = vmatpush.msra.mxu0 0.0
      %v2698 = vand.u32 %v2602, 4294901760
      %v2699 = vsub.f32 %v2602, %v2698
      %2700 = vmatpush.msra.mxu0 %v2699
      %v2701 = vand.u32 %v2601, 4294901760
      %v2702 = vsub.f32 %v2601, %v2701
      %2703 = vmatpush.msra.mxu0 %v2702
      %v2704 = vand.u32 %v2600, 4294901760
      %v2705 = vsub.f32 %v2600, %v2704
      %2706 = vmatpush.msra.mxu0 %v2705
      %v2707 = vand.u32 %v2604, 4294901760
      %v2708 = vsub.f32 %v2604, %v2707
      %2709 = vmatmul.f32.gmra.mxu0 %v2708
      %v2710 = vpop.f32.mrf.mxu0
      %v2711 = vadd.f32 %v2679, %v2710
      %v2712 = vand.u32 %v2607, 4294901760
      %v2713 = vsub.f32 %v2607, %v2712
      %2714 = vmatmul.f32.gmra.mxu0 %v2713
      %v2715 = vpop.f32.mrf.mxu0
      %v2716 = vadd.f32 %v2683, %v2715
      %2717 = vdwg.mxu0
      %2718 = vmatpush.msra.mxu0 0.0
      %2719 = vmatpush.msra.mxu0 0.0
      %2720 = vmatpush.msra.mxu0 0.0
      %2721 = vmatpush.msra.mxu0 0.0
      %2722 = vmatpush.msra.mxu0 0.0
      %2723 = vmatpush.msra.mxu0 0.0
      %2724 = vmatpush.msra.mxu0 0.0
      %2725 = vmatpush.msra.mxu0 0.0
      %2726 = vmatpush.msra.mxu0 0.0
      %2727 = vmatpush.msra.mxu0 0.0
      %2728 = vmatpush.msra.mxu0 0.0
      %2729 = vmatpush.msra.mxu0 0.0
      %2730 = vmatpush.msra.mxu0 0.0
      %v2731 = vand.u32 %v2602, 4294901760
      %2732 = vmatpush.msra.mxu0 %v2731
      %v2733 = vand.u32 %v2601, 4294901760
      %2734 = vmatpush.msra.mxu0 %v2733
      %v2735 = vand.u32 %v2600, 4294901760
      %2736 = vmatpush.msra.mxu0 %v2735
      %v2737 = vand.u32 %v2604, 4294901760
      %v2738 = vsub.f32 %v2604, %v2737
      %v2739 = vand.u32 %v2738, 4294901760
      %2740 = vmatmul.f32.gmra.mxu0 %v2739
      %v2741 = vpop.f32.mrf.mxu0
      %v2742 = vadd.f32 %v2711, %v2741
      %v2743 = vand.u32 %v2607, 4294901760
      %v2744 = vsub.f32 %v2607, %v2743
      %v2745 = vand.u32 %v2744, 4294901760
      %2746 = vmatmul.f32.gmra.mxu0 %v2745
      %v2747 = vpop.f32.mrf.mxu0
      %v2748 = vadd.f32 %v2716, %v2747
      %2749 = vdwg.mxu0
      %2750 = vmatpush.msra.mxu0 0.0
      %2751 = vmatpush.msra.mxu0 0.0
      %2752 = vmatpush.msra.mxu0 0.0
      %2753 = vmatpush.msra.mxu0 0.0
      %2754 = vmatpush.msra.mxu0 0.0
      %2755 = vmatpush.msra.mxu0 0.0
      %2756 = vmatpush.msra.mxu0 0.0
      %2757 = vmatpush.msra.mxu0 0.0
      %2758 = vmatpush.msra.mxu0 0.0
      %2759 = vmatpush.msra.mxu0 0.0
      %2760 = vmatpush.msra.mxu0 0.0
      %2761 = vmatpush.msra.mxu0 0.0
      %2762 = vmatpush.msra.mxu0 0.0
      %v2763 = vand.u32 %v2602, 4294901760
      %v2764 = vsub.f32 %v2602, %v2763
      %v2765 = vand.u32 %v2764, 4294901760
      %2766 = vmatpush.msra.mxu0 %v2765
      %v2767 = vand.u32 %v2601, 4294901760
      %v2768 = vsub.f32 %v2601, %v2767
      %v2769 = vand.u32 %v2768, 4294901760
      %2770 = vmatpush.msra.mxu0 %v2769
      %v2771 = vand.u32 %v2600, 4294901760
      %v2772 = vsub.f32 %v2600, %v2771
      %v2773 = vand.u32 %v2772, 4294901760
      %2774 = vmatpush.msra.mxu0 %v2773
      %v2775 = vand.u32 %v2604, 4294901760
      %2776 = vmatmul.f32.gmra.mxu0 %v2775
      %v2777 = vpop.f32.mrf.mxu0
      %v2778 = vadd.f32 %v2742, %v2777
      %v2779 = vand.u32 %v2607, 4294901760
      %2780 = vmatmul.f32.gmra.mxu0 %v2779
      %v2781 = vpop.f32.mrf.mxu0
      %v2782 = vadd.f32 %v2748, %v2781
      %2783 = vdwg.mxu0
      %2784 = vmatpush.msra.mxu0 0.0
      %2785 = vmatpush.msra.mxu0 0.0
      %2786 = vmatpush.msra.mxu0 0.0
      %2787 = vmatpush.msra.mxu0 0.0
      %2788 = vmatpush.msra.mxu0 0.0
      %2789 = vmatpush.msra.mxu0 0.0
      %2790 = vmatpush.msra.mxu0 0.0
      %2791 = vmatpush.msra.mxu0 0.0
      %2792 = vmatpush.msra.mxu0 0.0
      %2793 = vmatpush.msra.mxu0 0.0
      %2794 = vmatpush.msra.mxu0 0.0
      %2795 = vmatpush.msra.mxu0 0.0
      %2796 = vmatpush.msra.mxu0 0.0
      %v2797 = vand.u32 %v2602, 4294901760
      %2798 = vmatpush.msra.mxu0 %v2797
      %v2799 = vand.u32 %v2601, 4294901760
      %2800 = vmatpush.msra.mxu0 %v2799
      %v2801 = vand.u32 %v2600, 4294901760
      %2802 = vmatpush.msra.mxu0 %v2801
      %v2803 = vand.u32 %v2604, 4294901760
      %2804 = vmatmul.f32.gmra.mxu0 %v2803
      %v2805 = vpop.f32.mrf.mxu0
      %v2806 = vadd.f32 %v2778, %v2805
      %v2807 = vand.u32 %v2607, 4294901760
      %2808 = vmatmul.f32.gmra.mxu0 %v2807
      %v2809 = vpop.f32.mrf.mxu0
      %v2810 = vadd.f32 %v2782, %v2809
      %2811 = vdwg.mxu0
      %v2812 = vadd.f32 %v2595, %v2806
      %v2813 = vadd.f32 %v2596, %v2810
      %vm2814 = vcmask 261120
      %v2816 = vsel %vm2814, %v216, 0
      %v2819 = vsel %vm2814, %v217, 0
      %v2822 = vsel %vm2814, %v218, 0
      %v2825 = vsel %vm2814, %v219, 0
      %2827 = vmatpush.msra.mxu0 0.0
      %2828 = vmatpush.msra.mxu0 0.0
      %2829 = vmatpush.msra.mxu0 0.0
      %2830 = vmatpush.msra.mxu0 0.0
      %2831 = vmatpush.msra.mxu0 0.0
      %2832 = vmatpush.msra.mxu0 0.0
      %2833 = vmatpush.msra.mxu0 0.0
      %2834 = vmatpush.msra.mxu0 0.0
      %2835 = vmatpush.msra.mxu0 0.0
      %2836 = vmatpush.msra.mxu0 0.0
      %2837 = vmatpush.msra.mxu0 0.0
      %2838 = vmatpush.msra.mxu0 0.0
      %v2839 = vand.u32 %v2813, 4294901760
      %2840 = vmatpush.msra.mxu0 %v2839
      %v2841 = vand.u32 %v2812, 4294901760
      %2842 = vmatpush.msra.mxu0 %v2841
      %v2843 = vand.u32 %v1109, 4294901760
      %2844 = vmatpush.msra.mxu0 %v2843
      %v2845 = vand.u32 %v1108, 4294901760
      %2846 = vmatpush.msra.mxu0 %v2845
      %v2847 = vand.u32 %v2816, 4294901760
      %v2848 = vsub.f32 %v2816, %v2847
      %v2849 = vand.u32 %v2848, 4294901760
      %v2850 = vsub.f32 %v2848, %v2849
      %v2851 = vand.u32 %v2850, 4294901760
      %2852 = vmatmul.f32.gmra.mxu0 %v2851
      %v2853 = vpop.f32.mrf.mxu0
      %v2854 = vadd.f32 0.0, %v2853
      %v2855 = vand.u32 %v2819, 4294901760
      %v2856 = vsub.f32 %v2819, %v2855
      %v2857 = vand.u32 %v2856, 4294901760
      %v2858 = vsub.f32 %v2856, %v2857
      %v2859 = vand.u32 %v2858, 4294901760
      %2860 = vmatmul.f32.gmra.mxu0 %v2859
      %v2861 = vpop.f32.mrf.mxu0
      %v2862 = vadd.f32 0.0, %v2861
      %v2863 = vand.u32 %v2822, 4294901760
      %v2864 = vsub.f32 %v2822, %v2863
      %v2865 = vand.u32 %v2864, 4294901760
      %v2866 = vsub.f32 %v2864, %v2865
      %v2867 = vand.u32 %v2866, 4294901760
      %2868 = vmatmul.f32.gmra.mxu0 %v2867
      %v2869 = vpop.f32.mrf.mxu0
      %v2870 = vadd.f32 0.0, %v2869
      %v2871 = vand.u32 %v2825, 4294901760
      %v2872 = vsub.f32 %v2825, %v2871
      %v2873 = vand.u32 %v2872, 4294901760
      %v2874 = vsub.f32 %v2872, %v2873
      %v2875 = vand.u32 %v2874, 4294901760
      %2876 = vmatmul.f32.gmra.mxu0 %v2875
      %v2877 = vpop.f32.mrf.mxu0
      %v2878 = vadd.f32 0.0, %v2877
      %2879 = vdwg.mxu0
      %2880 = vmatpush.msra.mxu0 0.0
      %2881 = vmatpush.msra.mxu0 0.0
      %2882 = vmatpush.msra.mxu0 0.0
      %2883 = vmatpush.msra.mxu0 0.0
      %2884 = vmatpush.msra.mxu0 0.0
      %2885 = vmatpush.msra.mxu0 0.0
      %2886 = vmatpush.msra.mxu0 0.0
      %2887 = vmatpush.msra.mxu0 0.0
      %2888 = vmatpush.msra.mxu0 0.0
      %2889 = vmatpush.msra.mxu0 0.0
      %2890 = vmatpush.msra.mxu0 0.0
      %2891 = vmatpush.msra.mxu0 0.0
      %v2892 = vand.u32 %v2813, 4294901760
      %v2893 = vsub.f32 %v2813, %v2892
      %v2894 = vand.u32 %v2893, 4294901760
      %v2895 = vsub.f32 %v2893, %v2894
      %v2896 = vand.u32 %v2895, 4294901760
      %2897 = vmatpush.msra.mxu0 %v2896
      %v2898 = vand.u32 %v2812, 4294901760
      %v2899 = vsub.f32 %v2812, %v2898
      %v2900 = vand.u32 %v2899, 4294901760
      %v2901 = vsub.f32 %v2899, %v2900
      %v2902 = vand.u32 %v2901, 4294901760
      %2903 = vmatpush.msra.mxu0 %v2902
      %v2904 = vand.u32 %v1109, 4294901760
      %v2905 = vsub.f32 %v1109, %v2904
      %v2906 = vand.u32 %v2905, 4294901760
      %v2907 = vsub.f32 %v2905, %v2906
      %v2908 = vand.u32 %v2907, 4294901760
      %2909 = vmatpush.msra.mxu0 %v2908
      %v2910 = vand.u32 %v1108, 4294901760
      %v2911 = vsub.f32 %v1108, %v2910
      %v2912 = vand.u32 %v2911, 4294901760
      %v2913 = vsub.f32 %v2911, %v2912
      %v2914 = vand.u32 %v2913, 4294901760
      %2915 = vmatpush.msra.mxu0 %v2914
      %v2916 = vand.u32 %v2816, 4294901760
      %2917 = vmatmul.f32.gmra.mxu0 %v2916
      %v2918 = vpop.f32.mrf.mxu0
      %v2919 = vadd.f32 %v2854, %v2918
      %v2920 = vand.u32 %v2819, 4294901760
      %2921 = vmatmul.f32.gmra.mxu0 %v2920
      %v2922 = vpop.f32.mrf.mxu0
      %v2923 = vadd.f32 %v2862, %v2922
      %v2924 = vand.u32 %v2822, 4294901760
      %2925 = vmatmul.f32.gmra.mxu0 %v2924
      %v2926 = vpop.f32.mrf.mxu0
      %v2927 = vadd.f32 %v2870, %v2926
      %v2928 = vand.u32 %v2825, 4294901760
      %2929 = vmatmul.f32.gmra.mxu0 %v2928
      %v2930 = vpop.f32.mrf.mxu0
      %v2931 = vadd.f32 %v2878, %v2930
      %2932 = vdwg.mxu0
      %2933 = vmatpush.msra.mxu0 0.0
      %2934 = vmatpush.msra.mxu0 0.0
      %2935 = vmatpush.msra.mxu0 0.0
      %2936 = vmatpush.msra.mxu0 0.0
      %2937 = vmatpush.msra.mxu0 0.0
      %2938 = vmatpush.msra.mxu0 0.0
      %2939 = vmatpush.msra.mxu0 0.0
      %2940 = vmatpush.msra.mxu0 0.0
      %2941 = vmatpush.msra.mxu0 0.0
      %2942 = vmatpush.msra.mxu0 0.0
      %2943 = vmatpush.msra.mxu0 0.0
      %2944 = vmatpush.msra.mxu0 0.0
      %v2945 = vand.u32 %v2813, 4294901760
      %v2946 = vsub.f32 %v2813, %v2945
      %2947 = vmatpush.msra.mxu0 %v2946
      %v2948 = vand.u32 %v2812, 4294901760
      %v2949 = vsub.f32 %v2812, %v2948
      %2950 = vmatpush.msra.mxu0 %v2949
      %v2951 = vand.u32 %v1109, 4294901760
      %v2952 = vsub.f32 %v1109, %v2951
      %2953 = vmatpush.msra.mxu0 %v2952
      %v2954 = vand.u32 %v1108, 4294901760
      %v2955 = vsub.f32 %v1108, %v2954
      %2956 = vmatpush.msra.mxu0 %v2955
      %v2957 = vand.u32 %v2816, 4294901760
      %v2958 = vsub.f32 %v2816, %v2957
      %2959 = vmatmul.f32.gmra.mxu0 %v2958
      %v2960 = vpop.f32.mrf.mxu0
      %v2961 = vadd.f32 %v2919, %v2960
      %v2962 = vand.u32 %v2819, 4294901760
      %v2963 = vsub.f32 %v2819, %v2962
      %2964 = vmatmul.f32.gmra.mxu0 %v2963
      %v2965 = vpop.f32.mrf.mxu0
      %v2966 = vadd.f32 %v2923, %v2965
      %v2967 = vand.u32 %v2822, 4294901760
      %v2968 = vsub.f32 %v2822, %v2967
      %2969 = vmatmul.f32.gmra.mxu0 %v2968
      %v2970 = vpop.f32.mrf.mxu0
      %v2971 = vadd.f32 %v2927, %v2970
      %v2972 = vand.u32 %v2825, 4294901760
      %v2973 = vsub.f32 %v2825, %v2972
      %2974 = vmatmul.f32.gmra.mxu0 %v2973
      %v2975 = vpop.f32.mrf.mxu0
      %v2976 = vadd.f32 %v2931, %v2975
      %2977 = vdwg.mxu0
      %2978 = vmatpush.msra.mxu0 0.0
      %2979 = vmatpush.msra.mxu0 0.0
      %2980 = vmatpush.msra.mxu0 0.0
      %2981 = vmatpush.msra.mxu0 0.0
      %2982 = vmatpush.msra.mxu0 0.0
      %2983 = vmatpush.msra.mxu0 0.0
      %2984 = vmatpush.msra.mxu0 0.0
      %2985 = vmatpush.msra.mxu0 0.0
      %2986 = vmatpush.msra.mxu0 0.0
      %2987 = vmatpush.msra.mxu0 0.0
      %2988 = vmatpush.msra.mxu0 0.0
      %2989 = vmatpush.msra.mxu0 0.0
      %v2990 = vand.u32 %v2813, 4294901760
      %2991 = vmatpush.msra.mxu0 %v2990
      %v2992 = vand.u32 %v2812, 4294901760
      %2993 = vmatpush.msra.mxu0 %v2992
      %v2994 = vand.u32 %v1109, 4294901760
      %2995 = vmatpush.msra.mxu0 %v2994
      %v2996 = vand.u32 %v1108, 4294901760
      %2997 = vmatpush.msra.mxu0 %v2996
      %v2998 = vand.u32 %v2816, 4294901760
      %v2999 = vsub.f32 %v2816, %v2998
      %v3000 = vand.u32 %v2999, 4294901760
      %3001 = vmatmul.f32.gmra.mxu0 %v3000
      %v3002 = vpop.f32.mrf.mxu0
      %v3003 = vadd.f32 %v2961, %v3002
      %v3004 = vand.u32 %v2819, 4294901760
      %v3005 = vsub.f32 %v2819, %v3004
      %v3006 = vand.u32 %v3005, 4294901760
      %3007 = vmatmul.f32.gmra.mxu0 %v3006
      %v3008 = vpop.f32.mrf.mxu0
      %v3009 = vadd.f32 %v2966, %v3008
      %v3010 = vand.u32 %v2822, 4294901760
      %v3011 = vsub.f32 %v2822, %v3010
      %v3012 = vand.u32 %v3011, 4294901760
      %3013 = vmatmul.f32.gmra.mxu0 %v3012
      %v3014 = vpop.f32.mrf.mxu0
      %v3015 = vadd.f32 %v2971, %v3014
      %v3016 = vand.u32 %v2825, 4294901760
      %v3017 = vsub.f32 %v2825, %v3016
      %v3018 = vand.u32 %v3017, 4294901760
      %3019 = vmatmul.f32.gmra.mxu0 %v3018
      %v3020 = vpop.f32.mrf.mxu0
      %v3021 = vadd.f32 %v2976, %v3020
      %3022 = vdwg.mxu0
      %3023 = vmatpush.msra.mxu0 0.0
      %3024 = vmatpush.msra.mxu0 0.0
      %3025 = vmatpush.msra.mxu0 0.0
      %3026 = vmatpush.msra.mxu0 0.0
      %3027 = vmatpush.msra.mxu0 0.0
      %3028 = vmatpush.msra.mxu0 0.0
      %3029 = vmatpush.msra.mxu0 0.0
      %3030 = vmatpush.msra.mxu0 0.0
      %3031 = vmatpush.msra.mxu0 0.0
      %3032 = vmatpush.msra.mxu0 0.0
      %3033 = vmatpush.msra.mxu0 0.0
      %3034 = vmatpush.msra.mxu0 0.0
      %v3035 = vand.u32 %v2813, 4294901760
      %v3036 = vsub.f32 %v2813, %v3035
      %v3037 = vand.u32 %v3036, 4294901760
      %3038 = vmatpush.msra.mxu0 %v3037
      %v3039 = vand.u32 %v2812, 4294901760
      %v3040 = vsub.f32 %v2812, %v3039
      %v3041 = vand.u32 %v3040, 4294901760
      %3042 = vmatpush.msra.mxu0 %v3041
      %v3043 = vand.u32 %v1109, 4294901760
      %v3044 = vsub.f32 %v1109, %v3043
      %v3045 = vand.u32 %v3044, 4294901760
      %3046 = vmatpush.msra.mxu0 %v3045
      %v3047 = vand.u32 %v1108, 4294901760
      %v3048 = vsub.f32 %v1108, %v3047
      %v3049 = vand.u32 %v3048, 4294901760
      %3050 = vmatpush.msra.mxu0 %v3049
      %v3051 = vand.u32 %v2816, 4294901760
      %3052 = vmatmul.f32.gmra.mxu0 %v3051
      %v3053 = vpop.f32.mrf.mxu0
      %v3054 = vadd.f32 %v3003, %v3053
      %v3055 = vand.u32 %v2819, 4294901760
      %3056 = vmatmul.f32.gmra.mxu0 %v3055
      %v3057 = vpop.f32.mrf.mxu0
      %v3058 = vadd.f32 %v3009, %v3057
      %v3059 = vand.u32 %v2822, 4294901760
      %3060 = vmatmul.f32.gmra.mxu0 %v3059
      %v3061 = vpop.f32.mrf.mxu0
      %v3062 = vadd.f32 %v3015, %v3061
      %v3063 = vand.u32 %v2825, 4294901760
      %3064 = vmatmul.f32.gmra.mxu0 %v3063
      %v3065 = vpop.f32.mrf.mxu0
      %v3066 = vadd.f32 %v3021, %v3065
      %3067 = vdwg.mxu0
      %3068 = vmatpush.msra.mxu0 0.0
      %3069 = vmatpush.msra.mxu0 0.0
      %3070 = vmatpush.msra.mxu0 0.0
      %3071 = vmatpush.msra.mxu0 0.0
      %3072 = vmatpush.msra.mxu0 0.0
      %3073 = vmatpush.msra.mxu0 0.0
      %3074 = vmatpush.msra.mxu0 0.0
      %3075 = vmatpush.msra.mxu0 0.0
      %3076 = vmatpush.msra.mxu0 0.0
      %3077 = vmatpush.msra.mxu0 0.0
      %3078 = vmatpush.msra.mxu0 0.0
      %3079 = vmatpush.msra.mxu0 0.0
      %v3080 = vand.u32 %v2813, 4294901760
      %3081 = vmatpush.msra.mxu0 %v3080
      %v3082 = vand.u32 %v2812, 4294901760
      %3083 = vmatpush.msra.mxu0 %v3082
      %v3084 = vand.u32 %v1109, 4294901760
      %3085 = vmatpush.msra.mxu0 %v3084
      %v3086 = vand.u32 %v1108, 4294901760
      %3087 = vmatpush.msra.mxu0 %v3086
      %v3088 = vand.u32 %v2816, 4294901760
      %3089 = vmatmul.f32.gmra.mxu0 %v3088
      %v3090 = vpop.f32.mrf.mxu0
      %v3091 = vadd.f32 %v3054, %v3090
      %v3092 = vand.u32 %v2819, 4294901760
      %3093 = vmatmul.f32.gmra.mxu0 %v3092
      %v3094 = vpop.f32.mrf.mxu0
      %v3095 = vadd.f32 %v3058, %v3094
      %v3096 = vand.u32 %v2822, 4294901760
      %3097 = vmatmul.f32.gmra.mxu0 %v3096
      %v3098 = vpop.f32.mrf.mxu0
      %v3099 = vadd.f32 %v3062, %v3098
      %v3100 = vand.u32 %v2825, 4294901760
      %3101 = vmatmul.f32.gmra.mxu0 %v3100
      %v3102 = vpop.f32.mrf.mxu0
      %v3103 = vadd.f32 %v3066, %v3102
      %3104 = vdwg.mxu0
      %vm3105 = vcmask 252928
      %3106 = vst.msk [vmem:[%s197] sm:$0xff] %vm3105, %v3091
      %3107 = vst.msk [vmem:[%s197 + $0x8] sm:$0xff] %vm3105, %v3095
      %3108 = vst.msk [vmem:[%s197 + $0x10] sm:$0xff] %vm3105, %v3099
      %vm3109 = vcmask 251904
      %3110 = vst.msk [vmem:[%s197 + $0x18] sm:$0x7f] %vm3109, %v3103
      %3115 = vrot.lane.b32.xlu0 %v3091, 96
      %v3116 = vpop.permute.xlu0 %3115
      %3117 = vrot.lane.b32.xlu0 %v3095, 96
      %v3118 = vpop.permute.xlu0 %3117
      %3119 = vrot.lane.b32.xlu0 %v3099, 96
      %v3120 = vpop.permute.xlu0 %3119
      %3121 = vrot.lane.b32.xlu0 %v3103, 96
      %v3122 = vpop.permute.xlu0 %3121
      %s3127 = scalar_lea.vmem %s197, 32
      %3128 = vst.msk [vmem:[%s3127] sm:$0xff] %vm3105, %v3116
      %3129 = vst.msk [vmem:[%s3127 + $0x8] sm:$0xff] %vm3105, %v3118
      %3130 = vst.msk [vmem:[%s3127 + $0x10] sm:$0xff] %vm3105, %v3120
      %3131 = vst.msk [vmem:[%s3127 + $0x18] sm:$0x7f] %vm3109, %v3122
      %3132 = vrot.lane.b32.xlu0 %v3091, 64
      %v3133 = vpop.permute.xlu0 %3132
      %3134 = vrot.lane.b32.xlu0 %v3095, 64
      %v3135 = vpop.permute.xlu0 %3134
      %3136 = vrot.lane.b32.xlu0 %v3099, 64
      %v3137 = vpop.permute.xlu0 %3136
      %3138 = vrot.lane.b32.xlu0 %v3103, 64
      %v3139 = vpop.permute.xlu0 %3138
      %s3144 = scalar_lea.vmem %s197, 64
      %3145 = vst.msk [vmem:[%s3144] sm:$0xff] %vm3105, %v3133
      %3146 = vst.msk [vmem:[%s3144 + $0x8] sm:$0xff] %vm3105, %v3135
      %3147 = vst.msk [vmem:[%s3144 + $0x10] sm:$0xff] %vm3105, %v3137
      %3148 = vst.msk [vmem:[%s3144 + $0x18] sm:$0x7f] %vm3109, %v3139
      %3149 = vrot.lane.b32.xlu0 %v3091, 32
      %v3150 = vpop.permute.xlu0 %3149
      %3151 = vrot.lane.b32.xlu0 %v3095, 32
      %v3152 = vpop.permute.xlu0 %3151
      %3153 = vrot.lane.b32.xlu0 %v3099, 32
      %v3154 = vpop.permute.xlu0 %3153
      %3155 = vrot.lane.b32.xlu0 %v3103, 32
      %v3156 = vpop.permute.xlu0 %3155
      %s3161 = scalar_lea.vmem %s197, 96
      %3162 = vst.msk [vmem:[%s3161] sm:$0xff] %vm3105, %v3150
      %3163 = vst.msk [vmem:[%s3161 + $0x8] sm:$0xff] %vm3105, %v3152
      %3164 = vst.msk [vmem:[%s3161 + $0x10] sm:$0xff] %vm3105, %v3154
      %3165 = vst.msk [vmem:[%s3161 + $0x18] sm:$0x7f] %vm3109, %v3156
      %p3166 = scmp.lt.s32.totalorder %s15, 1
      %s3167 = scalar_select %p3166, %s15, 1
      %s3168 = smul.addr %s3167, 16
      %s3169 = smul.addr %s3168, 8
      %s3170 = scalar_lea.vmem %s4, %s3169
      // Predicated region
      $region37: #{upsample_conv_layer.1} parent=35 // pred_check
        %p3171 = pneg %p122
      $region38: #{upsample_conv_layer.1} parent=35 // pred_check_branch
        %3173 = sbr.rel (%p3171) target = $region40
      $region39: #{upsample_conv_layer.1} parent=35 // pred_region
        _
      $region40: #{upsample_conv_layer.1} parent=35 // pred_fallthru
        _
    $region36: #{upsample_conv_layer.1} parent=5 // pred_fallthru
      _
    %p3174 = scmp.le.s32.totalorder 2, %s10
    // Predicated region
    $region41: #{upsample_conv_layer.1} parent=5 // pred_check
      %p3175 = pneg %p3174
    $region42: #{upsample_conv_layer.1} parent=5 // pred_check_branch
      %3177 = sbr.rel (%p3175) target = $region44
    $region43: #{upsample_conv_layer.1} parent=5 // pred_region
      %s3178 = ssub.s32 %s10, 2
      // Predicated region
      $region45: #{upsample_conv_layer.1} parent=43 // pred_check
        %p3179 = pneg %p128
      $region46: #{upsample_conv_layer.1} parent=43 // pred_check_branch
        %3181 = sbr.rel (%p3179) target = $region48
      $region47: #{upsample_conv_layer.1} parent=43 // pred_region
        %p3182 = scmp.lt.s32.totalorder %s16, 1
        %s3183 = scalar_select %p3182, %s16, 1
        %s3184 = smul.addr %s3183, 16
        %s3185 = smul.addr %s3184, 8
        %s3186 = scalar_lea.vmem %s4, %s3185
      $region48: #{upsample_conv_layer.1} parent=43 // pred_fallthru
        _
    $region44: #{upsample_conv_layer.1} parent=5 // pred_fallthru
      _
  $region6: #{upsample_conv_layer.1} parent=0 // loop_footer
    %s14 = sadd.s32 1, %s10
  $region7: #{upsample_conv_layer.1} parent=0 // loop_footer_branch
    %9 = sbr.rel target = $region3
  $region8: #{upsample_conv_layer.1} parent=0 // loop_exit
    _

</llo_original>
